<compile_context>
chip_gen: v5e
topology: v5e:2x2
jax: 0.10.0
libtpu: 0.0.40
codegen_flags: <defaults>
</compile_context>

<pallas_src>
import functools

import jax
import jax.numpy as jnp
from jax.experimental import pallas as pl
from jax.experimental.pallas import tpu as pltpu


def _round_up(x, m):
    return ((x + m - 1) // m) * m


def _full_spec(shape):
    nd = len(shape)
    return pl.BlockSpec(shape, lambda *_: (0,) * nd)


# ----------------------------------------------------------------------------
# Fused Pallas kernel: all GRU layers + Linear head, single invocation
# ----------------------------------------------------------------------------
def _make_fused_gru_kernel(num_layers, T, Bp, Hp, unroll):
    """Ref order: x_rows, [wih_t, b_fold, whh_t, b_hn] * L, out_w_t, out_b,
    o_ref, seq_scratch (T*Bp,Hp) bf16, gi_scratch (T*Bp,3Hp) bf16."""

    def kernel(*refs):
        it = iter(refs)
        x_ref = next(it)
        layer_refs = [tuple(next(it) for _ in range(4)) for _ in range(num_layers)]
        ow_ref = next(it)
        ob_ref = next(it)
        o_ref = next(it)
        seq_ref = next(it)
        gi_ref = next(it)

        h_last = None
        for l in range(num_layers):
            wih_ref, bfold_ref, whh_ref, bhn_ref = layer_refs[l]
            is_last = l == num_layers - 1

            # Hoisted whole-sequence input projection: one big bf16 MXU matmul.
            # Layer 0 projects the streamed x rows (no gi0 HBM round trip);
            # layers >= 1 project the VMEM-resident previous-layer hidden sequence.
            src_ref = x_ref if l == 0 else seq_ref
            gi_ref[...] = (
                jnp.dot(src_ref[...], wih_ref[...],
                        preferred_element_type=jnp.float32)
                + bfold_ref[...]
            ).astype(jnp.bfloat16)

            whh = whh_ref[...]                                   # bf16 (Hp, 3Hp)
            bhn_b = jnp.broadcast_to(bhn_ref[...], (Bp, Hp))     # hoisted, f32

            def step(t, h, whh=whh, bhn_b=bhn_b, is_last=is_last):
                row = pl.multiple_of(t * Bp, Bp)
                gi_t = gi_ref[pl.ds(row, Bp), :].astype(jnp.float32)   # (Bp, 3Hp)
                gh = jnp.dot(h.astype(jnp.bfloat16), whh,
                             preferred_element_type=jnp.float32)        # (Bp, 3Hp)
                r = jax.nn.sigmoid(gi_t[:, :Hp] + gh[:, :Hp])
                z = jax.nn.sigmoid(gi_t[:, Hp:2 * Hp] + gh[:, Hp:2 * Hp])
                n = jnp.tanh(gi_t[:, 2 * Hp:] + r * (gh[:, 2 * Hp:] + bhn_b))
                h_new = (1.0 - z) * n + z * h
                if not is_last:                 # last layer: only h_T is needed
                    seq_ref[pl.ds(row, Bp), :] = h_new.astype(jnp.bfloat16)
                return h_new

            h0 = jnp.zeros((Bp, Hp), jnp.float32)
            h_last = jax.lax.fori_loop(0, T, step, h0, unroll=unroll)

        # Fused Linear head on the last timestep of the last layer.
        o_ref[...] = (
            jnp.dot(h_last.astype(jnp.bfloat16), ow_ref[...],
                    preferred_element_type=jnp.float32)
            + ob_ref[...]
        ).astype(o_ref.dtype)

    return kernel


# ----------------------------------------------------------------------------
# Parameter preparation: transpose, fold biases, pad per-gate to (8,128), bf16
# ----------------------------------------------------------------------------
def prepare_params(params, input_size, hidden_size, num_rnn_layers):
    H = hidden_size
    Hp = _round_up(H, 128)

    def pad_gate_cols(w_t, rows_p):
        # w_t: (rows, 3H) -> (rows_p, 3*Hp); each gate block padded separately
        rows = w_t.shape[0]
        blocks = []
        for g in range(3):
            blk = w_t[:, g * H:(g + 1) * H]
            blocks.append(jnp.pad(blk, ((0, rows_p - rows), (0, Hp - H))))
        return jnp.concatenate(blocks, axis=1)

    def pad_gate_vec(v):
        parts = [jnp.pad(v[g * H:(g + 1) * H], (0, Hp - H)) for g in range(3)]
        return jnp.concatenate(parts).reshape(1, 3 * Hp)

    layers = []
    for l in range(num_rnn_layers):
        p = params[f"l{l}"]
        in_dim = input_size if l == 0 else H
        in_dim_p = _round_up(in_dim, 128) if l == 0 else Hp
        b_ih, b_hh = p["b_ih"], p["b_hh"]
        # r/z biases folded into the input projection; b_hn stays inside r*( ).
        b_fold = jnp.concatenate([b_ih[:2 * H] + b_hh[:2 * H], b_ih[2 * H:]])
        layers.append({
            "wih_t": pad_gate_cols(jnp.transpose(p["w_ih"]), in_dim_p).astype(jnp.bfloat16),
            "whh_t": pad_gate_cols(jnp.transpose(p["w_hh"]), Hp).astype(jnp.bfloat16),
            "b_fold": pad_gate_vec(b_fold).astype(jnp.float32),
            "b_hn": jnp.pad(b_hh[2 * H:], (0, Hp - H)).reshape(1, Hp).astype(jnp.float32),
        })

    O = params["out_w"].shape[0]
    Op = _round_up(O, 128)
    out_w_t = jnp.pad(jnp.transpose(params["out_w"]),
                      ((0, Hp - H), (0, Op - O))).astype(jnp.bfloat16)
    out_b = jnp.pad(params["out_b"], (0, Op - O)).reshape(1, Op).astype(jnp.float32)
    return {"layers": layers, "out_w_t": out_w_t, "out_b": out_b}


# ----------------------------------------------------------------------------
# Forward
# ----------------------------------------------------------------------------
@functools.partial(jax.jit,
                   static_argnames=("hidden_size", "num_rnn_layers", "output_size"))
def gated_recurrent_unit_forward(x_btf, prep, hidden_size, num_rnn_layers, output_size):
    """x_btf: (B, T, input_size), batch-first (PyTorch nn.GRU(batch_first=True))."""
    B, T, in_size = x_btf.shape
    L = num_rnn_layers
    layers = prep["layers"]
    Hp = layers[0]["whh_t"].shape[0]
    in_pad = layers[0]["wih_t"].shape[0]
    Op = prep["out_w_t"].shape[1]
    Bp = _round_up(B, 8)

    # Time-major, (8,128)-padded, bf16 input rows; layer-0 projection happens
    # in-kernel (reads T*B*in bytes instead of writing+reading T*B*3H of gi0).
    x_rows = jnp.pad(jnp.transpose(x_btf, (1, 0, 2)),
                     ((0, 0), (0, Bp - B), (0, in_pad - in_size))
                     ).reshape(T * Bp, in_pad).astype(jnp.bfloat16)

    inputs = [x_rows]
    in_specs = [_full_spec((T * Bp, in_pad))]
    for l in range(L):
        lay = layers[l]
        inputs += [lay["wih_t"], lay["b_fold"], lay["whh_t"], lay["b_hn"]]
        in_specs += [_full_spec(lay["wih_t"].shape), _full_spec((1, 3 * Hp)),
                     _full_spec((Hp, 3 * Hp)), _full_spec((1, Hp))]
    inputs += [prep["out_w_t"], prep["out_b"]]
    in_specs += [_full_spec((Hp, Op)), _full_spec((1, Op))]

    unroll = next(u for u in (8, 4, 2, 1) if T % u == 0)
    kernel = _make_fused_gru_kernel(L, T, Bp, Hp, unroll)

    # VMEM budget: inputs (x2 for buffering headroom) + scratch + output + slack,
    # floored at 16 MiB and clamped well below physical VMEM.
    in_bytes = sum(int(a.size) * a.dtype.itemsize for a in inputs)
    scratch_bytes = T * Bp * Hp * 2 + T * Bp * 3 * Hp * 2        # bf16 scratch
    out_bytes = Bp * Op * 4
    budget = 2 * in_bytes + scratch_bytes + 2 * out_bytes + (2 << 20)
    vmem_limit = int(min(max(budget, 16 << 20), 96 << 20))

    out_pad = pl.pallas_call(
        kernel,
        out_shape=jax.ShapeDtypeStruct((Bp, Op), jnp.float32),
        grid=(),
        in_specs=in_specs,
        out_specs=_full_spec((Bp, Op)),
        scratch_shapes=[
            pltpu.VMEM((T * Bp, Hp), jnp.bfloat16),       # inter-layer hidden sequence
            pltpu.VMEM((T * Bp, 3 * Hp), jnp.bfloat16),   # per-layer hoisted Gi (reused)
        ],
        compiler_params=pltpu.CompilerParams(vmem_limit_bytes=vmem_limit),
    )(*inputs)

    return out_pad[:B, :output_size].astype(x_btf.dtype)


# ----------------------------------------------------------------------------
# Deterministic parameter init (PyTorch-style uniform(-1/sqrt(H), 1/sqrt(H)))
# ----------------------------------------------------------------------------
def init_params(key, input_size, hidden_size, num_rnn_layers, output_size):
    params = {}
    bound = 1.0 / jnp.sqrt(jnp.float32(hidden_size))
    for layer in range(num_rnn_layers):
        in_sz = input_size if layer == 0 else hidden_size
        key, k1, k2, k3, k4 = jax.random.split(key, 5)
        params[f"l{layer}"] = {
            "w_ih": jax.random.uniform(k1, (3 * hidden_size, in_sz),
                                       jnp.float32, -bound, bound),
            "w_hh": jax.random.uniform(k2, (3 * hidden_size, hidden_size),
                                       jnp.float32, -bound, bound),
            "b_ih": jax.random.uniform(k3, (3 * hidden_size,),
                                       jnp.float32, -bound, bound),
            "b_hh": jax.random.uniform(k4, (3 * hidden_size,),
                                       jnp.float32, -bound, bound),
        }
    key, k1, k2 = jax.random.split(key, 3)
    params["out_w"] = jax.random.uniform(k1, (output_size, hidden_size),
                                         jnp.float32, -bound, bound)
    params["out_b"] = jax.random.uniform(k2, (output_size,),
                                         jnp.float32, -bound, bound)
    return params


# ----------------------------------------------------------------------------
# Pure-JAX f32 reference (numerical sanity check of the fused kernel)
# ----------------------------------------------------------------------------
def reference_forward(x_btf, params, hidden_size, num_rnn_layers):
    seq = x_btf
    for layer in range(num_rnn_layers):
        p = params[f"l{layer}"]
        H = hidden_size

        def step(h, x_t, p=p, H=H):
            gi = x_t @ p["w_ih"].T + p["b_ih"]
            gh = h @ p["w_hh"].T + p["b_hh"]
            r = jax.nn.sigmoid(gi[:, :H] + gh[:, :H])
            z = jax.nn.sigmoid(gi[:, H:2 * H] + gh[:, H:2 * H])
            n = jnp.tanh(gi[:, 2 * H:] + r * gh[:, 2 * H:])
            h_new = (1.0 - z) * n + z * h
            return h_new, h_new

        h0 = jnp.zeros((seq.shape[0], H), jnp.float32)
        _, hs = jax.lax.scan(step, h0, jnp.transpose(seq, (1, 0, 2)))
        seq = jnp.transpose(hs, (1, 0, 2))
    return seq[:, -1, :] @ params["out_w"].T + params["out_b"]


# ----------------------------------------------------------------------------
if __name__ == "__main__":
    # Small shapes consistent with the module's forward: x (batch, seq_len, input_size)
    B, T = 2, 8
    input_size = 4
    hidden_size = 32
    num_rnn_layers = 2
    output_size = 3

    key = jax.random.PRNGKey(0)
    key, kx = jax.random.split(key)
    x = jax.random.normal(kx, (B, T, input_size), jnp.float32)
    params = init_params(key, input_size, hidden_size, num_rnn_layers, output_size)
    prep = prepare_params(params, input_size, hidden_size, num_rnn_layers)

    out = gated_recurrent_unit_forward(x, prep, hidden_size, num_rnn_layers, output_size)
    out = jax.block_until_ready(out)

    ref = reference_forward(x, params, hidden_size, num_rnn_layers)
    assert out.shape == (B, output_size), out.shape
    # bf16 weight/activation storage (f32 gate math + accumulation) -> relaxed tol.
    assert jnp.allclose(out, ref, atol=3e-2, rtol=3e-2), (out, ref)

    print("KERNEL_OK")
</pallas_src>

<mosaic_0001>
module attributes {stable_mosaic.version = 11 : i64} {
  func.func @kernel(%arg0: memref<64x128xbf16, #tpu.memory_space<vmem>>, %arg1: memref<128x384xbf16, #tpu.memory_space<vmem>>, %arg2: memref<1x384xf32, #tpu.memory_space<vmem>>, %arg3: memref<128x384xbf16, #tpu.memory_space<vmem>>, %arg4: memref<1x128xf32, #tpu.memory_space<vmem>>, %arg5: memref<128x384xbf16, #tpu.memory_space<vmem>>, %arg6: memref<1x384xf32, #tpu.memory_space<vmem>>, %arg7: memref<128x384xbf16, #tpu.memory_space<vmem>>, %arg8: memref<1x128xf32, #tpu.memory_space<vmem>>, %arg9: memref<128x128xbf16, #tpu.memory_space<vmem>>, %arg10: memref<1x128xf32, #tpu.memory_space<vmem>>, %arg11: memref<8x128xf32, #tpu.memory_space<vmem>>, %arg12: memref<64x128xbf16, #tpu.memory_space<vmem>>, %arg13: memref<64x384xbf16, #tpu.memory_space<vmem>>) attributes {dimension_semantics = [], scalar_prefetch = 0 : i64, scratch_operands = 2 : i64, tpu.core_type = #tpu.core_type<tc>} {
    %c0 = arith.constant 0 : index
    %c0_0 = arith.constant 0 : index
    %0 = vector.load %arg0[%c0, %c0_0] : memref<64x128xbf16, #tpu.memory_space<vmem>>, vector<64x128xbf16>
    %c0_1 = arith.constant 0 : index
    %c0_2 = arith.constant 0 : index
    %1 = vector.load %arg1[%c0_1, %c0_2] : memref<128x384xbf16, #tpu.memory_space<vmem>>, vector<128x384xbf16>
    %cst = arith.constant dense<0.000000e+00> : vector<64x384xf32>
    %2 = tpu.matmul %0, %1, %cst {dimension_numbers = #tpu.dot_dimension_numbers<[1], [0], [0], [1], [0, 0, 1, 1], [], []>} : vector<64x128xbf16>, vector<128x384xbf16>, vector<64x384xf32> -> vector<64x384xf32>
    %c0_3 = arith.constant 0 : index
    %c0_4 = arith.constant 0 : index
    %3 = vector.load %arg2[%c0_3, %c0_4] : memref<1x384xf32, #tpu.memory_space<vmem>>, vector<1x384xf32>
    %4 = vector.broadcast %3 : vector<1x384xf32> to vector<64x384xf32>
    %5 = arith.addf %2, %4 : vector<64x384xf32>
    %6 = arith.truncf %5 : vector<64x384xf32> to vector<64x384xbf16>
    %c0_5 = arith.constant 0 : index
    %c0_6 = arith.constant 0 : index
    %7 = vector.load %arg13[%c0_5, %c0_6] : memref<64x384xbf16, #tpu.memory_space<vmem>>, vector<64x384xbf16>
    tpu.vector_store %arg13[%c0_5, %c0_6], %6 {strides = array<i32>} : memref<64x384xbf16, #tpu.memory_space<vmem>>, vector<64x384xbf16>,
    %c0_7 = arith.constant 0 : index
    %c0_8 = arith.constant 0 : index
    %8 = vector.load %arg3[%c0_7, %c0_8] : memref<128x384xbf16, #tpu.memory_space<vmem>>, vector<128x384xbf16>
    %c0_9 = arith.constant 0 : index
    %c0_10 = arith.constant 0 : index
    %9 = vector.load %arg4[%c0_9, %c0_10] : memref<1x128xf32, #tpu.memory_space<vmem>>, vector<1x128xf32>
    %10 = vector.shape_cast %9 : vector<1x128xf32> to vector<1x128xf32>
    %11 = vector.broadcast %10 : vector<1x128xf32> to vector<8x128xf32>
    %cst_11 = arith.constant 0.000000e+00 : f32
    %12 = vector.broadcast %cst_11 : f32 to vector<8x128xf32>
    %c0_i32 = arith.constant 0 : i32
    %c8_i32 = arith.constant 8 : i32
    %13 = arith.muli %c0_i32, %c8_i32 : i32
    %14 = tpu.assume_multiple %13, 8 : i32
    %15 = arith.index_cast %14 : i32 to index
    %c0_12 = arith.constant 0 : index
    %16 = vector.load %arg13[%15, %c0_12] : memref<64x384xbf16, #tpu.memory_space<vmem>>, vector<8x384xbf16>
    %17 = arith.extf %16 : vector<8x384xbf16> to vector<8x384xf32>
    %18 = arith.truncf %12 : vector<8x128xf32> to vector<8x128xbf16>
    %cst_13 = arith.constant dense<0.000000e+00> : vector<8x384xf32>
    %19 = tpu.matmul %18, %8, %cst_13 {dimension_numbers = #tpu.dot_dimension_numbers<[1], [0], [0], [1], [0, 0, 1, 1], [], []>} : vector<8x128xbf16>, vector<128x384xbf16>, vector<8x384xf32> -> vector<8x384xf32>
    %20 = vector.extract_strided_slice %17 {offsets = [0, 0], sizes = [8, 128], strides = [1, 1]} : vector<8x384xf32> to vector<8x128xf32>
    %21 = vector.extract_strided_slice %19 {offsets = [0, 0], sizes = [8, 128], strides = [1, 1]} : vector<8x384xf32> to vector<8x128xf32>
    %22 = arith.addf %20, %21 : vector<8x128xf32>
    %23 = arith.negf %22 : vector<8x128xf32>
    %24 = math.exp %23 : vector<8x128xf32>
    %cst_14 = arith.constant 1.000000e+00 : f32
    %25 = vector.broadcast %cst_14 : f32 to vector<8x128xf32>
    %26 = arith.addf %25, %24 : vector<8x128xf32>
    %27 = arith.divf %25, %26 : vector<8x128xf32>
    %28 = vector.extract_strided_slice %17 {offsets = [0, 128], sizes = [8, 128], strides = [1, 1]} : vector<8x384xf32> to vector<8x128xf32>
    %29 = vector.extract_strided_slice %19 {offsets = [0, 128], sizes = [8, 128], strides = [1, 1]} : vector<8x384xf32> to vector<8x128xf32>
    %30 = arith.addf %28, %29 : vector<8x128xf32>
    %31 = arith.negf %30 : vector<8x128xf32>
    %32 = math.exp %31 : vector<8x128xf32>
    %cst_15 = arith.constant 1.000000e+00 : f32
    %33 = vector.broadcast %cst_15 : f32 to vector<8x128xf32>
    %34 = arith.addf %33, %32 : vector<8x128xf32>
    %35 = arith.divf %33, %34 : vector<8x128xf32>
    %36 = vector.extract_strided_slice %17 {offsets = [0, 256], sizes = [8, 128], strides = [1, 1]} : vector<8x384xf32> to vector<8x128xf32>
    %37 = vector.extract_strided_slice %19 {offsets = [0, 256], sizes = [8, 128], strides = [1, 1]} : vector<8x384xf32> to vector<8x128xf32>
    %38 = arith.addf %37, %11 : vector<8x128xf32>
    %39 = arith.mulf %27, %38 : vector<8x128xf32>
    %40 = arith.addf %36, %39 : vector<8x128xf32>
    %41 = math.tanh %40 : vector<8x128xf32>
    %cst_16 = arith.constant 1.000000e+00 : f32
    %42 = vector.broadcast %cst_16 : f32 to vector<8x128xf32>
    %43 = arith.subf %42, %35 : vector<8x128xf32>
    %44 = arith.mulf %43, %41 : vector<8x128xf32>
    %45 = arith.mulf %35, %12 : vector<8x128xf32>
    %46 = arith.addf %44, %45 : vector<8x128xf32>
    %47 = arith.truncf %46 : vector<8x128xf32> to vector<8x128xbf16>
    %48 = arith.index_cast %14 : i32 to index
    %c0_17 = arith.constant 0 : index
    %49 = vector.load %arg12[%48, %c0_17] : memref<64x128xbf16, #tpu.memory_space<vmem>>, vector<8x128xbf16>
    tpu.vector_store %arg12[%48, %c0_17], %47 {strides = array<i32>} : memref<64x128xbf16, #tpu.memory_space<vmem>>, vector<8x128xbf16>,
    %c1_i32 = arith.constant 1 : i32
    %c8_i32_18 = arith.constant 8 : i32
    %50 = arith.muli %c1_i32, %c8_i32_18 : i32
    %51 = tpu.assume_multiple %50, 8 : i32
    %52 = arith.index_cast %51 : i32 to index
    %c0_19 = arith.constant 0 : index
    %53 = vector.load %arg13[%52, %c0_19] : memref<64x384xbf16, #tpu.memory_space<vmem>>, vector<8x384xbf16>
    %54 = arith.extf %53 : vector<8x384xbf16> to vector<8x384xf32>
    %55 = arith.truncf %46 : vector<8x128xf32> to vector<8x128xbf16>
    %cst_20 = arith.constant dense<0.000000e+00> : vector<8x384xf32>
    %56 = tpu.matmul %55, %8, %cst_20 {dimension_numbers = #tpu.dot_dimension_numbers<[1], [0], [0], [1], [0, 0, 1, 1], [], []>} : vector<8x128xbf16>, vector<128x384xbf16>, vector<8x384xf32> -> vector<8x384xf32>
    %57 = vector.extract_strided_slice %54 {offsets = [0, 0], sizes = [8, 128], strides = [1, 1]} : vector<8x384xf32> to vector<8x128xf32>
    %58 = vector.extract_strided_slice %56 {offsets = [0, 0], sizes = [8, 128], strides = [1, 1]} : vector<8x384xf32> to vector<8x128xf32>
    %59 = arith.addf %57, %58 : vector<8x128xf32>
    %60 = arith.negf %59 : vector<8x128xf32>
    %61 = math.exp %60 : vector<8x128xf32>
    %cst_21 = arith.constant 1.000000e+00 : f32
    %62 = vector.broadcast %cst_21 : f32 to vector<8x128xf32>
    %63 = arith.addf %62, %61 : vector<8x128xf32>
    %64 = arith.divf %62, %63 : vector<8x128xf32>
    %65 = vector.extract_strided_slice %54 {offsets = [0, 128], sizes = [8, 128], strides = [1, 1]} : vector<8x384xf32> to vector<8x128xf32>
    %66 = vector.extract_strided_slice %56 {offsets = [0, 128], sizes = [8, 128], strides = [1, 1]} : vector<8x384xf32> to vector<8x128xf32>
    %67 = arith.addf %65, %66 : vector<8x128xf32>
    %68 = arith.negf %67 : vector<8x128xf32>
    %69 = math.exp %68 : vector<8x128xf32>
    %cst_22 = arith.constant 1.000000e+00 : f32
    %70 = vector.broadcast %cst_22 : f32 to vector<8x128xf32>
    %71 = arith.addf %70, %69 : vector<8x128xf32>
    %72 = arith.divf %70, %71 : vector<8x128xf32>
    %73 = vector.extract_strided_slice %54 {offsets = [0, 256], sizes = [8, 128], strides = [1, 1]} : vector<8x384xf32> to vector<8x128xf32>
    %74 = vector.extract_strided_slice %56 {offsets = [0, 256], sizes = [8, 128], strides = [1, 1]} : vector<8x384xf32> to vector<8x128xf32>
    %75 = arith.addf %74, %11 : vector<8x128xf32>
    %76 = arith.mulf %64, %75 : vector<8x128xf32>
    %77 = arith.addf %73, %76 : vector<8x128xf32>
    %78 = math.tanh %77 : vector<8x128xf32>
    %cst_23 = arith.constant 1.000000e+00 : f32
    %79 = vector.broadcast %cst_23 : f32 to vector<8x128xf32>
    %80 = arith.subf %79, %72 : vector<8x128xf32>
    %81 = arith.mulf %80, %78 : vector<8x128xf32>
    %82 = arith.mulf %72, %46 : vector<8x128xf32>
    %83 = arith.addf %81, %82 : vector<8x128xf32>
    %84 = arith.truncf %83 : vector<8x128xf32> to vector<8x128xbf16>
    %85 = arith.index_cast %51 : i32 to index
    %c0_24 = arith.constant 0 : index
    %86 = vector.load %arg12[%85, %c0_24] : memref<64x128xbf16, #tpu.memory_space<vmem>>, vector<8x128xbf16>
    tpu.vector_store %arg12[%85, %c0_24], %84 {strides = array<i32>} : memref<64x128xbf16, #tpu.memory_space<vmem>>, vector<8x128xbf16>,
    %c2_i32 = arith.constant 2 : i32
    %c8_i32_25 = arith.constant 8 : i32
    %87 = arith.muli %c2_i32, %c8_i32_25 : i32
    %88 = tpu.assume_multiple %87, 8 : i32
    %89 = arith.index_cast %88 : i32 to index
    %c0_26 = arith.constant 0 : index
    %90 = vector.load %arg13[%89, %c0_26] : memref<64x384xbf16, #tpu.memory_space<vmem>>, vector<8x384xbf16>
    %91 = arith.extf %90 : vector<8x384xbf16> to vector<8x384xf32>
    %92 = arith.truncf %83 : vector<8x128xf32> to vector<8x128xbf16>
    %cst_27 = arith.constant dense<0.000000e+00> : vector<8x384xf32>
    %93 = tpu.matmul %92, %8, %cst_27 {dimension_numbers = #tpu.dot_dimension_numbers<[1], [0], [0], [1], [0, 0, 1, 1], [], []>} : vector<8x128xbf16>, vector<128x384xbf16>, vector<8x384xf32> -> vector<8x384xf32>
    %94 = vector.extract_strided_slice %91 {offsets = [0, 0], sizes = [8, 128], strides = [1, 1]} : vector<8x384xf32> to vector<8x128xf32>
    %95 = vector.extract_strided_slice %93 {offsets = [0, 0], sizes = [8, 128], strides = [1, 1]} : vector<8x384xf32> to vector<8x128xf32>
    %96 = arith.addf %94, %95 : vector<8x128xf32>
    %97 = arith.negf %96 : vector<8x128xf32>
    %98 = math.exp %97 : vector<8x128xf32>
    %cst_28 = arith.constant 1.000000e+00 : f32
    %99 = vector.broadcast %cst_28 : f32 to vector<8x128xf32>
    %100 = arith.addf %99, %98 : vector<8x128xf32>
    %101 = arith.divf %99, %100 : vector<8x128xf32>
    %102 = vector.extract_strided_slice %91 {offsets = [0, 128], sizes = [8, 128], strides = [1, 1]} : vector<8x384xf32> to vector<8x128xf32>
    %103 = vector.extract_strided_slice %93 {offsets = [0, 128], sizes = [8, 128], strides = [1, 1]} : vector<8x384xf32> to vector<8x128xf32>
    %104 = arith.addf %102, %103 : vector<8x128xf32>
    %105 = arith.negf %104 : vector<8x128xf32>
    %106 = math.exp %105 : vector<8x128xf32>
    %cst_29 = arith.constant 1.000000e+00 : f32
    %107 = vector.broadcast %cst_29 : f32 to vector<8x128xf32>
    %108 = arith.addf %107, %106 : vector<8x128xf32>
    %109 = arith.divf %107, %108 : vector<8x128xf32>
    %110 = vector.extract_strided_slice %91 {offsets = [0, 256], sizes = [8, 128], strides = [1, 1]} : vector<8x384xf32> to vector<8x128xf32>
    %111 = vector.extract_strided_slice %93 {offsets = [0, 256], sizes = [8, 128], strides = [1, 1]} : vector<8x384xf32> to vector<8x128xf32>
    %112 = arith.addf %111, %11 : vector<8x128xf32>
    %113 = arith.mulf %101, %112 : vector<8x128xf32>
    %114 = arith.addf %110, %113 : vector<8x128xf32>
    %115 = math.tanh %114 : vector<8x128xf32>
    %cst_30 = arith.constant 1.000000e+00 : f32
    %116 = vector.broadcast %cst_30 : f32 to vector<8x128xf32>
    %117 = arith.subf %116, %109 : vector<8x128xf32>
    %118 = arith.mulf %117, %115 : vector<8x128xf32>
    %119 = arith.mulf %109, %83 : vector<8x128xf32>
    %120 = arith.addf %118, %119 : vector<8x128xf32>
    %121 = arith.truncf %120 : vector<8x128xf32> to vector<8x128xbf16>
    %122 = arith.index_cast %88 : i32 to index
    %c0_31 = arith.constant 0 : index
    %123 = vector.load %arg12[%122, %c0_31] : memref<64x128xbf16, #tpu.memory_space<vmem>>, vector<8x128xbf16>
    tpu.vector_store %arg12[%122, %c0_31], %121 {strides = array<i32>} : memref<64x128xbf16, #tpu.memory_space<vmem>>, vector<8x128xbf16>,
    %c3_i32 = arith.constant 3 : i32
    %c8_i32_32 = arith.constant 8 : i32
    %124 = arith.muli %c3_i32, %c8_i32_32 : i32
    %125 = tpu.assume_multiple %124, 8 : i32
    %126 = arith.index_cast %125 : i32 to index
    %c0_33 = arith.constant 0 : index
    %127 = vector.load %arg13[%126, %c0_33] : memref<64x384xbf16, #tpu.memory_space<vmem>>, vector<8x384xbf16>
    %128 = arith.extf %127 : vector<8x384xbf16> to vector<8x384xf32>
    %129 = arith.truncf %120 : vector<8x128xf32> to vector<8x128xbf16>
    %cst_34 = arith.constant dense<0.000000e+00> : vector<8x384xf32>
    %130 = tpu.matmul %129, %8, %cst_34 {dimension_numbers = #tpu.dot_dimension_numbers<[1], [0], [0], [1], [0, 0, 1, 1], [], []>} : vector<8x128xbf16>, vector<128x384xbf16>, vector<8x384xf32> -> vector<8x384xf32>
    %131 = vector.extract_strided_slice %128 {offsets = [0, 0], sizes = [8, 128], strides = [1, 1]} : vector<8x384xf32> to vector<8x128xf32>
    %132 = vector.extract_strided_slice %130 {offsets = [0, 0], sizes = [8, 128], strides = [1, 1]} : vector<8x384xf32> to vector<8x128xf32>
    %133 = arith.addf %131, %132 : vector<8x128xf32>
    %134 = arith.negf %133 : vector<8x128xf32>
    %135 = math.exp %134 : vector<8x128xf32>
    %cst_35 = arith.constant 1.000000e+00 : f32
    %136 = vector.broadcast %cst_35 : f32 to vector<8x128xf32>
    %137 = arith.addf %136, %135 : vector<8x128xf32>
    %138 = arith.divf %136, %137 : vector<8x128xf32>
    %139 = vector.extract_strided_slice %128 {offsets = [0, 128], sizes = [8, 128], strides = [1, 1]} : vector<8x384xf32> to vector<8x128xf32>
    %140 = vector.extract_strided_slice %130 {offsets = [0, 128], sizes = [8, 128], strides = [1, 1]} : vector<8x384xf32> to vector<8x128xf32>
    %141 = arith.addf %139, %140 : vector<8x128xf32>
    %142 = arith.negf %141 : vector<8x128xf32>
    %143 = math.exp %142 : vector<8x128xf32>
    %cst_36 = arith.constant 1.000000e+00 : f32
    %144 = vector.broadcast %cst_36 : f32 to vector<8x128xf32>
    %145 = arith.addf %144, %143 : vector<8x128xf32>
    %146 = arith.divf %144, %145 : vector<8x128xf32>
    %147 = vector.extract_strided_slice %128 {offsets = [0, 256], sizes = [8, 128], strides = [1, 1]} : vector<8x384xf32> to vector<8x128xf32>
    %148 = vector.extract_strided_slice %130 {offsets = [0, 256], sizes = [8, 128], strides = [1, 1]} : vector<8x384xf32> to vector<8x128xf32>
    %149 = arith.addf %148, %11 : vector<8x128xf32>
    %150 = arith.mulf %138, %149 : vector<8x128xf32>
    %151 = arith.addf %147, %150 : vector<8x128xf32>
    %152 = math.tanh %151 : vector<8x128xf32>
    %cst_37 = arith.constant 1.000000e+00 : f32
    %153 = vector.broadcast %cst_37 : f32 to vector<8x128xf32>
    %154 = arith.subf %153, %146 : vector<8x128xf32>
    %155 = arith.mulf %154, %152 : vector<8x128xf32>
    %156 = arith.mulf %146, %120 : vector<8x128xf32>
    %157 = arith.addf %155, %156 : vector<8x128xf32>
    %158 = arith.truncf %157 : vector<8x128xf32> to vector<8x128xbf16>
    %159 = arith.index_cast %125 : i32 to index
    %c0_38 = arith.constant 0 : index
    %160 = vector.load %arg12[%159, %c0_38] : memref<64x128xbf16, #tpu.memory_space<vmem>>, vector<8x128xbf16>
    tpu.vector_store %arg12[%159, %c0_38], %158 {strides = array<i32>} : memref<64x128xbf16, #tpu.memory_space<vmem>>, vector<8x128xbf16>,
    %c4_i32 = arith.constant 4 : i32
    %c8_i32_39 = arith.constant 8 : i32
    %161 = arith.muli %c4_i32, %c8_i32_39 : i32
    %162 = tpu.assume_multiple %161, 8 : i32
    %163 = arith.index_cast %162 : i32 to index
    %c0_40 = arith.constant 0 : index
    %164 = vector.load %arg13[%163, %c0_40] : memref<64x384xbf16, #tpu.memory_space<vmem>>, vector<8x384xbf16>
    %165 = arith.extf %164 : vector<8x384xbf16> to vector<8x384xf32>
    %166 = arith.truncf %157 : vector<8x128xf32> to vector<8x128xbf16>
    %cst_41 = arith.constant dense<0.000000e+00> : vector<8x384xf32>
    %167 = tpu.matmul %166, %8, %cst_41 {dimension_numbers = #tpu.dot_dimension_numbers<[1], [0], [0], [1], [0, 0, 1, 1], [], []>} : vector<8x128xbf16>, vector<128x384xbf16>, vector<8x384xf32> -> vector<8x384xf32>
    %168 = vector.extract_strided_slice %165 {offsets = [0, 0], sizes = [8, 128], strides = [1, 1]} : vector<8x384xf32> to vector<8x128xf32>
    %169 = vector.extract_strided_slice %167 {offsets = [0, 0], sizes = [8, 128], strides = [1, 1]} : vector<8x384xf32> to vector<8x128xf32>
    %170 = arith.addf %168, %169 : vector<8x128xf32>
    %171 = arith.negf %170 : vector<8x128xf32>
    %172 = math.exp %171 : vector<8x128xf32>
    %cst_42 = arith.constant 1.000000e+00 : f32
    %173 = vector.broadcast %cst_42 : f32 to vector<8x128xf32>
    %174 = arith.addf %173, %172 : vector<8x128xf32>
    %175 = arith.divf %173, %174 : vector<8x128xf32>
    %176 = vector.extract_strided_slice %165 {offsets = [0, 128], sizes = [8, 128], strides = [1, 1]} : vector<8x384xf32> to vector<8x128xf32>
    %177 = vector.extract_strided_slice %167 {offsets = [0, 128], sizes = [8, 128], strides = [1, 1]} : vector<8x384xf32> to vector<8x128xf32>
    %178 = arith.addf %176, %177 : vector<8x128xf32>
    %179 = arith.negf %178 : vector<8x128xf32>
    %180 = math.exp %179 : vector<8x128xf32>
    %cst_43 = arith.constant 1.000000e+00 : f32
    %181 = vector.broadcast %cst_43 : f32 to vector<8x128xf32>
    %182 = arith.addf %181, %180 : vector<8x128xf32>
    %183 = arith.divf %181, %182 : vector<8x128xf32>
    %184 = vector.extract_strided_slice %165 {offsets = [0, 256], sizes = [8, 128], strides = [1, 1]} : vector<8x384xf32> to vector<8x128xf32>
    %185 = vector.extract_strided_slice %167 {offsets = [0, 256], sizes = [8, 128], strides = [1, 1]} : vector<8x384xf32> to vector<8x128xf32>
    %186 = arith.addf %185, %11 : vector<8x128xf32>
    %187 = arith.mulf %175, %186 : vector<8x128xf32>
    %188 = arith.addf %184, %187 : vector<8x128xf32>
    %189 = math.tanh %188 : vector<8x128xf32>
    %cst_44 = arith.constant 1.000000e+00 : f32
    %190 = vector.broadcast %cst_44 : f32 to vector<8x128xf32>
    %191 = arith.subf %190, %183 : vector<8x128xf32>
    %192 = arith.mulf %191, %189 : vector<8x128xf32>
    %193 = arith.mulf %183, %157 : vector<8x128xf32>
    %194 = arith.addf %192, %193 : vector<8x128xf32>
    %195 = arith.truncf %194 : vector<8x128xf32> to vector<8x128xbf16>
    %196 = arith.index_cast %162 : i32 to index
    %c0_45 = arith.constant 0 : index
    %197 = vector.load %arg12[%196, %c0_45] : memref<64x128xbf16, #tpu.memory_space<vmem>>, vector<8x128xbf16>
    tpu.vector_store %arg12[%196, %c0_45], %195 {strides = array<i32>} : memref<64x128xbf16, #tpu.memory_space<vmem>>, vector<8x128xbf16>,
    %c5_i32 = arith.constant 5 : i32
    %c8_i32_46 = arith.constant 8 : i32
    %198 = arith.muli %c5_i32, %c8_i32_46 : i32
    %199 = tpu.assume_multiple %198, 8 : i32
    %200 = arith.index_cast %199 : i32 to index
    %c0_47 = arith.constant 0 : index
    %201 = vector.load %arg13[%200, %c0_47] : memref<64x384xbf16, #tpu.memory_space<vmem>>, vector<8x384xbf16>
    %202 = arith.extf %201 : vector<8x384xbf16> to vector<8x384xf32>
    %203 = arith.truncf %194 : vector<8x128xf32> to vector<8x128xbf16>
    %cst_48 = arith.constant dense<0.000000e+00> : vector<8x384xf32>
    %204 = tpu.matmul %203, %8, %cst_48 {dimension_numbers = #tpu.dot_dimension_numbers<[1], [0], [0], [1], [0, 0, 1, 1], [], []>} : vector<8x128xbf16>, vector<128x384xbf16>, vector<8x384xf32> -> vector<8x384xf32>
    %205 = vector.extract_strided_slice %202 {offsets = [0, 0], sizes = [8, 128], strides = [1, 1]} : vector<8x384xf32> to vector<8x128xf32>
    %206 = vector.extract_strided_slice %204 {offsets = [0, 0], sizes = [8, 128], strides = [1, 1]} : vector<8x384xf32> to vector<8x128xf32>
    %207 = arith.addf %205, %206 : vector<8x128xf32>
    %208 = arith.negf %207 : vector<8x128xf32>
    %209 = math.exp %208 : vector<8x128xf32>
    %cst_49 = arith.constant 1.000000e+00 : f32
    %210 = vector.broadcast %cst_49 : f32 to vector<8x128xf32>
    %211 = arith.addf %210, %209 : vector<8x128xf32>
    %212 = arith.divf %210, %211 : vector<8x128xf32>
    %213 = vector.extract_strided_slice %202 {offsets = [0, 128], sizes = [8, 128], strides = [1, 1]} : vector<8x384xf32> to vector<8x128xf32>
    %214 = vector.extract_strided_slice %204 {offsets = [0, 128], sizes = [8, 128], strides = [1, 1]} : vector<8x384xf32> to vector<8x128xf32>
    %215 = arith.addf %213, %214 : vector<8x128xf32>
    %216 = arith.negf %215 : vector<8x128xf32>
    %217 = math.exp %216 : vector<8x128xf32>
    %cst_50 = arith.constant 1.000000e+00 : f32
    %218 = vector.broadcast %cst_50 : f32 to vector<8x128xf32>
    %219 = arith.addf %218, %217 : vector<8x128xf32>
    %220 = arith.divf %218, %219 : vector<8x128xf32>
    %221 = vector.extract_strided_slice %202 {offsets = [0, 256], sizes = [8, 128], strides = [1, 1]} : vector<8x384xf32> to vector<8x128xf32>
    %222 = vector.extract_strided_slice %204 {offsets = [0, 256], sizes = [8, 128], strides = [1, 1]} : vector<8x384xf32> to vector<8x128xf32>
    %223 = arith.addf %222, %11 : vector<8x128xf32>
    %224 = arith.mulf %212, %223 : vector<8x128xf32>
    %225 = arith.addf %221, %224 : vector<8x128xf32>
    %226 = math.tanh %225 : vector<8x128xf32>
    %cst_51 = arith.constant 1.000000e+00 : f32
    %227 = vector.broadcast %cst_51 : f32 to vector<8x128xf32>
    %228 = arith.subf %227, %220 : vector<8x128xf32>
    %229 = arith.mulf %228, %226 : vector<8x128xf32>
    %230 = arith.mulf %220, %194 : vector<8x128xf32>
    %231 = arith.addf %229, %230 : vector<8x128xf32>
    %232 = arith.truncf %231 : vector<8x128xf32> to vector<8x128xbf16>
    %233 = arith.index_cast %199 : i32 to index
    %c0_52 = arith.constant 0 : index
    %234 = vector.load %arg12[%233, %c0_52] : memref<64x128xbf16, #tpu.memory_space<vmem>>, vector<8x128xbf16>
    tpu.vector_store %arg12[%233, %c0_52], %232 {strides = array<i32>} : memref<64x128xbf16, #tpu.memory_space<vmem>>, vector<8x128xbf16>,
    %c6_i32 = arith.constant 6 : i32
    %c8_i32_53 = arith.constant 8 : i32
    %235 = arith.muli %c6_i32, %c8_i32_53 : i32
    %236 = tpu.assume_multiple %235, 8 : i32
    %237 = arith.index_cast %236 : i32 to index
    %c0_54 = arith.constant 0 : index
    %238 = vector.load %arg13[%237, %c0_54] : memref<64x384xbf16, #tpu.memory_space<vmem>>, vector<8x384xbf16>
    %239 = arith.extf %238 : vector<8x384xbf16> to vector<8x384xf32>
    %240 = arith.truncf %231 : vector<8x128xf32> to vector<8x128xbf16>
    %cst_55 = arith.constant dense<0.000000e+00> : vector<8x384xf32>
    %241 = tpu.matmul %240, %8, %cst_55 {dimension_numbers = #tpu.dot_dimension_numbers<[1], [0], [0], [1], [0, 0, 1, 1], [], []>} : vector<8x128xbf16>, vector<128x384xbf16>, vector<8x384xf32> -> vector<8x384xf32>
    %242 = vector.extract_strided_slice %239 {offsets = [0, 0], sizes = [8, 128], strides = [1, 1]} : vector<8x384xf32> to vector<8x128xf32>
    %243 = vector.extract_strided_slice %241 {offsets = [0, 0], sizes = [8, 128], strides = [1, 1]} : vector<8x384xf32> to vector<8x128xf32>
    %244 = arith.addf %242, %243 : vector<8x128xf32>
    %245 = arith.negf %244 : vector<8x128xf32>
    %246 = math.exp %245 : vector<8x128xf32>
    %cst_56 = arith.constant 1.000000e+00 : f32
    %247 = vector.broadcast %cst_56 : f32 to vector<8x128xf32>
    %248 = arith.addf %247, %246 : vector<8x128xf32>
    %249 = arith.divf %247, %248 : vector<8x128xf32>
    %250 = vector.extract_strided_slice %239 {offsets = [0, 128], sizes = [8, 128], strides = [1, 1]} : vector<8x384xf32> to vector<8x128xf32>
    %251 = vector.extract_strided_slice %241 {offsets = [0, 128], sizes = [8, 128], strides = [1, 1]} : vector<8x384xf32> to vector<8x128xf32>
    %252 = arith.addf %250, %251 : vector<8x128xf32>
    %253 = arith.negf %252 : vector<8x128xf32>
    %254 = math.exp %253 : vector<8x128xf32>
    %cst_57 = arith.constant 1.000000e+00 : f32
    %255 = vector.broadcast %cst_57 : f32 to vector<8x128xf32>
    %256 = arith.addf %255, %254 : vector<8x128xf32>
    %257 = arith.divf %255, %256 : vector<8x128xf32>
    %258 = vector.extract_strided_slice %239 {offsets = [0, 256], sizes = [8, 128], strides = [1, 1]} : vector<8x384xf32> to vector<8x128xf32>
    %259 = vector.extract_strided_slice %241 {offsets = [0, 256], sizes = [8, 128], strides = [1, 1]} : vector<8x384xf32> to vector<8x128xf32>
    %260 = arith.addf %259, %11 : vector<8x128xf32>
    %261 = arith.mulf %249, %260 : vector<8x128xf32>
    %262 = arith.addf %258, %261 : vector<8x128xf32>
    %263 = math.tanh %262 : vector<8x128xf32>
    %cst_58 = arith.constant 1.000000e+00 : f32
    %264 = vector.broadcast %cst_58 : f32 to vector<8x128xf32>
    %265 = arith.subf %264, %257 : vector<8x128xf32>
    %266 = arith.mulf %265, %263 : vector<8x128xf32>
    %267 = arith.mulf %257, %231 : vector<8x128xf32>
    %268 = arith.addf %266, %267 : vector<8x128xf32>
    %269 = arith.truncf %268 : vector<8x128xf32> to vector<8x128xbf16>
    %270 = arith.index_cast %236 : i32 to index
    %c0_59 = arith.constant 0 : index
    %271 = vector.load %arg12[%270, %c0_59] : memref<64x128xbf16, #tpu.memory_space<vmem>>, vector<8x128xbf16>
    tpu.vector_store %arg12[%270, %c0_59], %269 {strides = array<i32>} : memref<64x128xbf16, #tpu.memory_space<vmem>>, vector<8x128xbf16>,
    %c7_i32 = arith.constant 7 : i32
    %c8_i32_60 = arith.constant 8 : i32
    %272 = arith.muli %c7_i32, %c8_i32_60 : i32
    %273 = tpu.assume_multiple %272, 8 : i32
    %274 = arith.index_cast %273 : i32 to index
    %c0_61 = arith.constant 0 : index
    %275 = vector.load %arg13[%274, %c0_61] : memref<64x384xbf16, #tpu.memory_space<vmem>>, vector<8x384xbf16>
    %276 = arith.extf %275 : vector<8x384xbf16> to vector<8x384xf32>
    %277 = arith.truncf %268 : vector<8x128xf32> to vector<8x128xbf16>
    %cst_62 = arith.constant dense<0.000000e+00> : vector<8x384xf32>
    %278 = tpu.matmul %277, %8, %cst_62 {dimension_numbers = #tpu.dot_dimension_numbers<[1], [0], [0], [1], [0, 0, 1, 1], [], []>} : vector<8x128xbf16>, vector<128x384xbf16>, vector<8x384xf32> -> vector<8x384xf32>
    %279 = vector.extract_strided_slice %276 {offsets = [0, 0], sizes = [8, 128], strides = [1, 1]} : vector<8x384xf32> to vector<8x128xf32>
    %280 = vector.extract_strided_slice %278 {offsets = [0, 0], sizes = [8, 128], strides = [1, 1]} : vector<8x384xf32> to vector<8x128xf32>
    %281 = arith.addf %279, %280 : vector<8x128xf32>
    %282 = arith.negf %281 : vector<8x128xf32>
    %283 = math.exp %282 : vector<8x128xf32>
    %cst_63 = arith.constant 1.000000e+00 : f32
    %284 = vector.broadcast %cst_63 : f32 to vector<8x128xf32>
    %285 = arith.addf %284, %283 : vector<8x128xf32>
    %286 = arith.divf %284, %285 : vector<8x128xf32>
    %287 = vector.extract_strided_slice %276 {offsets = [0, 128], sizes = [8, 128], strides = [1, 1]} : vector<8x384xf32> to vector<8x128xf32>
    %288 = vector.extract_strided_slice %278 {offsets = [0, 128], sizes = [8, 128], strides = [1, 1]} : vector<8x384xf32> to vector<8x128xf32>
    %289 = arith.addf %287, %288 : vector<8x128xf32>
    %290 = arith.negf %289 : vector<8x128xf32>
    %291 = math.exp %290 : vector<8x128xf32>
    %cst_64 = arith.constant 1.000000e+00 : f32
    %292 = vector.broadcast %cst_64 : f32 to vector<8x128xf32>
    %293 = arith.addf %292, %291 : vector<8x128xf32>
    %294 = arith.divf %292, %293 : vector<8x128xf32>
    %295 = vector.extract_strided_slice %276 {offsets = [0, 256], sizes = [8, 128], strides = [1, 1]} : vector<8x384xf32> to vector<8x128xf32>
    %296 = vector.extract_strided_slice %278 {offsets = [0, 256], sizes = [8, 128], strides = [1, 1]} : vector<8x384xf32> to vector<8x128xf32>
    %297 = arith.addf %296, %11 : vector<8x128xf32>
    %298 = arith.mulf %286, %297 : vector<8x128xf32>
    %299 = arith.addf %295, %298 : vector<8x128xf32>
    %300 = math.tanh %299 : vector<8x128xf32>
    %cst_65 = arith.constant 1.000000e+00 : f32
    %301 = vector.broadcast %cst_65 : f32 to vector<8x128xf32>
    %302 = arith.subf %301, %294 : vector<8x128xf32>
    %303 = arith.mulf %302, %300 : vector<8x128xf32>
    %304 = arith.mulf %294, %268 : vector<8x128xf32>
    %305 = arith.addf %303, %304 : vector<8x128xf32>
    %306 = arith.truncf %305 : vector<8x128xf32> to vector<8x128xbf16>
    %307 = arith.index_cast %273 : i32 to index
    %c0_66 = arith.constant 0 : index
    %308 = vector.load %arg12[%307, %c0_66] : memref<64x128xbf16, #tpu.memory_space<vmem>>, vector<8x128xbf16>
    tpu.vector_store %arg12[%307, %c0_66], %306 {strides = array<i32>} : memref<64x128xbf16, #tpu.memory_space<vmem>>, vector<8x128xbf16>,
    %c8_i32_67 = arith.constant 8 : i32
    %c0_68 = arith.constant 0 : index
    %c0_69 = arith.constant 0 : index
    %309 = vector.load %arg12[%c0_68, %c0_69] : memref<64x128xbf16, #tpu.memory_space<vmem>>, vector<64x128xbf16>
    %c0_70 = arith.constant 0 : index
    %c0_71 = arith.constant 0 : index
    %310 = vector.load %arg5[%c0_70, %c0_71] : memref<128x384xbf16, #tpu.memory_space<vmem>>, vector<128x384xbf16>
    %cst_72 = arith.constant dense<0.000000e+00> : vector<64x384xf32>
    %311 = tpu.matmul %309, %310, %cst_72 {dimension_numbers = #tpu.dot_dimension_numbers<[1], [0], [0], [1], [0, 0, 1, 1], [], []>} : vector<64x128xbf16>, vector<128x384xbf16>, vector<64x384xf32> -> vector<64x384xf32>
    %c0_73 = arith.constant 0 : index
    %c0_74 = arith.constant 0 : index
    %312 = vector.load %arg6[%c0_73, %c0_74] : memref<1x384xf32, #tpu.memory_space<vmem>>, vector<1x384xf32>
    %313 = vector.broadcast %312 : vector<1x384xf32> to vector<64x384xf32>
    %314 = arith.addf %311, %313 : vector<64x384xf32>
    %315 = arith.truncf %314 : vector<64x384xf32> to vector<64x384xbf16>
    %c0_75 = arith.constant 0 : index
    %c0_76 = arith.constant 0 : index
    %316 = vector.load %arg13[%c0_75, %c0_76] : memref<64x384xbf16, #tpu.memory_space<vmem>>, vector<64x384xbf16>
    tpu.vector_store %arg13[%c0_75, %c0_76], %315 {strides = array<i32>} : memref<64x384xbf16, #tpu.memory_space<vmem>>, vector<64x384xbf16>,
    %c0_77 = arith.constant 0 : index
    %c0_78 = arith.constant 0 : index
    %317 = vector.load %arg7[%c0_77, %c0_78] : memref<128x384xbf16, #tpu.memory_space<vmem>>, vector<128x384xbf16>
    %c0_79 = arith.constant 0 : index
    %c0_80 = arith.constant 0 : index
    %318 = vector.load %arg8[%c0_79, %c0_80] : memref<1x128xf32, #tpu.memory_space<vmem>>, vector<1x128xf32>
    %319 = vector.shape_cast %318 : vector<1x128xf32> to vector<1x128xf32>
    %320 = vector.broadcast %319 : vector<1x128xf32> to vector<8x128xf32>
    %cst_81 = arith.constant 0.000000e+00 : f32
    %321 = vector.broadcast %cst_81 : f32 to vector<8x128xf32>
    %c0_i32_82 = arith.constant 0 : i32
    %c8_i32_83 = arith.constant 8 : i32
    %322 = arith.muli %c0_i32_82, %c8_i32_83 : i32
    %323 = tpu.assume_multiple %322, 8 : i32
    %324 = arith.index_cast %323 : i32 to index
    %c0_84 = arith.constant 0 : index
    %325 = vector.load %arg13[%324, %c0_84] : memref<64x384xbf16, #tpu.memory_space<vmem>>, vector<8x384xbf16>
    %326 = arith.extf %325 : vector<8x384xbf16> to vector<8x384xf32>
    %327 = arith.truncf %321 : vector<8x128xf32> to vector<8x128xbf16>
    %cst_85 = arith.constant dense<0.000000e+00> : vector<8x384xf32>
    %328 = tpu.matmul %327, %317, %cst_85 {dimension_numbers = #tpu.dot_dimension_numbers<[1], [0], [0], [1], [0, 0, 1, 1], [], []>} : vector<8x128xbf16>, vector<128x384xbf16>, vector<8x384xf32> -> vector<8x384xf32>
    %329 = vector.extract_strided_slice %326 {offsets = [0, 0], sizes = [8, 128], strides = [1, 1]} : vector<8x384xf32> to vector<8x128xf32>
    %330 = vector.extract_strided_slice %328 {offsets = [0, 0], sizes = [8, 128], strides = [1, 1]} : vector<8x384xf32> to vector<8x128xf32>
    %331 = arith.addf %329, %330 : vector<8x128xf32>
    %332 = arith.negf %331 : vector<8x128xf32>
    %333 = math.exp %332 : vector<8x128xf32>
    %cst_86 = arith.constant 1.000000e+00 : f32
    %334 = vector.broadcast %cst_86 : f32 to vector<8x128xf32>
    %335 = arith.addf %334, %333 : vector<8x128xf32>
    %336 = arith.divf %334, %335 : vector<8x128xf32>
    %337 = vector.extract_strided_slice %326 {offsets = [0, 128], sizes = [8, 128], strides = [1, 1]} : vector<8x384xf32> to vector<8x128xf32>
    %338 = vector.extract_strided_slice %328 {offsets = [0, 128], sizes = [8, 128], strides = [1, 1]} : vector<8x384xf32> to vector<8x128xf32>
    %339 = arith.addf %337, %338 : vector<8x128xf32>
    %340 = arith.negf %339 : vector<8x128xf32>
    %341 = math.exp %340 : vector<8x128xf32>
    %cst_87 = arith.constant 1.000000e+00 : f32
    %342 = vector.broadcast %cst_87 : f32 to vector<8x128xf32>
    %343 = arith.addf %342, %341 : vector<8x128xf32>
    %344 = arith.divf %342, %343 : vector<8x128xf32>
    %345 = vector.extract_strided_slice %326 {offsets = [0, 256], sizes = [8, 128], strides = [1, 1]} : vector<8x384xf32> to vector<8x128xf32>
    %346 = vector.extract_strided_slice %328 {offsets = [0, 256], sizes = [8, 128], strides = [1, 1]} : vector<8x384xf32> to vector<8x128xf32>
    %347 = arith.addf %346, %320 : vector<8x128xf32>
    %348 = arith.mulf %336, %347 : vector<8x128xf32>
    %349 = arith.addf %345, %348 : vector<8x128xf32>
    %350 = math.tanh %349 : vector<8x128xf32>
    %cst_88 = arith.constant 1.000000e+00 : f32
    %351 = vector.broadcast %cst_88 : f32 to vector<8x128xf32>
    %352 = arith.subf %351, %344 : vector<8x128xf32>
    %353 = arith.mulf %352, %350 : vector<8x128xf32>
    %354 = arith.mulf %344, %321 : vector<8x128xf32>
    %355 = arith.addf %353, %354 : vector<8x128xf32>
    %c1_i32_89 = arith.constant 1 : i32
    %c8_i32_90 = arith.constant 8 : i32
    %356 = arith.muli %c1_i32_89, %c8_i32_90 : i32
    %357 = tpu.assume_multiple %356, 8 : i32
    %358 = arith.index_cast %357 : i32 to index
    %c0_91 = arith.constant 0 : index
    %359 = vector.load %arg13[%358, %c0_91] : memref<64x384xbf16, #tpu.memory_space<vmem>>, vector<8x384xbf16>
    %360 = arith.extf %359 : vector<8x384xbf16> to vector<8x384xf32>
    %361 = arith.truncf %355 : vector<8x128xf32> to vector<8x128xbf16>
    %cst_92 = arith.constant dense<0.000000e+00> : vector<8x384xf32>
    %362 = tpu.matmul %361, %317, %cst_92 {dimension_numbers = #tpu.dot_dimension_numbers<[1], [0], [0], [1], [0, 0, 1, 1], [], []>} : vector<8x128xbf16>, vector<128x384xbf16>, vector<8x384xf32> -> vector<8x384xf32>
    %363 = vector.extract_strided_slice %360 {offsets = [0, 0], sizes = [8, 128], strides = [1, 1]} : vector<8x384xf32> to vector<8x128xf32>
    %364 = vector.extract_strided_slice %362 {offsets = [0, 0], sizes = [8, 128], strides = [1, 1]} : vector<8x384xf32> to vector<8x128xf32>
    %365 = arith.addf %363, %364 : vector<8x128xf32>
    %366 = arith.negf %365 : vector<8x128xf32>
    %367 = math.exp %366 : vector<8x128xf32>
    %cst_93 = arith.constant 1.000000e+00 : f32
    %368 = vector.broadcast %cst_93 : f32 to vector<8x128xf32>
    %369 = arith.addf %368, %367 : vector<8x128xf32>
    %370 = arith.divf %368, %369 : vector<8x128xf32>
    %371 = vector.extract_strided_slice %360 {offsets = [0, 128], sizes = [8, 128], strides = [1, 1]} : vector<8x384xf32> to vector<8x128xf32>
    %372 = vector.extract_strided_slice %362 {offsets = [0, 128], sizes = [8, 128], strides = [1, 1]} : vector<8x384xf32> to vector<8x128xf32>
    %373 = arith.addf %371, %372 : vector<8x128xf32>
    %374 = arith.negf %373 : vector<8x128xf32>
    %375 = math.exp %374 : vector<8x128xf32>
    %cst_94 = arith.constant 1.000000e+00 : f32
    %376 = vector.broadcast %cst_94 : f32 to vector<8x128xf32>
    %377 = arith.addf %376, %375 : vector<8x128xf32>
    %378 = arith.divf %376, %377 : vector<8x128xf32>
    %379 = vector.extract_strided_slice %360 {offsets = [0, 256], sizes = [8, 128], strides = [1, 1]} : vector<8x384xf32> to vector<8x128xf32>
    %380 = vector.extract_strided_slice %362 {offsets = [0, 256], sizes = [8, 128], strides = [1, 1]} : vector<8x384xf32> to vector<8x128xf32>
    %381 = arith.addf %380, %320 : vector<8x128xf32>
    %382 = arith.mulf %370, %381 : vector<8x128xf32>
    %383 = arith.addf %379, %382 : vector<8x128xf32>
    %384 = math.tanh %383 : vector<8x128xf32>
    %cst_95 = arith.constant 1.000000e+00 : f32
    %385 = vector.broadcast %cst_95 : f32 to vector<8x128xf32>
    %386 = arith.subf %385, %378 : vector<8x128xf32>
    %387 = arith.mulf %386, %384 : vector<8x128xf32>
    %388 = arith.mulf %378, %355 : vector<8x128xf32>
    %389 = arith.addf %387, %388 : vector<8x128xf32>
    %c2_i32_96 = arith.constant 2 : i32
    %c8_i32_97 = arith.constant 8 : i32
    %390 = arith.muli %c2_i32_96, %c8_i32_97 : i32
    %391 = tpu.assume_multiple %390, 8 : i32
    %392 = arith.index_cast %391 : i32 to index
    %c0_98 = arith.constant 0 : index
    %393 = vector.load %arg13[%392, %c0_98] : memref<64x384xbf16, #tpu.memory_space<vmem>>, vector<8x384xbf16>
    %394 = arith.extf %393 : vector<8x384xbf16> to vector<8x384xf32>
    %395 = arith.truncf %389 : vector<8x128xf32> to vector<8x128xbf16>
    %cst_99 = arith.constant dense<0.000000e+00> : vector<8x384xf32>
    %396 = tpu.matmul %395, %317, %cst_99 {dimension_numbers = #tpu.dot_dimension_numbers<[1], [0], [0], [1], [0, 0, 1, 1], [], []>} : vector<8x128xbf16>, vector<128x384xbf16>, vector<8x384xf32> -> vector<8x384xf32>
    %397 = vector.extract_strided_slice %394 {offsets = [0, 0], sizes = [8, 128], strides = [1, 1]} : vector<8x384xf32> to vector<8x128xf32>
    %398 = vector.extract_strided_slice %396 {offsets = [0, 0], sizes = [8, 128], strides = [1, 1]} : vector<8x384xf32> to vector<8x128xf32>
    %399 = arith.addf %397, %398 : vector<8x128xf32>
    %400 = arith.negf %399 : vector<8x128xf32>
    %401 = math.exp %400 : vector<8x128xf32>
    %cst_100 = arith.constant 1.000000e+00 : f32
    %402 = vector.broadcast %cst_100 : f32 to vector<8x128xf32>
    %403 = arith.addf %402, %401 : vector<8x128xf32>
    %404 = arith.divf %402, %403 : vector<8x128xf32>
    %405 = vector.extract_strided_slice %394 {offsets = [0, 128], sizes = [8, 128], strides = [1, 1]} : vector<8x384xf32> to vector<8x128xf32>
    %406 = vector.extract_strided_slice %396 {offsets = [0, 128], sizes = [8, 128], strides = [1, 1]} : vector<8x384xf32> to vector<8x128xf32>
    %407 = arith.addf %405, %406 : vector<8x128xf32>
    %408 = arith.negf %407 : vector<8x128xf32>
    %409 = math.exp %408 : vector<8x128xf32>
    %cst_101 = arith.constant 1.000000e+00 : f32
    %410 = vector.broadcast %cst_101 : f32 to vector<8x128xf32>
    %411 = arith.addf %410, %409 : vector<8x128xf32>
    %412 = arith.divf %410, %411 : vector<8x128xf32>
    %413 = vector.extract_strided_slice %394 {offsets = [0, 256], sizes = [8, 128], strides = [1, 1]} : vector<8x384xf32> to vector<8x128xf32>
    %414 = vector.extract_strided_slice %396 {offsets = [0, 256], sizes = [8, 128], strides = [1, 1]} : vector<8x384xf32> to vector<8x128xf32>
    %415 = arith.addf %414, %320 : vector<8x128xf32>
    %416 = arith.mulf %404, %415 : vector<8x128xf32>
    %417 = arith.addf %413, %416 : vector<8x128xf32>
    %418 = math.tanh %417 : vector<8x128xf32>
    %cst_102 = arith.constant 1.000000e+00 : f32
    %419 = vector.broadcast %cst_102 : f32 to vector<8x128xf32>
    %420 = arith.subf %419, %412 : vector<8x128xf32>
    %421 = arith.mulf %420, %418 : vector<8x128xf32>
    %422 = arith.mulf %412, %389 : vector<8x128xf32>
    %423 = arith.addf %421, %422 : vector<8x128xf32>
    %c3_i32_103 = arith.constant 3 : i32
    %c8_i32_104 = arith.constant 8 : i32
    %424 = arith.muli %c3_i32_103, %c8_i32_104 : i32
    %425 = tpu.assume_multiple %424, 8 : i32
    %426 = arith.index_cast %425 : i32 to index
    %c0_105 = arith.constant 0 : index
    %427 = vector.load %arg13[%426, %c0_105] : memref<64x384xbf16, #tpu.memory_space<vmem>>, vector<8x384xbf16>
    %428 = arith.extf %427 : vector<8x384xbf16> to vector<8x384xf32>
    %429 = arith.truncf %423 : vector<8x128xf32> to vector<8x128xbf16>
    %cst_106 = arith.constant dense<0.000000e+00> : vector<8x384xf32>
    %430 = tpu.matmul %429, %317, %cst_106 {dimension_numbers = #tpu.dot_dimension_numbers<[1], [0], [0], [1], [0, 0, 1, 1], [], []>} : vector<8x128xbf16>, vector<128x384xbf16>, vector<8x384xf32> -> vector<8x384xf32>
    %431 = vector.extract_strided_slice %428 {offsets = [0, 0], sizes = [8, 128], strides = [1, 1]} : vector<8x384xf32> to vector<8x128xf32>
    %432 = vector.extract_strided_slice %430 {offsets = [0, 0], sizes = [8, 128], strides = [1, 1]} : vector<8x384xf32> to vector<8x128xf32>
    %433 = arith.addf %431, %432 : vector<8x128xf32>
    %434 = arith.negf %433 : vector<8x128xf32>
    %435 = math.exp %434 : vector<8x128xf32>
    %cst_107 = arith.constant 1.000000e+00 : f32
    %436 = vector.broadcast %cst_107 : f32 to vector<8x128xf32>
    %437 = arith.addf %436, %435 : vector<8x128xf32>
    %438 = arith.divf %436, %437 : vector<8x128xf32>
    %439 = vector.extract_strided_slice %428 {offsets = [0, 128], sizes = [8, 128], strides = [1, 1]} : vector<8x384xf32> to vector<8x128xf32>
    %440 = vector.extract_strided_slice %430 {offsets = [0, 128], sizes = [8, 128], strides = [1, 1]} : vector<8x384xf32> to vector<8x128xf32>
    %441 = arith.addf %439, %440 : vector<8x128xf32>
    %442 = arith.negf %441 : vector<8x128xf32>
    %443 = math.exp %442 : vector<8x128xf32>
    %cst_108 = arith.constant 1.000000e+00 : f32
    %444 = vector.broadcast %cst_108 : f32 to vector<8x128xf32>
    %445 = arith.addf %444, %443 : vector<8x128xf32>
    %446 = arith.divf %444, %445 : vector<8x128xf32>
    %447 = vector.extract_strided_slice %428 {offsets = [0, 256], sizes = [8, 128], strides = [1, 1]} : vector<8x384xf32> to vector<8x128xf32>
    %448 = vector.extract_strided_slice %430 {offsets = [0, 256], sizes = [8, 128], strides = [1, 1]} : vector<8x384xf32> to vector<8x128xf32>
    %449 = arith.addf %448, %320 : vector<8x128xf32>
    %450 = arith.mulf %438, %449 : vector<8x128xf32>
    %451 = arith.addf %447, %450 : vector<8x128xf32>
    %452 = math.tanh %451 : vector<8x128xf32>
    %cst_109 = arith.constant 1.000000e+00 : f32
    %453 = vector.broadcast %cst_109 : f32 to vector<8x128xf32>
    %454 = arith.subf %453, %446 : vector<8x128xf32>
    %455 = arith.mulf %454, %452 : vector<8x128xf32>
    %456 = arith.mulf %446, %423 : vector<8x128xf32>
    %457 = arith.addf %455, %456 : vector<8x128xf32>
    %c4_i32_110 = arith.constant 4 : i32
    %c8_i32_111 = arith.constant 8 : i32
    %458 = arith.muli %c4_i32_110, %c8_i32_111 : i32
    %459 = tpu.assume_multiple %458, 8 : i32
    %460 = arith.index_cast %459 : i32 to index
    %c0_112 = arith.constant 0 : index
    %461 = vector.load %arg13[%460, %c0_112] : memref<64x384xbf16, #tpu.memory_space<vmem>>, vector<8x384xbf16>
    %462 = arith.extf %461 : vector<8x384xbf16> to vector<8x384xf32>
    %463 = arith.truncf %457 : vector<8x128xf32> to vector<8x128xbf16>
    %cst_113 = arith.constant dense<0.000000e+00> : vector<8x384xf32>
    %464 = tpu.matmul %463, %317, %cst_113 {dimension_numbers = #tpu.dot_dimension_numbers<[1], [0], [0], [1], [0, 0, 1, 1], [], []>} : vector<8x128xbf16>, vector<128x384xbf16>, vector<8x384xf32> -> vector<8x384xf32>
    %465 = vector.extract_strided_slice %462 {offsets = [0, 0], sizes = [8, 128], strides = [1, 1]} : vector<8x384xf32> to vector<8x128xf32>
    %466 = vector.extract_strided_slice %464 {offsets = [0, 0], sizes = [8, 128], strides = [1, 1]} : vector<8x384xf32> to vector<8x128xf32>
    %467 = arith.addf %465, %466 : vector<8x128xf32>
    %468 = arith.negf %467 : vector<8x128xf32>
    %469 = math.exp %468 : vector<8x128xf32>
    %cst_114 = arith.constant 1.000000e+00 : f32
    %470 = vector.broadcast %cst_114 : f32 to vector<8x128xf32>
    %471 = arith.addf %470, %469 : vector<8x128xf32>
    %472 = arith.divf %470, %471 : vector<8x128xf32>
    %473 = vector.extract_strided_slice %462 {offsets = [0, 128], sizes = [8, 128], strides = [1, 1]} : vector<8x384xf32> to vector<8x128xf32>
    %474 = vector.extract_strided_slice %464 {offsets = [0, 128], sizes = [8, 128], strides = [1, 1]} : vector<8x384xf32> to vector<8x128xf32>
    %475 = arith.addf %473, %474 : vector<8x128xf32>
    %476 = arith.negf %475 : vector<8x128xf32>
    %477 = math.exp %476 : vector<8x128xf32>
    %cst_115 = arith.constant 1.000000e+00 : f32
    %478 = vector.broadcast %cst_115 : f32 to vector<8x128xf32>
    %479 = arith.addf %478, %477 : vector<8x128xf32>
    %480 = arith.divf %478, %479 : vector<8x128xf32>
    %481 = vector.extract_strided_slice %462 {offsets = [0, 256], sizes = [8, 128], strides = [1, 1]} : vector<8x384xf32> to vector<8x128xf32>
    %482 = vector.extract_strided_slice %464 {offsets = [0, 256], sizes = [8, 128], strides = [1, 1]} : vector<8x384xf32> to vector<8x128xf32>
    %483 = arith.addf %482, %320 : vector<8x128xf32>
    %484 = arith.mulf %472, %483 : vector<8x128xf32>
    %485 = arith.addf %481, %484 : vector<8x128xf32>
    %486 = math.tanh %485 : vector<8x128xf32>
    %cst_116 = arith.constant 1.000000e+00 : f32
    %487 = vector.broadcast %cst_116 : f32 to vector<8x128xf32>
    %488 = arith.subf %487, %480 : vector<8x128xf32>
    %489 = arith.mulf %488, %486 : vector<8x128xf32>
    %490 = arith.mulf %480, %457 : vector<8x128xf32>
    %491 = arith.addf %489, %490 : vector<8x128xf32>
    %c5_i32_117 = arith.constant 5 : i32
    %c8_i32_118 = arith.constant 8 : i32
    %492 = arith.muli %c5_i32_117, %c8_i32_118 : i32
    %493 = tpu.assume_multiple %492, 8 : i32
    %494 = arith.index_cast %493 : i32 to index
    %c0_119 = arith.constant 0 : index
    %495 = vector.load %arg13[%494, %c0_119] : memref<64x384xbf16, #tpu.memory_space<vmem>>, vector<8x384xbf16>
    %496 = arith.extf %495 : vector<8x384xbf16> to vector<8x384xf32>
    %497 = arith.truncf %491 : vector<8x128xf32> to vector<8x128xbf16>
    %cst_120 = arith.constant dense<0.000000e+00> : vector<8x384xf32>
    %498 = tpu.matmul %497, %317, %cst_120 {dimension_numbers = #tpu.dot_dimension_numbers<[1], [0], [0], [1], [0, 0, 1, 1], [], []>} : vector<8x128xbf16>, vector<128x384xbf16>, vector<8x384xf32> -> vector<8x384xf32>
    %499 = vector.extract_strided_slice %496 {offsets = [0, 0], sizes = [8, 128], strides = [1, 1]} : vector<8x384xf32> to vector<8x128xf32>
    %500 = vector.extract_strided_slice %498 {offsets = [0, 0], sizes = [8, 128], strides = [1, 1]} : vector<8x384xf32> to vector<8x128xf32>
    %501 = arith.addf %499, %500 : vector<8x128xf32>
    %502 = arith.negf %501 : vector<8x128xf32>
    %503 = math.exp %502 : vector<8x128xf32>
    %cst_121 = arith.constant 1.000000e+00 : f32
    %504 = vector.broadcast %cst_121 : f32 to vector<8x128xf32>
    %505 = arith.addf %504, %503 : vector<8x128xf32>
    %506 = arith.divf %504, %505 : vector<8x128xf32>
    %507 = vector.extract_strided_slice %496 {offsets = [0, 128], sizes = [8, 128], strides = [1, 1]} : vector<8x384xf32> to vector<8x128xf32>
    %508 = vector.extract_strided_slice %498 {offsets = [0, 128], sizes = [8, 128], strides = [1, 1]} : vector<8x384xf32> to vector<8x128xf32>
    %509 = arith.addf %507, %508 : vector<8x128xf32>
    %510 = arith.negf %509 : vector<8x128xf32>
    %511 = math.exp %510 : vector<8x128xf32>
    %cst_122 = arith.constant 1.000000e+00 : f32
    %512 = vector.broadcast %cst_122 : f32 to vector<8x128xf32>
    %513 = arith.addf %512, %511 : vector<8x128xf32>
    %514 = arith.divf %512, %513 : vector<8x128xf32>
    %515 = vector.extract_strided_slice %496 {offsets = [0, 256], sizes = [8, 128], strides = [1, 1]} : vector<8x384xf32> to vector<8x128xf32>
    %516 = vector.extract_strided_slice %498 {offsets = [0, 256], sizes = [8, 128], strides = [1, 1]} : vector<8x384xf32> to vector<8x128xf32>
    %517 = arith.addf %516, %320 : vector<8x128xf32>
    %518 = arith.mulf %506, %517 : vector<8x128xf32>
    %519 = arith.addf %515, %518 : vector<8x128xf32>
    %520 = math.tanh %519 : vector<8x128xf32>
    %cst_123 = arith.constant 1.000000e+00 : f32
    %521 = vector.broadcast %cst_123 : f32 to vector<8x128xf32>
    %522 = arith.subf %521, %514 : vector<8x128xf32>
    %523 = arith.mulf %522, %520 : vector<8x128xf32>
    %524 = arith.mulf %514, %491 : vector<8x128xf32>
    %525 = arith.addf %523, %524 : vector<8x128xf32>
    %c6_i32_124 = arith.constant 6 : i32
    %c8_i32_125 = arith.constant 8 : i32
    %526 = arith.muli %c6_i32_124, %c8_i32_125 : i32
    %527 = tpu.assume_multiple %526, 8 : i32
    %528 = arith.index_cast %527 : i32 to index
    %c0_126 = arith.constant 0 : index
    %529 = vector.load %arg13[%528, %c0_126] : memref<64x384xbf16, #tpu.memory_space<vmem>>, vector<8x384xbf16>
    %530 = arith.extf %529 : vector<8x384xbf16> to vector<8x384xf32>
    %531 = arith.truncf %525 : vector<8x128xf32> to vector<8x128xbf16>
    %cst_127 = arith.constant dense<0.000000e+00> : vector<8x384xf32>
    %532 = tpu.matmul %531, %317, %cst_127 {dimension_numbers = #tpu.dot_dimension_numbers<[1], [0], [0], [1], [0, 0, 1, 1], [], []>} : vector<8x128xbf16>, vector<128x384xbf16>, vector<8x384xf32> -> vector<8x384xf32>
    %533 = vector.extract_strided_slice %530 {offsets = [0, 0], sizes = [8, 128], strides = [1, 1]} : vector<8x384xf32> to vector<8x128xf32>
    %534 = vector.extract_strided_slice %532 {offsets = [0, 0], sizes = [8, 128], strides = [1, 1]} : vector<8x384xf32> to vector<8x128xf32>
    %535 = arith.addf %533, %534 : vector<8x128xf32>
    %536 = arith.negf %535 : vector<8x128xf32>
    %537 = math.exp %536 : vector<8x128xf32>
    %cst_128 = arith.constant 1.000000e+00 : f32
    %538 = vector.broadcast %cst_128 : f32 to vector<8x128xf32>
    %539 = arith.addf %538, %537 : vector<8x128xf32>
    %540 = arith.divf %538, %539 : vector<8x128xf32>
    %541 = vector.extract_strided_slice %530 {offsets = [0, 128], sizes = [8, 128], strides = [1, 1]} : vector<8x384xf32> to vector<8x128xf32>
    %542 = vector.extract_strided_slice %532 {offsets = [0, 128], sizes = [8, 128], strides = [1, 1]} : vector<8x384xf32> to vector<8x128xf32>
    %543 = arith.addf %541, %542 : vector<8x128xf32>
    %544 = arith.negf %543 : vector<8x128xf32>
    %545 = math.exp %544 : vector<8x128xf32>
    %cst_129 = arith.constant 1.000000e+00 : f32
    %546 = vector.broadcast %cst_129 : f32 to vector<8x128xf32>
    %547 = arith.addf %546, %545 : vector<8x128xf32>
    %548 = arith.divf %546, %547 : vector<8x128xf32>
    %549 = vector.extract_strided_slice %530 {offsets = [0, 256], sizes = [8, 128], strides = [1, 1]} : vector<8x384xf32> to vector<8x128xf32>
    %550 = vector.extract_strided_slice %532 {offsets = [0, 256], sizes = [8, 128], strides = [1, 1]} : vector<8x384xf32> to vector<8x128xf32>
    %551 = arith.addf %550, %320 : vector<8x128xf32>
    %552 = arith.mulf %540, %551 : vector<8x128xf32>
    %553 = arith.addf %549, %552 : vector<8x128xf32>
    %554 = math.tanh %553 : vector<8x128xf32>
    %cst_130 = arith.constant 1.000000e+00 : f32
    %555 = vector.broadcast %cst_130 : f32 to vector<8x128xf32>
    %556 = arith.subf %555, %548 : vector<8x128xf32>
    %557 = arith.mulf %556, %554 : vector<8x128xf32>
    %558 = arith.mulf %548, %525 : vector<8x128xf32>
    %559 = arith.addf %557, %558 : vector<8x128xf32>
    %c7_i32_131 = arith.constant 7 : i32
    %c8_i32_132 = arith.constant 8 : i32
    %560 = arith.muli %c7_i32_131, %c8_i32_132 : i32
    %561 = tpu.assume_multiple %560, 8 : i32
    %562 = arith.index_cast %561 : i32 to index
    %c0_133 = arith.constant 0 : index
    %563 = vector.load %arg13[%562, %c0_133] : memref<64x384xbf16, #tpu.memory_space<vmem>>, vector<8x384xbf16>
    %564 = arith.extf %563 : vector<8x384xbf16> to vector<8x384xf32>
    %565 = arith.truncf %559 : vector<8x128xf32> to vector<8x128xbf16>
    %cst_134 = arith.constant dense<0.000000e+00> : vector<8x384xf32>
    %566 = tpu.matmul %565, %317, %cst_134 {dimension_numbers = #tpu.dot_dimension_numbers<[1], [0], [0], [1], [0, 0, 1, 1], [], []>} : vector<8x128xbf16>, vector<128x384xbf16>, vector<8x384xf32> -> vector<8x384xf32>
    %567 = vector.extract_strided_slice %564 {offsets = [0, 0], sizes = [8, 128], strides = [1, 1]} : vector<8x384xf32> to vector<8x128xf32>
    %568 = vector.extract_strided_slice %566 {offsets = [0, 0], sizes = [8, 128], strides = [1, 1]} : vector<8x384xf32> to vector<8x128xf32>
    %569 = arith.addf %567, %568 : vector<8x128xf32>
    %570 = arith.negf %569 : vector<8x128xf32>
    %571 = math.exp %570 : vector<8x128xf32>
    %cst_135 = arith.constant 1.000000e+00 : f32
    %572 = vector.broadcast %cst_135 : f32 to vector<8x128xf32>
    %573 = arith.addf %572, %571 : vector<8x128xf32>
    %574 = arith.divf %572, %573 : vector<8x128xf32>
    %575 = vector.extract_strided_slice %564 {offsets = [0, 128], sizes = [8, 128], strides = [1, 1]} : vector<8x384xf32> to vector<8x128xf32>
    %576 = vector.extract_strided_slice %566 {offsets = [0, 128], sizes = [8, 128], strides = [1, 1]} : vector<8x384xf32> to vector<8x128xf32>
    %577 = arith.addf %575, %576 : vector<8x128xf32>
    %578 = arith.negf %577 : vector<8x128xf32>
    %579 = math.exp %578 : vector<8x128xf32>
    %cst_136 = arith.constant 1.000000e+00 : f32
    %580 = vector.broadcast %cst_136 : f32 to vector<8x128xf32>
    %581 = arith.addf %580, %579 : vector<8x128xf32>
    %582 = arith.divf %580, %581 : vector<8x128xf32>
    %583 = vector.extract_strided_slice %564 {offsets = [0, 256], sizes = [8, 128], strides = [1, 1]} : vector<8x384xf32> to vector<8x128xf32>
    %584 = vector.extract_strided_slice %566 {offsets = [0, 256], sizes = [8, 128], strides = [1, 1]} : vector<8x384xf32> to vector<8x128xf32>
    %585 = arith.addf %584, %320 : vector<8x128xf32>
    %586 = arith.mulf %574, %585 : vector<8x128xf32>
    %587 = arith.addf %583, %586 : vector<8x128xf32>
    %588 = math.tanh %587 : vector<8x128xf32>
    %cst_137 = arith.constant 1.000000e+00 : f32
    %589 = vector.broadcast %cst_137 : f32 to vector<8x128xf32>
    %590 = arith.subf %589, %582 : vector<8x128xf32>
    %591 = arith.mulf %590, %588 : vector<8x128xf32>
    %592 = arith.mulf %582, %559 : vector<8x128xf32>
    %593 = arith.addf %591, %592 : vector<8x128xf32>
    %c8_i32_138 = arith.constant 8 : i32
    %594 = arith.truncf %593 : vector<8x128xf32> to vector<8x128xbf16>
    %c0_139 = arith.constant 0 : index
    %c0_140 = arith.constant 0 : index
    %595 = vector.load %arg9[%c0_139, %c0_140] : memref<128x128xbf16, #tpu.memory_space<vmem>>, vector<128x128xbf16>
    %cst_141 = arith.constant dense<0.000000e+00> : vector<8x128xf32>
    %596 = tpu.matmul %594, %595, %cst_141 {dimension_numbers = #tpu.dot_dimension_numbers<[1], [0], [0], [1], [0, 0, 1, 1], [], []>} : vector<8x128xbf16>, vector<128x128xbf16>, vector<8x128xf32> -> vector<8x128xf32>
    %c0_142 = arith.constant 0 : index
    %c0_143 = arith.constant 0 : index
    %597 = vector.load %arg10[%c0_142, %c0_143] : memref<1x128xf32, #tpu.memory_space<vmem>>, vector<1x128xf32>
    %598 = vector.broadcast %597 : vector<1x128xf32> to vector<8x128xf32>
    %599 = arith.addf %596, %598 : vector<8x128xf32>
    %c0_144 = arith.constant 0 : index
    %c0_145 = arith.constant 0 : index
    %600 = vector.load %arg11[%c0_144, %c0_145] : memref<8x128xf32, #tpu.memory_space<vmem>>, vector<8x128xf32>
    tpu.vector_store %arg11[%c0_144, %c0_145], %599 {strides = array<i32>} : memref<8x128xf32, #tpu.memory_space<vmem>>, vector<8x128xf32>,
    return
  }
}

</mosaic_0001>

<llo_original>
// kernel: gated_recurrent_unit_forward.1
$region0: #{gated_recurrent_unit_forward.1}
  #allocation0 [shape = 'u32[]', space=smem, size = 0x4, offset = 0x4, fixed_abs, tag = 'smem constant byte address 0x4 - core index']
  #allocation1 [shape = 'u32[72,128]{1,0:T(1,128)}', space=vmem, size = 0x9000, scoped, tag = 'internal scratch']
  #allocation2 [shape = 'bf16[64,128]{1,0:T(8,128)(2,1)}', space=vmem, size = 0x4000, scoped, tag = 'scratch operand']
  #allocation3 [shape = 'bf16[64,384]{1,0:T(8,128)(2,1)}', space=vmem, size = 0xc000, scoped, tag = 'scratch operand']
  %s0 = inlined_call_operand.vmem [shape: bf16[64,128], index: 0, kind: input, shape index: {}]
  %s1 = inlined_call_operand.hbm [shape: bf16[128,384], index: 1, kind: input, shape index: {}]
  %s2 = inlined_call_operand.vmem [shape: f32[1,384], index: 2, kind: input, shape index: {}]
  %s3 = inlined_call_operand.hbm [shape: bf16[128,384], index: 3, kind: input, shape index: {}]
  %s4 = inlined_call_operand.vmem [shape: f32[1,128], index: 4, kind: input, shape index: {}]
  %s5 = inlined_call_operand.hbm [shape: bf16[128,384], index: 5, kind: input, shape index: {}]
  %s6 = inlined_call_operand.vmem [shape: f32[1,384], index: 6, kind: input, shape index: {}]
  %s7 = inlined_call_operand.hbm [shape: bf16[128,384], index: 7, kind: input, shape index: {}]
  %s8 = inlined_call_operand.vmem [shape: f32[1,128], index: 8, kind: input, shape index: {}]
  %s9 = inlined_call_operand.vmem [shape: bf16[128,128], index: 9, kind: input, shape index: {}]
  %s10 = inlined_call_operand.vmem [shape: f32[1,128], index: 10, kind: input, shape index: {}]
  %s11 = inlined_call_operand.vmem [shape: f32[8,128], index: 11, kind: output, shape index: {}]
  %s12 = sld [smem:[#allocation0]]
  $region70: #{gated_recurrent_unit_forward.1} parent=0
    _
  %s14 = ssub.s32 1, %s12
  %s15 = scalar_select 0, %s14, %s12
  $region1: #{gated_recurrent_unit_forward.1} parent=0
    #allocation4 [shape = 'u8[98304]{0}', space=vmem, size = 0x18000, scoped, tag = 'input window, operand 1, single buffered']
    #allocation5 [shape = 's32[1]{0}', space=sflag, size = 0x4, scoped, tag = 'scoped memory for gated_recurrent_unit_forward.1']
    #allocation6 [shape = 'u8[98304]{0}', space=vmem, size = 0x18000, scoped, tag = 'input window, operand 3, single buffered']
    #allocation7 [shape = 's32[1]{0}', space=sflag, size = 0x4, scoped, tag = 'scoped memory for gated_recurrent_unit_forward.1']
    #allocation8 [shape = 'u8[98304]{0}', space=vmem, size = 0x18000, scoped, tag = 'input window, operand 5, single buffered']
    #allocation9 [shape = 'u8[98304]{0}', space=vmem, size = 0x18000, scoped, tag = 'input window, operand 7, single buffered']
    #allocation10 [shape = 's32[1]{0}', space=sflag, size = 0x4, scoped, tag = 'scoped memory for gated_recurrent_unit_forward.1']
    %16 = vsyncpa [#allocation5], 0
    %17 = vsyncpa [#allocation7], 0
    %18 = vsyncpa [#allocation10], 0
    // Predicated region
    $region2: #{gated_recurrent_unit_forward.1} parent=1 // pred_check
      _
    $region3: #{gated_recurrent_unit_forward.1} parent=1 // pred_check_branch
      %20 = sbr.rel (0) target = $region5
    $region4: #{gated_recurrent_unit_forward.1} parent=1 // pred_region
      _
    $region5: #{gated_recurrent_unit_forward.1} parent=1 // pred_fallthru
      _
    // Predicated region
    $region6: #{gated_recurrent_unit_forward.1} parent=1 // pred_check
      _
    $region7: #{gated_recurrent_unit_forward.1} parent=1 // pred_check_branch
      %22 = sbr.rel (0) target = $region9
    $region8: #{gated_recurrent_unit_forward.1} parent=1 // pred_region
      %24 = vsyncadd [#allocation5], 0
      %s25 = sshll.u32 %s1, 4
      %s26 = int_to_ptr.hbm [resolvable:$true] %s25
      %s27 = sshll.u32 [#allocation4], 4
      %s28 = int_to_ptr.vmem [resolvable:$true] %s27
      %33 = dma.hbm_to_vmem [thread:$0]  %s26, 3072, %s28, [#allocation5], 192, 192, 12
    $region9: #{gated_recurrent_unit_forward.1} parent=1 // pred_fallthru
      _
    // Predicated region
    $region10: #{gated_recurrent_unit_forward.1} parent=1 // pred_check
      _
    $region11: #{gated_recurrent_unit_forward.1} parent=1 // pred_check_branch
      %35 = sbr.rel (0) target = $region13
    $region12: #{gated_recurrent_unit_forward.1} parent=1 // pred_region
      _
    $region13: #{gated_recurrent_unit_forward.1} parent=1 // pred_fallthru
      _
    // Predicated region
    $region14: #{gated_recurrent_unit_forward.1} parent=1 // pred_check
      _
    $region15: #{gated_recurrent_unit_forward.1} parent=1 // pred_check_branch
      %37 = sbr.rel (0) target = $region17
    $region16: #{gated_recurrent_unit_forward.1} parent=1 // pred_region
      %39 = vsyncadd [#allocation7], 0
      %s40 = sshll.u32 %s3, 4
      %s41 = int_to_ptr.hbm [resolvable:$true] %s40
      %s42 = sshll.u32 [#allocation6], 4
      %s43 = int_to_ptr.vmem [resolvable:$true] %s42
      %48 = dma.hbm_to_vmem [thread:$0]  %s41, 3072, %s43, [#allocation7], 192, 192, 12
    $region17: #{gated_recurrent_unit_forward.1} parent=1 // pred_fallthru
      _
    // Predicated region
    $region18: #{gated_recurrent_unit_forward.1} parent=1 // pred_check
      _
    $region19: #{gated_recurrent_unit_forward.1} parent=1 // pred_check_branch
      %50 = sbr.rel (0) target = $region21
    $region20: #{gated_recurrent_unit_forward.1} parent=1 // pred_region
      _
    $region21: #{gated_recurrent_unit_forward.1} parent=1 // pred_fallthru
      _
    // Predicated region
    $region22: #{gated_recurrent_unit_forward.1} parent=1 // pred_check
      _
    $region23: #{gated_recurrent_unit_forward.1} parent=1 // pred_check_branch
      %52 = sbr.rel (0) target = $region25
    $region24: #{gated_recurrent_unit_forward.1} parent=1 // pred_region
      %54 = vsyncadd [#allocation7], 0
      %s55 = sshll.u32 %s5, 4
      %s56 = int_to_ptr.hbm [resolvable:$true] %s55
      %s57 = sshll.u32 [#allocation8], 4
      %s58 = int_to_ptr.vmem [resolvable:$true] %s57
      %63 = dma.hbm_to_vmem [thread:$0]  %s56, 3072, %s58, [#allocation7], 192, 192, 12
    $region25: #{gated_recurrent_unit_forward.1} parent=1 // pred_fallthru
      _
    // Predicated region
    $region26: #{gated_recurrent_unit_forward.1} parent=1 // pred_check
      _
    $region27: #{gated_recurrent_unit_forward.1} parent=1 // pred_check_branch
      %65 = sbr.rel (0) target = $region29
    $region28: #{gated_recurrent_unit_forward.1} parent=1 // pred_region
      _
    $region29: #{gated_recurrent_unit_forward.1} parent=1 // pred_fallthru
      _
    // Predicated region
    $region30: #{gated_recurrent_unit_forward.1} parent=1 // pred_check
      _
    $region31: #{gated_recurrent_unit_forward.1} parent=1 // pred_check_branch
      %67 = sbr.rel (0) target = $region33
    $region32: #{gated_recurrent_unit_forward.1} parent=1 // pred_region
      %69 = vsyncadd [#allocation10], 0
      %s70 = sshll.u32 %s7, 4
      %s71 = int_to_ptr.hbm [resolvable:$true] %s70
      %s72 = sshll.u32 [#allocation9], 4
      %s73 = int_to_ptr.vmem [resolvable:$true] %s72
      %78 = dma.hbm_to_vmem [thread:$0]  %s71, 3072, %s73, [#allocation10], 192, 192, 12
    $region33: #{gated_recurrent_unit_forward.1} parent=1 // pred_fallthru
      _
    // Predicated region
    $region34: #{gated_recurrent_unit_forward.1} parent=1 // pred_check
      _
    $region35: #{gated_recurrent_unit_forward.1} parent=1 // pred_check_branch
      %80 = sbr.rel (0) target = $region37
    $region36: #{gated_recurrent_unit_forward.1} parent=1 // pred_region
      _
    $region37: #{gated_recurrent_unit_forward.1} parent=1 // pred_fallthru
      _
    // Predicated region
    $region38: #{gated_recurrent_unit_forward.1} parent=1 // pred_check
      _
    $region39: #{gated_recurrent_unit_forward.1} parent=1 // pred_check_branch
      %82 = sbr.rel (0) target = $region41
    $region40: #{gated_recurrent_unit_forward.1} parent=1 // pred_region
      _
    $region41: #{gated_recurrent_unit_forward.1} parent=1 // pred_fallthru
      _
    // Predicated region
    $region42: #{gated_recurrent_unit_forward.1} parent=1 // pred_check
      _
    $region43: #{gated_recurrent_unit_forward.1} parent=1 // pred_check_branch
      %84 = sbr.rel (0) target = $region45
    $region44: #{gated_recurrent_unit_forward.1} parent=1 // pred_region
      _
    $region45: #{gated_recurrent_unit_forward.1} parent=1 // pred_fallthru
      _
    // Predicated region
    $region46: #{gated_recurrent_unit_forward.1} parent=1 // pred_check
      _
    $region47: #{gated_recurrent_unit_forward.1} parent=1 // pred_check_branch
      %86 = sbr.rel (0) target = $region49
    $region48: #{gated_recurrent_unit_forward.1} parent=1 // pred_region
      %88 = dma.done [#allocation5], 3072
    $region49: #{gated_recurrent_unit_forward.1} parent=1 // pred_fallthru
      _
    // Predicated region
    $region50: #{gated_recurrent_unit_forward.1} parent=1 // pred_check
      _
    $region51: #{gated_recurrent_unit_forward.1} parent=1 // pred_check_branch
      %90 = sbr.rel (0) target = $region53
    $region52: #{gated_recurrent_unit_forward.1} parent=1 // pred_region
      %92 = dma.done [#allocation7], 3072
    $region53: #{gated_recurrent_unit_forward.1} parent=1 // pred_fallthru
      _
    // Predicated region
    $region54: #{gated_recurrent_unit_forward.1} parent=1 // pred_check
      _
    $region55: #{gated_recurrent_unit_forward.1} parent=1 // pred_check_branch
      %94 = sbr.rel (0) target = $region57
    $region56: #{gated_recurrent_unit_forward.1} parent=1 // pred_region
      %96 = dma.done [#allocation7], 3072
    $region57: #{gated_recurrent_unit_forward.1} parent=1 // pred_fallthru
      _
    // Predicated region
    $region58: #{gated_recurrent_unit_forward.1} parent=1 // pred_check
      _
    $region59: #{gated_recurrent_unit_forward.1} parent=1 // pred_check_branch
      %98 = sbr.rel (0) target = $region61
    $region60: #{gated_recurrent_unit_forward.1} parent=1 // pred_region
      %100 = dma.done [#allocation10], 3072
    $region61: #{gated_recurrent_unit_forward.1} parent=1 // pred_fallthru
      _
    %v102 = vld [vmem:[%s0] sm:$0xf]
    %v103 = vld [vmem:[%s0 + $0x4] sm:$0xf]
    %v104 = vld [vmem:[%s0 + $0x8] sm:$0xf]
    %v105 = vld [vmem:[%s0 + $0xc] sm:$0xf]
    %v106 = vld [vmem:[%s0 + $0x10] sm:$0xf]
    %v107 = vld [vmem:[%s0 + $0x14] sm:$0xf]
    %v108 = vld [vmem:[%s0 + $0x18] sm:$0xf]
    %v109 = vld [vmem:[%s0 + $0x1c] sm:$0xf]
    %v110 = vld [vmem:[#allocation4] sm:$0xff]
    %v111 = vld [vmem:[#allocation4 + $0x8] sm:$0xf]
    %v112 = vld [vmem:[#allocation4 + $0xc] sm:$0xff]
    %v113 = vld [vmem:[#allocation4 + $0x14] sm:$0xf]
    %v114 = vld [vmem:[#allocation4 + $0x18] sm:$0xff]
    %v115 = vld [vmem:[#allocation4 + $0x20] sm:$0xf]
    %v116 = vld [vmem:[#allocation4 + $0x24] sm:$0xff]
    %v117 = vld [vmem:[#allocation4 + $0x2c] sm:$0xf]
    %v118 = vld [vmem:[#allocation4 + $0x30] sm:$0xff]
    %v119 = vld [vmem:[#allocation4 + $0x38] sm:$0xf]
    %v120 = vld [vmem:[#allocation4 + $0x3c] sm:$0xff]
    %v121 = vld [vmem:[#allocation4 + $0x44] sm:$0xf]
    %v122 = vld [vmem:[#allocation4 + $0x48] sm:$0xff]
    %v123 = vld [vmem:[#allocation4 + $0x50] sm:$0xf]
    %v124 = vld [vmem:[#allocation4 + $0x54] sm:$0xff]
    %v125 = vld [vmem:[#allocation4 + $0x5c] sm:$0xf]
    %v126 = vld [vmem:[#allocation4 + $0x60] sm:$0xff]
    %v127 = vld [vmem:[#allocation4 + $0x68] sm:$0xf]
    %v128 = vld [vmem:[#allocation4 + $0x6c] sm:$0xff]
    %v129 = vld [vmem:[#allocation4 + $0x74] sm:$0xf]
    %v130 = vld [vmem:[#allocation4 + $0x78] sm:$0xff]
    %v131 = vld [vmem:[#allocation4 + $0x80] sm:$0xf]
    %v132 = vld [vmem:[#allocation4 + $0x84] sm:$0xff]
    %v133 = vld [vmem:[#allocation4 + $0x8c] sm:$0xf]
    %v134 = vld [vmem:[#allocation4 + $0x90] sm:$0xff]
    %v135 = vld [vmem:[#allocation4 + $0x98] sm:$0xf]
    %v136 = vld [vmem:[#allocation4 + $0x9c] sm:$0xff]
    %v137 = vld [vmem:[#allocation4 + $0xa4] sm:$0xf]
    %v138 = vld [vmem:[#allocation4 + $0xa8] sm:$0xff]
    %v139 = vld [vmem:[#allocation4 + $0xb0] sm:$0xf]
    %v140 = vld [vmem:[#allocation4 + $0xb4] sm:$0xff]
    %v141 = vld [vmem:[#allocation4 + $0xbc] sm:$0xf]
    %v142 = vld [vmem:[%s2] sm:$0x7]
    %v144 = vperm.slane %v142, 0
    %v145 = vperm.slane %v142, 1
    %v146 = vperm.slane %v142, 2
    %v158 = vunpack.c.l.b16 %v102
    %v159 = vunpack.c.l.b16 %v103
    %v160 = vunpack.c.l.b16 %v104
    %v161 = vunpack.c.l.b16 %v105
    %v162 = vunpack.c.l.b16 %v106
    %v163 = vunpack.c.l.b16 %v107
    %v164 = vunpack.c.l.b16 %v108
    %v165 = vunpack.c.l.b16 %v109
    %v166 = vpack.c.b16 %v159, %v158
    %v167 = vpack.c.b16 %v161, %v160
    %v168 = vpack.c.b16 %v163, %v162
    %v169 = vpack.c.b16 %v165, %v164
    %v206 = vunpack.c.l.b16 %v110
    %v207 = vunpack.c.h.b16 %v110
    %v208 = vunpack.c.l.b16 %v111
    %v209 = vunpack.c.l.b16 %v112
    %v210 = vunpack.c.h.b16 %v112
    %v211 = vunpack.c.l.b16 %v113
    %v212 = vunpack.c.l.b16 %v114
    %v213 = vunpack.c.h.b16 %v114
    %v214 = vunpack.c.l.b16 %v115
    %v215 = vunpack.c.l.b16 %v116
    %v216 = vunpack.c.h.b16 %v116
    %v217 = vunpack.c.l.b16 %v117
    %v218 = vunpack.c.l.b16 %v118
    %v219 = vunpack.c.h.b16 %v118
    %v220 = vunpack.c.l.b16 %v119
    %v221 = vunpack.c.l.b16 %v120
    %v222 = vunpack.c.h.b16 %v120
    %v223 = vunpack.c.l.b16 %v121
    %v224 = vunpack.c.l.b16 %v122
    %v225 = vunpack.c.h.b16 %v122
    %v226 = vunpack.c.l.b16 %v123
    %v227 = vunpack.c.l.b16 %v124
    %v228 = vunpack.c.h.b16 %v124
    %v229 = vunpack.c.l.b16 %v125
    %v230 = vunpack.c.l.b16 %v126
    %v231 = vunpack.c.h.b16 %v126
    %v232 = vunpack.c.l.b16 %v127
    %v233 = vunpack.c.l.b16 %v128
    %v234 = vunpack.c.h.b16 %v128
    %v235 = vunpack.c.l.b16 %v129
    %v236 = vunpack.c.l.b16 %v130
    %v237 = vunpack.c.h.b16 %v130
    %v238 = vunpack.c.l.b16 %v131
    %v239 = vunpack.c.l.b16 %v132
    %v240 = vunpack.c.h.b16 %v132
    %v241 = vunpack.c.l.b16 %v133
    %v242 = vunpack.c.l.b16 %v134
    %v243 = vunpack.c.h.b16 %v134
    %v244 = vunpack.c.l.b16 %v135
    %v245 = vunpack.c.l.b16 %v136
    %v246 = vunpack.c.h.b16 %v136
    %v247 = vunpack.c.l.b16 %v137
    %v248 = vunpack.c.l.b16 %v138
    %v249 = vunpack.c.h.b16 %v138
    %v250 = vunpack.c.l.b16 %v139
    %v251 = vunpack.c.l.b16 %v140
    %v252 = vunpack.c.h.b16 %v140
    %v253 = vunpack.c.l.b16 %v141
    %v254 = vpack.c.b16 %v209, %v206
    %v255 = vpack.c.b16 %v210, %v207
    %v256 = vpack.c.b16 %v211, %v208
    %v257 = vpack.c.b16 %v215, %v212
    %v258 = vpack.c.b16 %v216, %v213
    %v259 = vpack.c.b16 %v217, %v214
    %v260 = vpack.c.b16 %v221, %v218
    %v261 = vpack.c.b16 %v222, %v219
    %v262 = vpack.c.b16 %v223, %v220
    %v263 = vpack.c.b16 %v227, %v224
    %v264 = vpack.c.b16 %v228, %v225
    %v265 = vpack.c.b16 %v229, %v226
    %v266 = vpack.c.b16 %v233, %v230
    %v267 = vpack.c.b16 %v234, %v231
    %v268 = vpack.c.b16 %v235, %v232
    %v269 = vpack.c.b16 %v239, %v236
    %v270 = vpack.c.b16 %v240, %v237
    %v271 = vpack.c.b16 %v241, %v238
    %v272 = vpack.c.b16 %v245, %v242
    %v273 = vpack.c.b16 %v246, %v243
    %v274 = vpack.c.b16 %v247, %v244
    %v275 = vpack.c.b16 %v251, %v248
    %v276 = vpack.c.b16 %v252, %v249
    %v277 = vpack.c.b16 %v253, %v250
    %302 = vmatpush.bf16.msra.mxu0 %v275
    %303 = vmatpush.bf16.msra.mxu0 %v272
    %304 = vmatpush.bf16.msra.mxu0 %v269
    %305 = vmatpush.bf16.msra.mxu0 %v266
    %306 = vmatpush.bf16.msra.mxu0 %v263
    %307 = vmatpush.bf16.msra.mxu0 %v260
    %308 = vmatpush.bf16.msra.mxu0 %v257
    %309 = vmatpush.bf16.msra.mxu0 %v254
    %310 = vmatmul.bf16.gmra.mxu0 %v166
    %v311 = vpop.f32.mrf.mxu0
    %v312 = vadd.f32 %v144, %v311
    %v313 = vpop.f32.mrf.mxu0
    %v314 = vadd.f32 %v144, %v313
    %315 = vmatmul.bf16.gmra.mxu0 %v167
    %v316 = vpop.f32.mrf.mxu0
    %v317 = vadd.f32 %v144, %v316
    %v318 = vpop.f32.mrf.mxu0
    %v319 = vadd.f32 %v144, %v318
    %320 = vmatmul.bf16.gmra.mxu0 %v168
    %v321 = vpop.f32.mrf.mxu0
    %v322 = vadd.f32 %v144, %v321
    %v323 = vpop.f32.mrf.mxu0
    %v324 = vadd.f32 %v144, %v323
    %325 = vmatmul.bf16.gmra.mxu0 %v169
    %v326 = vpop.f32.mrf.mxu0
    %v327 = vadd.f32 %v144, %v326
    %v328 = vpop.f32.mrf.mxu0
    %v329 = vadd.f32 %v144, %v328
    %330 = vdwg.mxu0
    %331 = vmatpush.bf16.msra.mxu0 %v276
    %332 = vmatpush.bf16.msra.mxu0 %v273
    %333 = vmatpush.bf16.msra.mxu0 %v270
    %334 = vmatpush.bf16.msra.mxu0 %v267
    %335 = vmatpush.bf16.msra.mxu0 %v264
    %336 = vmatpush.bf16.msra.mxu0 %v261
    %337 = vmatpush.bf16.msra.mxu0 %v258
    %338 = vmatpush.bf16.msra.mxu0 %v255
    %339 = vmatmul.bf16.gmra.mxu0 %v166
    %v340 = vpop.f32.mrf.mxu0
    %v341 = vadd.f32 %v145, %v340
    %v342 = vpop.f32.mrf.mxu0
    %v343 = vadd.f32 %v145, %v342
    %344 = vmatmul.bf16.gmra.mxu0 %v167
    %v345 = vpop.f32.mrf.mxu0
    %v346 = vadd.f32 %v145, %v345
    %v347 = vpop.f32.mrf.mxu0
    %v348 = vadd.f32 %v145, %v347
    %349 = vmatmul.bf16.gmra.mxu0 %v168
    %v350 = vpop.f32.mrf.mxu0
    %v351 = vadd.f32 %v145, %v350
    %v352 = vpop.f32.mrf.mxu0
    %v353 = vadd.f32 %v145, %v352
    %354 = vmatmul.bf16.gmra.mxu0 %v169
    %v355 = vpop.f32.mrf.mxu0
    %v356 = vadd.f32 %v145, %v355
    %v357 = vpop.f32.mrf.mxu0
    %v358 = vadd.f32 %v145, %v357
    %359 = vdwg.mxu0
    %360 = vmatpush.bf16.msra.mxu0 %v277
    %361 = vmatpush.bf16.msra.mxu0 %v274
    %362 = vmatpush.bf16.msra.mxu0 %v271
    %363 = vmatpush.bf16.msra.mxu0 %v268
    %364 = vmatpush.bf16.msra.mxu0 %v265
    %365 = vmatpush.bf16.msra.mxu0 %v262
    %366 = vmatpush.bf16.msra.mxu0 %v259
    %367 = vmatpush.bf16.msra.mxu0 %v256
    %368 = vmatmul.bf16.gmra.mxu0 %v166
    %v369 = vpop.f32.mrf.mxu0
    %v370 = vadd.f32 %v146, %v369
    %v371 = vpop.f32.mrf.mxu0
    %v372 = vadd.f32 %v146, %v371
    %373 = vmatmul.bf16.gmra.mxu0 %v167
    %v374 = vpop.f32.mrf.mxu0
    %v375 = vadd.f32 %v146, %v374
    %v376 = vpop.f32.mrf.mxu0
    %v377 = vadd.f32 %v146, %v376
    %378 = vmatmul.bf16.gmra.mxu0 %v168
    %v379 = vpop.f32.mrf.mxu0
    %v380 = vadd.f32 %v146, %v379
    %v381 = vpop.f32.mrf.mxu0
    %v382 = vadd.f32 %v146, %v381
    %383 = vmatmul.bf16.gmra.mxu0 %v169
    %v384 = vpop.f32.mrf.mxu0
    %v385 = vadd.f32 %v146, %v384
    %v386 = vpop.f32.mrf.mxu0
    %v387 = vadd.f32 %v146, %v386
    %388 = vdwg.mxu0
    %v389 = vpack.c.bf16 %v341, %v312
    %v390 = vpack.c.bf16 %v370, %v370
    %v391 = vpack.c.bf16 %v343, %v314
    %v392 = vpack.c.bf16 %v372, %v372
    %v393 = vpack.c.bf16 %v346, %v317
    %v394 = vpack.c.bf16 %v375, %v375
    %v395 = vpack.c.bf16 %v348, %v319
    %v396 = vpack.c.bf16 %v377, %v377
    %v397 = vpack.c.bf16 %v351, %v322
    %v398 = vpack.c.bf16 %v380, %v380
    %v399 = vpack.c.bf16 %v353, %v324
    %v400 = vpack.c.bf16 %v382, %v382
    %v401 = vpack.c.bf16 %v356, %v327
    %v402 = vpack.c.bf16 %v385, %v385
    %v403 = vpack.c.bf16 %v358, %v329
    %v404 = vpack.c.bf16 %v387, %v387
    %405 = vst [vmem:[#allocation3] sm:$0xff] %v389
    %406 = vst [vmem:[#allocation3 + $0x8] sm:$0xf] %v390
    %407 = vst [vmem:[#allocation3 + $0xc] sm:$0xff] %v391
    %408 = vst [vmem:[#allocation3 + $0x14] sm:$0xf] %v392
    %409 = vst [vmem:[#allocation3 + $0x18] sm:$0xff] %v393
    %410 = vst [vmem:[#allocation3 + $0x20] sm:$0xf] %v394
    %411 = vst [vmem:[#allocation3 + $0x24] sm:$0xff] %v395
    %412 = vst [vmem:[#allocation3 + $0x2c] sm:$0xf] %v396
    %413 = vst [vmem:[#allocation3 + $0x30] sm:$0xff] %v397
    %414 = vst [vmem:[#allocation3 + $0x38] sm:$0xf] %v398
    %415 = vst [vmem:[#allocation3 + $0x3c] sm:$0xff] %v399
    %416 = vst [vmem:[#allocation3 + $0x44] sm:$0xf] %v400
    %417 = vst [vmem:[#allocation3 + $0x48] sm:$0xff] %v401
    %418 = vst [vmem:[#allocation3 + $0x50] sm:$0xf] %v402
    %419 = vst [vmem:[#allocation3 + $0x54] sm:$0xff] %v403
    %420 = vst [vmem:[#allocation3 + $0x5c] sm:$0xf] %v404
    %v421 = vld [vmem:[#allocation6] sm:$0xff]
    %v422 = vld [vmem:[#allocation6 + $0x8] sm:$0xf]
    %v423 = vld [vmem:[#allocation6 + $0xc] sm:$0xff]
    %v424 = vld [vmem:[#allocation6 + $0x14] sm:$0xf]
    %v425 = vld [vmem:[#allocation6 + $0x18] sm:$0xff]
    %v426 = vld [vmem:[#allocation6 + $0x20] sm:$0xf]
    %v427 = vld [vmem:[#allocation6 + $0x24] sm:$0xff]
    %v428 = vld [vmem:[#allocation6 + $0x2c] sm:$0xf]
    %v429 = vld [vmem:[#allocation6 + $0x30] sm:$0xff]
    %v430 = vld [vmem:[#allocation6 + $0x38] sm:$0xf]
    %v431 = vld [vmem:[#allocation6 + $0x3c] sm:$0xff]
    %v432 = vld [vmem:[#allocation6 + $0x44] sm:$0xf]
    %v433 = vld [vmem:[#allocation6 + $0x48] sm:$0xff]
    %v434 = vld [vmem:[#allocation6 + $0x50] sm:$0xf]
    %v435 = vld [vmem:[#allocation6 + $0x54] sm:$0xff]
    %v436 = vld [vmem:[#allocation6 + $0x5c] sm:$0xf]
    %v437 = vld [vmem:[#allocation6 + $0x60] sm:$0xff]
    %v438 = vld [vmem:[#allocation6 + $0x68] sm:$0xf]
    %v439 = vld [vmem:[#allocation6 + $0x6c] sm:$0xff]
    %v440 = vld [vmem:[#allocation6 + $0x74] sm:$0xf]
    %v441 = vld [vmem:[#allocation6 + $0x78] sm:$0xff]
    %v442 = vld [vmem:[#allocation6 + $0x80] sm:$0xf]
    %v443 = vld [vmem:[#allocation6 + $0x84] sm:$0xff]
    %v444 = vld [vmem:[#allocation6 + $0x8c] sm:$0xf]
    %v445 = vld [vmem:[#allocation6 + $0x90] sm:$0xff]
    %v446 = vld [vmem:[#allocation6 + $0x98] sm:$0xf]
    %v447 = vld [vmem:[#allocation6 + $0x9c] sm:$0xff]
    %v448 = vld [vmem:[#allocation6 + $0xa4] sm:$0xf]
    %v449 = vld [vmem:[#allocation6 + $0xa8] sm:$0xff]
    %v450 = vld [vmem:[#allocation6 + $0xb0] sm:$0xf]
    %v451 = vld [vmem:[#allocation6 + $0xb4] sm:$0xff]
    %v452 = vld [vmem:[#allocation6 + $0xbc] sm:$0xf]
    %v453 = vld [vmem:[%s4] sm:$0x1]
    %v455 = vperm.slane %v453, 0
    %s457 = smul.u32 0, 3
    %s458 = smul.addr %s457, 4
    %s459 = scalar_lea.vmem [#allocation3], %s458
    %v460 = vld [vmem:[%s459] sm:$0xff]
    %v461 = vld [vmem:[%s459 + $0x8] sm:$0xf]
    %v462 = vunpack.c.l.bf16 %v460
    %v463 = vunpack.c.h.bf16 %v460
    %v464 = vunpack.c.l.bf16 %v461
    %v497 = vunpack.c.l.b16 %v421
    %v498 = vunpack.c.h.b16 %v421
    %v499 = vunpack.c.l.b16 %v422
    %v500 = vunpack.c.l.b16 %v423
    %v501 = vunpack.c.h.b16 %v423
    %v502 = vunpack.c.l.b16 %v424
    %v503 = vunpack.c.l.b16 %v425
    %v504 = vunpack.c.h.b16 %v425
    %v505 = vunpack.c.l.b16 %v426
    %v506 = vunpack.c.l.b16 %v427
    %v507 = vunpack.c.h.b16 %v427
    %v508 = vunpack.c.l.b16 %v428
    %v509 = vunpack.c.l.b16 %v429
    %v510 = vunpack.c.h.b16 %v429
    %v511 = vunpack.c.l.b16 %v430
    %v512 = vunpack.c.l.b16 %v431
    %v513 = vunpack.c.h.b16 %v431
    %v514 = vunpack.c.l.b16 %v432
    %v515 = vunpack.c.l.b16 %v433
    %v516 = vunpack.c.h.b16 %v433
    %v517 = vunpack.c.l.b16 %v434
    %v518 = vunpack.c.l.b16 %v435
    %v519 = vunpack.c.h.b16 %v435
    %v520 = vunpack.c.l.b16 %v436
    %v521 = vunpack.c.l.b16 %v437
    %v522 = vunpack.c.h.b16 %v437
    %v523 = vunpack.c.l.b16 %v438
    %v524 = vunpack.c.l.b16 %v439
    %v525 = vunpack.c.h.b16 %v439
    %v526 = vunpack.c.l.b16 %v440
    %v527 = vunpack.c.l.b16 %v441
    %v528 = vunpack.c.h.b16 %v441
    %v529 = vunpack.c.l.b16 %v442
    %v530 = vunpack.c.l.b16 %v443
    %v531 = vunpack.c.h.b16 %v443
    %v532 = vunpack.c.l.b16 %v444
    %v533 = vunpack.c.l.b16 %v445
    %v534 = vunpack.c.h.b16 %v445
    %v535 = vunpack.c.l.b16 %v446
    %v536 = vunpack.c.l.b16 %v447
    %v537 = vunpack.c.h.b16 %v447
    %v538 = vunpack.c.l.b16 %v448
    %v539 = vunpack.c.l.b16 %v449
    %v540 = vunpack.c.h.b16 %v449
    %v541 = vunpack.c.l.b16 %v450
    %v542 = vunpack.c.l.b16 %v451
    %v543 = vunpack.c.h.b16 %v451
    %v544 = vunpack.c.l.b16 %v452
    %v545 = vpack.c.b16 %v500, %v497
    %v546 = vpack.c.b16 %v501, %v498
    %v547 = vpack.c.b16 %v502, %v499
    %v548 = vpack.c.b16 %v506, %v503
    %v549 = vpack.c.b16 %v507, %v504
    %v550 = vpack.c.b16 %v508, %v505
    %v551 = vpack.c.b16 %v512, %v509
    %v552 = vpack.c.b16 %v513, %v510
    %v553 = vpack.c.b16 %v514, %v511
    %v554 = vpack.c.b16 %v518, %v515
    %v555 = vpack.c.b16 %v519, %v516
    %v556 = vpack.c.b16 %v520, %v517
    %v557 = vpack.c.b16 %v524, %v521
    %v558 = vpack.c.b16 %v525, %v522
    %v559 = vpack.c.b16 %v526, %v523
    %v560 = vpack.c.b16 %v530, %v527
    %v561 = vpack.c.b16 %v531, %v528
    %v562 = vpack.c.b16 %v532, %v529
    %v563 = vpack.c.b16 %v536, %v533
    %v564 = vpack.c.b16 %v537, %v534
    %v565 = vpack.c.b16 %v538, %v535
    %v566 = vpack.c.b16 %v542, %v539
    %v567 = vpack.c.b16 %v543, %v540
    %v568 = vpack.c.b16 %v544, %v541
    %593 = vmatpush.bf16.msra.mxu0 %v566
    %594 = vmatpush.bf16.msra.mxu0 %v563
    %595 = vmatpush.bf16.msra.mxu0 %v560
    %596 = vmatpush.bf16.msra.mxu0 %v557
    %597 = vmatpush.bf16.msra.mxu0 %v554
    %598 = vmatpush.bf16.msra.mxu0 %v551
    %599 = vmatpush.bf16.msra.mxu0 %v548
    %600 = vmatpush.bf16.msra.mxu0 %v545
    %601 = vmatmul.bf16.gmra.mxu0 0
    %v602 = vpop.f32.mrf.mxu0
    %v603 = vadd.f32 0.0, %v602
    %v604 = vpop.f32.mrf.mxu0
    %605 = vdwg.mxu0
    %606 = vmatpush.bf16.msra.mxu0 %v567
    %607 = vmatpush.bf16.msra.mxu0 %v564
    %608 = vmatpush.bf16.msra.mxu0 %v561
    %609 = vmatpush.bf16.msra.mxu0 %v558
    %610 = vmatpush.bf16.msra.mxu0 %v555
    %611 = vmatpush.bf16.msra.mxu0 %v552
    %612 = vmatpush.bf16.msra.mxu0 %v549
    %613 = vmatpush.bf16.msra.mxu0 %v546
    %614 = vmatmul.bf16.gmra.mxu0 0
    %v615 = vpop.f32.mrf.mxu0
    %v616 = vadd.f32 0.0, %v615
    %v617 = vpop.f32.mrf.mxu0
    %618 = vdwg.mxu0
    %619 = vmatpush.bf16.msra.mxu0 %v568
    %620 = vmatpush.bf16.msra.mxu0 %v565
    %621 = vmatpush.bf16.msra.mxu0 %v562
    %622 = vmatpush.bf16.msra.mxu0 %v559
    %623 = vmatpush.bf16.msra.mxu0 %v556
    %624 = vmatpush.bf16.msra.mxu0 %v553
    %625 = vmatpush.bf16.msra.mxu0 %v550
    %626 = vmatpush.bf16.msra.mxu0 %v547
    %627 = vmatmul.bf16.gmra.mxu0 0
    %v628 = vpop.f32.mrf.mxu0
    %v629 = vadd.f32 0.0, %v628
    %v630 = vpop.f32.mrf.mxu0
    %631 = vdwg.mxu0
    %v632 = vadd.f32 %v462, %v603
    %v633 = vxor.u32 %v632, 2147483648
    %v634 = vmul.f32 %v633, 1.442695
    %v635 = vpow.pop %v634
    %v636 = vadd.f32 %v635, 1.0
    %v637 = vrcp.pop %v636
    %v638 = vmul.f32 %v636, %v637
    %v639 = vsub.f32 1.0, %v638
    %v640 = vmul.f32 %v637, %v639
    %v641 = vadd.f32 %v637, %v640
    %vm642 = vweird.f32 %v636
    %vm643 = vweird.f32 %v637
    %vm644 = vmor %vm642, %vm643
    %v645 = vsel %vm644, %v637, %v641
    %v646 = vand.u32 2147483647, %v636
    %vm647 = vcmp.eq.f32.partialorder %v646, 8.507059e+37
    %v648 = vand.u32 %v636, 2147483648
    %v649 = vor.u32 1.1754944e-38, %v648
    %v650 = vsel %vm647, %v649, %v645
    %v651 = vmul.f32 1.0, %v650
    %v652 = vadd.f32 %v463, %v616
    %v653 = vxor.u32 %v652, 2147483648
    %v654 = vmul.f32 %v653, 1.442695
    %v655 = vpow.pop %v654
    %v656 = vadd.f32 %v655, 1.0
    %v657 = vrcp.pop %v656
    %v658 = vmul.f32 %v656, %v657
    %v659 = vsub.f32 1.0, %v658
    %v660 = vmul.f32 %v657, %v659
    %v661 = vadd.f32 %v657, %v660
    %vm662 = vweird.f32 %v656
    %vm663 = vweird.f32 %v657
    %vm664 = vmor %vm662, %vm663
    %v665 = vsel %vm664, %v657, %v661
    %v666 = vand.u32 2147483647, %v656
    %vm667 = vcmp.eq.f32.partialorder %v666, 8.507059e+37
    %v668 = vand.u32 %v656, 2147483648
    %v669 = vor.u32 1.1754944e-38, %v668
    %v670 = vsel %vm667, %v669, %v665
    %v671 = vmul.f32 1.0, %v670
    %v672 = vadd.f32 %v629, %v455
    %v673 = vmul.f32 %v651, %v672
    %v674 = vadd.f32 %v464, %v673
    %v675 = vtanh.pop %v674
    %v676 = vsub.f32 1.0, %v671
    %v677 = vmul.f32 %v676, %v675
    %v678 = vmul.f32 %v671, 0.0
    %v679 = vadd.f32 %v677, %v678
    %v680 = vpack.c.bf16 %v679, %v679
    %681 = vst [vmem:[#allocation2] sm:$0xf] %v680
    %s682 = smul.u32 1, 3
    %s683 = smul.addr %s682, 4
    %s684 = scalar_lea.vmem [#allocation3], %s683
    %v685 = vld [vmem:[%s684] sm:$0xff]
    %v686 = vld [vmem:[%s684 + $0x8] sm:$0xf]
    %v687 = vunpack.c.l.bf16 %v685
    %v688 = vunpack.c.h.bf16 %v685
    %v689 = vunpack.c.l.bf16 %v686
    %690 = vmatpush.bf16.msra.mxu0 %v566
    %691 = vmatpush.bf16.msra.mxu0 %v563
    %692 = vmatpush.bf16.msra.mxu0 %v560
    %693 = vmatpush.bf16.msra.mxu0 %v557
    %694 = vmatpush.bf16.msra.mxu0 %v554
    %695 = vmatpush.bf16.msra.mxu0 %v551
    %696 = vmatpush.bf16.msra.mxu0 %v548
    %697 = vmatpush.bf16.msra.mxu0 %v545
    %698 = vmatmul.bf16.gmra.mxu0 %v680
    %v699 = vpop.f32.mrf.mxu0
    %v700 = vadd.f32 0.0, %v699
    %v701 = vpop.f32.mrf.mxu0
    %702 = vdwg.mxu0
    %703 = vmatpush.bf16.msra.mxu0 %v567
    %704 = vmatpush.bf16.msra.mxu0 %v564
    %705 = vmatpush.bf16.msra.mxu0 %v561
    %706 = vmatpush.bf16.msra.mxu0 %v558
    %707 = vmatpush.bf16.msra.mxu0 %v555
    %708 = vmatpush.bf16.msra.mxu0 %v552
    %709 = vmatpush.bf16.msra.mxu0 %v549
    %710 = vmatpush.bf16.msra.mxu0 %v546
    %711 = vmatmul.bf16.gmra.mxu0 %v680
    %v712 = vpop.f32.mrf.mxu0
    %v713 = vadd.f32 0.0, %v712
    %v714 = vpop.f32.mrf.mxu0
    %715 = vdwg.mxu0
    %716 = vmatpush.bf16.msra.mxu0 %v568
    %717 = vmatpush.bf16.msra.mxu0 %v565
    %718 = vmatpush.bf16.msra.mxu0 %v562
    %719 = vmatpush.bf16.msra.mxu0 %v559
    %720 = vmatpush.bf16.msra.mxu0 %v556
    %721 = vmatpush.bf16.msra.mxu0 %v553
    %722 = vmatpush.bf16.msra.mxu0 %v550
    %723 = vmatpush.bf16.msra.mxu0 %v547
    %724 = vmatmul.bf16.gmra.mxu0 %v680
    %v725 = vpop.f32.mrf.mxu0
    %v726 = vadd.f32 0.0, %v725
    %v727 = vpop.f32.mrf.mxu0
    %728 = vdwg.mxu0
    %v729 = vadd.f32 %v687, %v700
    %v730 = vxor.u32 %v729, 2147483648
    %v731 = vmul.f32 %v730, 1.442695
    %v732 = vpow.pop %v731
    %v733 = vadd.f32 %v732, 1.0
    %v734 = vrcp.pop %v733
    %v735 = vmul.f32 %v733, %v734
    %v736 = vsub.f32 1.0, %v735
    %v737 = vmul.f32 %v734, %v736
    %v738 = vadd.f32 %v734, %v737
    %vm739 = vweird.f32 %v733
    %vm740 = vweird.f32 %v734
    %vm741 = vmor %vm739, %vm740
    %v742 = vsel %vm741, %v734, %v738
    %v743 = vand.u32 2147483647, %v733
    %vm744 = vcmp.eq.f32.partialorder %v743, 8.507059e+37
    %v745 = vand.u32 %v733, 2147483648
    %v746 = vor.u32 1.1754944e-38, %v745
    %v747 = vsel %vm744, %v746, %v742
    %v748 = vmul.f32 1.0, %v747
    %v749 = vadd.f32 %v688, %v713
    %v750 = vxor.u32 %v749, 2147483648
    %v751 = vmul.f32 %v750, 1.442695
    %v752 = vpow.pop %v751
    %v753 = vadd.f32 %v752, 1.0
    %v754 = vrcp.pop %v753
    %v755 = vmul.f32 %v753, %v754
    %v756 = vsub.f32 1.0, %v755
    %v757 = vmul.f32 %v754, %v756
    %v758 = vadd.f32 %v754, %v757
    %vm759 = vweird.f32 %v753
    %vm760 = vweird.f32 %v754
    %vm761 = vmor %vm759, %vm760
    %v762 = vsel %vm761, %v754, %v758
    %v763 = vand.u32 2147483647, %v753
    %vm764 = vcmp.eq.f32.partialorder %v763, 8.507059e+37
    %v765 = vand.u32 %v753, 2147483648
    %v766 = vor.u32 1.1754944e-38, %v765
    %v767 = vsel %vm764, %v766, %v762
    %v768 = vmul.f32 1.0, %v767
    %v769 = vadd.f32 %v726, %v455
    %v770 = vmul.f32 %v748, %v769
    %v771 = vadd.f32 %v689, %v770
    %v772 = vtanh.pop %v771
    %v773 = vsub.f32 1.0, %v768
    %v774 = vmul.f32 %v773, %v772
    %v775 = vmul.f32 %v768, %v679
    %v776 = vadd.f32 %v774, %v775
    %v777 = vpack.c.bf16 %v776, %v776
    %s778 = scalar_lea.vmem [#allocation2], 4
    %779 = vst [vmem:[%s778] sm:$0xf] %v777
    %s780 = smul.u32 2, 3
    %s781 = smul.addr %s780, 4
    %s782 = scalar_lea.vmem [#allocation3], %s781
    %v783 = vld [vmem:[%s782] sm:$0xff]
    %v784 = vld [vmem:[%s782 + $0x8] sm:$0xf]
    %v785 = vunpack.c.l.bf16 %v783
    %v786 = vunpack.c.h.bf16 %v783
    %v787 = vunpack.c.l.bf16 %v784
    %788 = vmatpush.bf16.msra.mxu0 %v566
    %789 = vmatpush.bf16.msra.mxu0 %v563
    %790 = vmatpush.bf16.msra.mxu0 %v560
    %791 = vmatpush.bf16.msra.mxu0 %v557
    %792 = vmatpush.bf16.msra.mxu0 %v554
    %793 = vmatpush.bf16.msra.mxu0 %v551
    %794 = vmatpush.bf16.msra.mxu0 %v548
    %795 = vmatpush.bf16.msra.mxu0 %v545
    %796 = vmatmul.bf16.gmra.mxu0 %v777
    %v797 = vpop.f32.mrf.mxu0
    %v798 = vadd.f32 0.0, %v797
    %v799 = vpop.f32.mrf.mxu0
    %800 = vdwg.mxu0
    %801 = vmatpush.bf16.msra.mxu0 %v567
    %802 = vmatpush.bf16.msra.mxu0 %v564
    %803 = vmatpush.bf16.msra.mxu0 %v561
    %804 = vmatpush.bf16.msra.mxu0 %v558
    %805 = vmatpush.bf16.msra.mxu0 %v555
    %806 = vmatpush.bf16.msra.mxu0 %v552
    %807 = vmatpush.bf16.msra.mxu0 %v549
    %808 = vmatpush.bf16.msra.mxu0 %v546
    %809 = vmatmul.bf16.gmra.mxu0 %v777
    %v810 = vpop.f32.mrf.mxu0
    %v811 = vadd.f32 0.0, %v810
    %v812 = vpop.f32.mrf.mxu0
    %813 = vdwg.mxu0
    %814 = vmatpush.bf16.msra.mxu0 %v568
    %815 = vmatpush.bf16.msra.mxu0 %v565
    %816 = vmatpush.bf16.msra.mxu0 %v562
    %817 = vmatpush.bf16.msra.mxu0 %v559
    %818 = vmatpush.bf16.msra.mxu0 %v556
    %819 = vmatpush.bf16.msra.mxu0 %v553
    %820 = vmatpush.bf16.msra.mxu0 %v550
    %821 = vmatpush.bf16.msra.mxu0 %v547
    %822 = vmatmul.bf16.gmra.mxu0 %v777
    %v823 = vpop.f32.mrf.mxu0
    %v824 = vadd.f32 0.0, %v823
    %v825 = vpop.f32.mrf.mxu0
    %826 = vdwg.mxu0
    %v827 = vadd.f32 %v785, %v798
    %v828 = vxor.u32 %v827, 2147483648
    %v829 = vmul.f32 %v828, 1.442695
    %v830 = vpow.pop %v829
    %v831 = vadd.f32 %v830, 1.0
    %v832 = vrcp.pop %v831
    %v833 = vmul.f32 %v831, %v832
    %v834 = vsub.f32 1.0, %v833
    %v835 = vmul.f32 %v832, %v834
    %v836 = vadd.f32 %v832, %v835
    %vm837 = vweird.f32 %v831
    %vm838 = vweird.f32 %v832
    %vm839 = vmor %vm837, %vm838
    %v840 = vsel %vm839, %v832, %v836
    %v841 = vand.u32 2147483647, %v831
    %vm842 = vcmp.eq.f32.partialorder %v841, 8.507059e+37
    %v843 = vand.u32 %v831, 2147483648
    %v844 = vor.u32 1.1754944e-38, %v843
    %v845 = vsel %vm842, %v844, %v840
    %v846 = vmul.f32 1.0, %v845
    %v847 = vadd.f32 %v786, %v811
    %v848 = vxor.u32 %v847, 2147483648
    %v849 = vmul.f32 %v848, 1.442695
    %v850 = vpow.pop %v849
    %v851 = vadd.f32 %v850, 1.0
    %v852 = vrcp.pop %v851
    %v853 = vmul.f32 %v851, %v852
    %v854 = vsub.f32 1.0, %v853
    %v855 = vmul.f32 %v852, %v854
    %v856 = vadd.f32 %v852, %v855
    %vm857 = vweird.f32 %v851
    %vm858 = vweird.f32 %v852
    %vm859 = vmor %vm857, %vm858
    %v860 = vsel %vm859, %v852, %v856
    %v861 = vand.u32 2147483647, %v851
    %vm862 = vcmp.eq.f32.partialorder %v861, 8.507059e+37
    %v863 = vand.u32 %v851, 2147483648
    %v864 = vor.u32 1.1754944e-38, %v863
    %v865 = vsel %vm862, %v864, %v860
    %v866 = vmul.f32 1.0, %v865
    %v867 = vadd.f32 %v824, %v455
    %v868 = vmul.f32 %v846, %v867
    %v869 = vadd.f32 %v787, %v868
    %v870 = vtanh.pop %v869
    %v871 = vsub.f32 1.0, %v866
    %v872 = vmul.f32 %v871, %v870
    %v873 = vmul.f32 %v866, %v776
    %v874 = vadd.f32 %v872, %v873
    %v875 = vpack.c.bf16 %v874, %v874
    %s876 = scalar_lea.vmem [#allocation2], 8
    %877 = vst [vmem:[%s876] sm:$0xf] %v875
    %s878 = smul.u32 3, 3
    %s879 = smul.addr %s878, 4
    %s880 = scalar_lea.vmem [#allocation3], %s879
    %v881 = vld [vmem:[%s880] sm:$0xff]
    %v882 = vld [vmem:[%s880 + $0x8] sm:$0xf]
    %v883 = vunpack.c.l.bf16 %v881
    %v884 = vunpack.c.h.bf16 %v881
    %v885 = vunpack.c.l.bf16 %v882
    %886 = vmatpush.bf16.msra.mxu0 %v566
    %887 = vmatpush.bf16.msra.mxu0 %v563
    %888 = vmatpush.bf16.msra.mxu0 %v560
    %889 = vmatpush.bf16.msra.mxu0 %v557
    %890 = vmatpush.bf16.msra.mxu0 %v554
    %891 = vmatpush.bf16.msra.mxu0 %v551
    %892 = vmatpush.bf16.msra.mxu0 %v548
    %893 = vmatpush.bf16.msra.mxu0 %v545
    %894 = vmatmul.bf16.gmra.mxu0 %v875
    %v895 = vpop.f32.mrf.mxu0
    %v896 = vadd.f32 0.0, %v895
    %v897 = vpop.f32.mrf.mxu0
    %898 = vdwg.mxu0
    %899 = vmatpush.bf16.msra.mxu0 %v567
    %900 = vmatpush.bf16.msra.mxu0 %v564
    %901 = vmatpush.bf16.msra.mxu0 %v561
    %902 = vmatpush.bf16.msra.mxu0 %v558
    %903 = vmatpush.bf16.msra.mxu0 %v555
    %904 = vmatpush.bf16.msra.mxu0 %v552
    %905 = vmatpush.bf16.msra.mxu0 %v549
    %906 = vmatpush.bf16.msra.mxu0 %v546
    %907 = vmatmul.bf16.gmra.mxu0 %v875
    %v908 = vpop.f32.mrf.mxu0
    %v909 = vadd.f32 0.0, %v908
    %v910 = vpop.f32.mrf.mxu0
    %911 = vdwg.mxu0
    %912 = vmatpush.bf16.msra.mxu0 %v568
    %913 = vmatpush.bf16.msra.mxu0 %v565
    %914 = vmatpush.bf16.msra.mxu0 %v562
    %915 = vmatpush.bf16.msra.mxu0 %v559
    %916 = vmatpush.bf16.msra.mxu0 %v556
    %917 = vmatpush.bf16.msra.mxu0 %v553
    %918 = vmatpush.bf16.msra.mxu0 %v550
    %919 = vmatpush.bf16.msra.mxu0 %v547
    %920 = vmatmul.bf16.gmra.mxu0 %v875
    %v921 = vpop.f32.mrf.mxu0
    %v922 = vadd.f32 0.0, %v921
    %v923 = vpop.f32.mrf.mxu0
    %924 = vdwg.mxu0
    %v925 = vadd.f32 %v883, %v896
    %v926 = vxor.u32 %v925, 2147483648
    %v927 = vmul.f32 %v926, 1.442695
    %v928 = vpow.pop %v927
    %v929 = vadd.f32 %v928, 1.0
    %v930 = vrcp.pop %v929
    %v931 = vmul.f32 %v929, %v930
    %v932 = vsub.f32 1.0, %v931
    %v933 = vmul.f32 %v930, %v932
    %v934 = vadd.f32 %v930, %v933
    %vm935 = vweird.f32 %v929
    %vm936 = vweird.f32 %v930
    %vm937 = vmor %vm935, %vm936
    %v938 = vsel %vm937, %v930, %v934
    %v939 = vand.u32 2147483647, %v929
    %vm940 = vcmp.eq.f32.partialorder %v939, 8.507059e+37
    %v941 = vand.u32 %v929, 2147483648
    %v942 = vor.u32 1.1754944e-38, %v941
    %v943 = vsel %vm940, %v942, %v938
    %v944 = vmul.f32 1.0, %v943
    %v945 = vadd.f32 %v884, %v909
    %v946 = vxor.u32 %v945, 2147483648
    %v947 = vmul.f32 %v946, 1.442695
    %v948 = vpow.pop %v947
    %v949 = vadd.f32 %v948, 1.0
    %v950 = vrcp.pop %v949
    %v951 = vmul.f32 %v949, %v950
    %v952 = vsub.f32 1.0, %v951
    %v953 = vmul.f32 %v950, %v952
    %v954 = vadd.f32 %v950, %v953
    %vm955 = vweird.f32 %v949
    %vm956 = vweird.f32 %v950
    %vm957 = vmor %vm955, %vm956
    %v958 = vsel %vm957, %v950, %v954
    %v959 = vand.u32 2147483647, %v949
    %vm960 = vcmp.eq.f32.partialorder %v959, 8.507059e+37
    %v961 = vand.u32 %v949, 2147483648
    %v962 = vor.u32 1.1754944e-38, %v961
    %v963 = vsel %vm960, %v962, %v958
    %v964 = vmul.f32 1.0, %v963
    %v965 = vadd.f32 %v922, %v455
    %v966 = vmul.f32 %v944, %v965
    %v967 = vadd.f32 %v885, %v966
    %v968 = vtanh.pop %v967
    %v969 = vsub.f32 1.0, %v964
    %v970 = vmul.f32 %v969, %v968
    %v971 = vmul.f32 %v964, %v874
    %v972 = vadd.f32 %v970, %v971
    %v973 = vpack.c.bf16 %v972, %v972
    %s974 = scalar_lea.vmem [#allocation2], 12
    %975 = vst [vmem:[%s974] sm:$0xf] %v973
    %s976 = smul.u32 4, 3
    %s977 = smul.addr %s976, 4
    %s978 = scalar_lea.vmem [#allocation3], %s977
    %v979 = vld [vmem:[%s978] sm:$0xff]
    %v980 = vld [vmem:[%s978 + $0x8] sm:$0xf]
    %v981 = vunpack.c.l.bf16 %v979
    %v982 = vunpack.c.h.bf16 %v979
    %v983 = vunpack.c.l.bf16 %v980
    %984 = vmatpush.bf16.msra.mxu0 %v566
    %985 = vmatpush.bf16.msra.mxu0 %v563
    %986 = vmatpush.bf16.msra.mxu0 %v560
    %987 = vmatpush.bf16.msra.mxu0 %v557
    %988 = vmatpush.bf16.msra.mxu0 %v554
    %989 = vmatpush.bf16.msra.mxu0 %v551
    %990 = vmatpush.bf16.msra.mxu0 %v548
    %991 = vmatpush.bf16.msra.mxu0 %v545
    %992 = vmatmul.bf16.gmra.mxu0 %v973
    %v993 = vpop.f32.mrf.mxu0
    %v994 = vadd.f32 0.0, %v993
    %v995 = vpop.f32.mrf.mxu0
    %996 = vdwg.mxu0
    %997 = vmatpush.bf16.msra.mxu0 %v567
    %998 = vmatpush.bf16.msra.mxu0 %v564
    %999 = vmatpush.bf16.msra.mxu0 %v561
    %1000 = vmatpush.bf16.msra.mxu0 %v558
    %1001 = vmatpush.bf16.msra.mxu0 %v555
    %1002 = vmatpush.bf16.msra.mxu0 %v552
    %1003 = vmatpush.bf16.msra.mxu0 %v549
    %1004 = vmatpush.bf16.msra.mxu0 %v546
    %1005 = vmatmul.bf16.gmra.mxu0 %v973
    %v1006 = vpop.f32.mrf.mxu0
    %v1007 = vadd.f32 0.0, %v1006
    %v1008 = vpop.f32.mrf.mxu0
    %1009 = vdwg.mxu0
    %1010 = vmatpush.bf16.msra.mxu0 %v568
    %1011 = vmatpush.bf16.msra.mxu0 %v565
    %1012 = vmatpush.bf16.msra.mxu0 %v562
    %1013 = vmatpush.bf16.msra.mxu0 %v559
    %1014 = vmatpush.bf16.msra.mxu0 %v556
    %1015 = vmatpush.bf16.msra.mxu0 %v553
    %1016 = vmatpush.bf16.msra.mxu0 %v550
    %1017 = vmatpush.bf16.msra.mxu0 %v547
    %1018 = vmatmul.bf16.gmra.mxu0 %v973
    %v1019 = vpop.f32.mrf.mxu0
    %v1020 = vadd.f32 0.0, %v1019
    %v1021 = vpop.f32.mrf.mxu0
    %1022 = vdwg.mxu0
    %v1023 = vadd.f32 %v981, %v994
    %v1024 = vxor.u32 %v1023, 2147483648
    %v1025 = vmul.f32 %v1024, 1.442695
    %v1026 = vpow.pop %v1025
    %v1027 = vadd.f32 %v1026, 1.0
    %v1028 = vrcp.pop %v1027
    %v1029 = vmul.f32 %v1027, %v1028
    %v1030 = vsub.f32 1.0, %v1029
    %v1031 = vmul.f32 %v1028, %v1030
    %v1032 = vadd.f32 %v1028, %v1031
    %vm1033 = vweird.f32 %v1027
    %vm1034 = vweird.f32 %v1028
    %vm1035 = vmor %vm1033, %vm1034
    %v1036 = vsel %vm1035, %v1028, %v1032
    %v1037 = vand.u32 2147483647, %v1027
    %vm1038 = vcmp.eq.f32.partialorder %v1037, 8.507059e+37
    %v1039 = vand.u32 %v1027, 2147483648
    %v1040 = vor.u32 1.1754944e-38, %v1039
    %v1041 = vsel %vm1038, %v1040, %v1036
    %v1042 = vmul.f32 1.0, %v1041
    %v1043 = vadd.f32 %v982, %v1007
    %v1044 = vxor.u32 %v1043, 2147483648
    %v1045 = vmul.f32 %v1044, 1.442695
    %v1046 = vpow.pop %v1045
    %v1047 = vadd.f32 %v1046, 1.0
    %v1048 = vrcp.pop %v1047
    %v1049 = vmul.f32 %v1047, %v1048
    %v1050 = vsub.f32 1.0, %v1049
    %v1051 = vmul.f32 %v1048, %v1050
    %v1052 = vadd.f32 %v1048, %v1051
    %vm1053 = vweird.f32 %v1047
    %vm1054 = vweird.f32 %v1048
    %vm1055 = vmor %vm1053, %vm1054
    %v1056 = vsel %vm1055, %v1048, %v1052
    %v1057 = vand.u32 2147483647, %v1047
    %vm1058 = vcmp.eq.f32.partialorder %v1057, 8.507059e+37
    %v1059 = vand.u32 %v1047, 2147483648
    %v1060 = vor.u32 1.1754944e-38, %v1059
    %v1061 = vsel %vm1058, %v1060, %v1056
    %v1062 = vmul.f32 1.0, %v1061
    %v1063 = vadd.f32 %v1020, %v455
    %v1064 = vmul.f32 %v1042, %v1063
    %v1065 = vadd.f32 %v983, %v1064
    %v1066 = vtanh.pop %v1065
    %v1067 = vsub.f32 1.0, %v1062
    %v1068 = vmul.f32 %v1067, %v1066
    %v1069 = vmul.f32 %v1062, %v972
    %v1070 = vadd.f32 %v1068, %v1069
    %v1071 = vpack.c.bf16 %v1070, %v1070
    %s1072 = scalar_lea.vmem [#allocation2], 16
    %1073 = vst [vmem:[%s1072] sm:$0xf] %v1071
    %s1074 = smul.u32 5, 3
    %s1075 = smul.addr %s1074, 4
    %s1076 = scalar_lea.vmem [#allocation3], %s1075
    %v1077 = vld [vmem:[%s1076] sm:$0xff]
    %v1078 = vld [vmem:[%s1076 + $0x8] sm:$0xf]
    %v1079 = vunpack.c.l.bf16 %v1077
    %v1080 = vunpack.c.h.bf16 %v1077
    %v1081 = vunpack.c.l.bf16 %v1078
    %1082 = vmatpush.bf16.msra.mxu0 %v566
    %1083 = vmatpush.bf16.msra.mxu0 %v563
    %1084 = vmatpush.bf16.msra.mxu0 %v560
    %1085 = vmatpush.bf16.msra.mxu0 %v557
    %1086 = vmatpush.bf16.msra.mxu0 %v554
    %1087 = vmatpush.bf16.msra.mxu0 %v551
    %1088 = vmatpush.bf16.msra.mxu0 %v548
    %1089 = vmatpush.bf16.msra.mxu0 %v545
    %1090 = vmatmul.bf16.gmra.mxu0 %v1071
    %v1091 = vpop.f32.mrf.mxu0
    %v1092 = vadd.f32 0.0, %v1091
    %v1093 = vpop.f32.mrf.mxu0
    %1094 = vdwg.mxu0
    %1095 = vmatpush.bf16.msra.mxu0 %v567
    %1096 = vmatpush.bf16.msra.mxu0 %v564
    %1097 = vmatpush.bf16.msra.mxu0 %v561
    %1098 = vmatpush.bf16.msra.mxu0 %v558
    %1099 = vmatpush.bf16.msra.mxu0 %v555
    %1100 = vmatpush.bf16.msra.mxu0 %v552
    %1101 = vmatpush.bf16.msra.mxu0 %v549
    %1102 = vmatpush.bf16.msra.mxu0 %v546
    %1103 = vmatmul.bf16.gmra.mxu0 %v1071
    %v1104 = vpop.f32.mrf.mxu0
    %v1105 = vadd.f32 0.0, %v1104
    %v1106 = vpop.f32.mrf.mxu0
    %1107 = vdwg.mxu0
    %1108 = vmatpush.bf16.msra.mxu0 %v568
    %1109 = vmatpush.bf16.msra.mxu0 %v565
    %1110 = vmatpush.bf16.msra.mxu0 %v562
    %1111 = vmatpush.bf16.msra.mxu0 %v559
    %1112 = vmatpush.bf16.msra.mxu0 %v556
    %1113 = vmatpush.bf16.msra.mxu0 %v553
    %1114 = vmatpush.bf16.msra.mxu0 %v550
    %1115 = vmatpush.bf16.msra.mxu0 %v547
    %1116 = vmatmul.bf16.gmra.mxu0 %v1071
    %v1117 = vpop.f32.mrf.mxu0
    %v1118 = vadd.f32 0.0, %v1117
    %v1119 = vpop.f32.mrf.mxu0
    %1120 = vdwg.mxu0
    %v1121 = vadd.f32 %v1079, %v1092
    %v1122 = vxor.u32 %v1121, 2147483648
    %v1123 = vmul.f32 %v1122, 1.442695
    %v1124 = vpow.pop %v1123
    %v1125 = vadd.f32 %v1124, 1.0
    %v1126 = vrcp.pop %v1125
    %v1127 = vmul.f32 %v1125, %v1126
    %v1128 = vsub.f32 1.0, %v1127
    %v1129 = vmul.f32 %v1126, %v1128
    %v1130 = vadd.f32 %v1126, %v1129
    %vm1131 = vweird.f32 %v1125
    %vm1132 = vweird.f32 %v1126
    %vm1133 = vmor %vm1131, %vm1132
    %v1134 = vsel %vm1133, %v1126, %v1130
    %v1135 = vand.u32 2147483647, %v1125
    %vm1136 = vcmp.eq.f32.partialorder %v1135, 8.507059e+37
    %v1137 = vand.u32 %v1125, 2147483648
    %v1138 = vor.u32 1.1754944e-38, %v1137
    %v1139 = vsel %vm1136, %v1138, %v1134
    %v1140 = vmul.f32 1.0, %v1139
    %v1141 = vadd.f32 %v1080, %v1105
    %v1142 = vxor.u32 %v1141, 2147483648
    %v1143 = vmul.f32 %v1142, 1.442695
    %v1144 = vpow.pop %v1143
    %v1145 = vadd.f32 %v1144, 1.0
    %v1146 = vrcp.pop %v1145
    %v1147 = vmul.f32 %v1145, %v1146
    %v1148 = vsub.f32 1.0, %v1147
    %v1149 = vmul.f32 %v1146, %v1148
    %v1150 = vadd.f32 %v1146, %v1149
    %vm1151 = vweird.f32 %v1145
    %vm1152 = vweird.f32 %v1146
    %vm1153 = vmor %vm1151, %vm1152
    %v1154 = vsel %vm1153, %v1146, %v1150
    %v1155 = vand.u32 2147483647, %v1145
    %vm1156 = vcmp.eq.f32.partialorder %v1155, 8.507059e+37
    %v1157 = vand.u32 %v1145, 2147483648
    %v1158 = vor.u32 1.1754944e-38, %v1157
    %v1159 = vsel %vm1156, %v1158, %v1154
    %v1160 = vmul.f32 1.0, %v1159
    %v1161 = vadd.f32 %v1118, %v455
    %v1162 = vmul.f32 %v1140, %v1161
    %v1163 = vadd.f32 %v1081, %v1162
    %v1164 = vtanh.pop %v1163
    %v1165 = vsub.f32 1.0, %v1160
    %v1166 = vmul.f32 %v1165, %v1164
    %v1167 = vmul.f32 %v1160, %v1070
    %v1168 = vadd.f32 %v1166, %v1167
    %v1169 = vpack.c.bf16 %v1168, %v1168
    %s1170 = scalar_lea.vmem [#allocation2], 20
    %1171 = vst [vmem:[%s1170] sm:$0xf] %v1169
    %s1172 = smul.u32 6, 3
    %s1173 = smul.addr %s1172, 4
    %s1174 = scalar_lea.vmem [#allocation3], %s1173
    %v1175 = vld [vmem:[%s1174] sm:$0xff]
    %v1176 = vld [vmem:[%s1174 + $0x8] sm:$0xf]
    %v1177 = vunpack.c.l.bf16 %v1175
    %v1178 = vunpack.c.h.bf16 %v1175
    %v1179 = vunpack.c.l.bf16 %v1176
    %1180 = vmatpush.bf16.msra.mxu0 %v566
    %1181 = vmatpush.bf16.msra.mxu0 %v563
    %1182 = vmatpush.bf16.msra.mxu0 %v560
    %1183 = vmatpush.bf16.msra.mxu0 %v557
    %1184 = vmatpush.bf16.msra.mxu0 %v554
    %1185 = vmatpush.bf16.msra.mxu0 %v551
    %1186 = vmatpush.bf16.msra.mxu0 %v548
    %1187 = vmatpush.bf16.msra.mxu0 %v545
    %1188 = vmatmul.bf16.gmra.mxu0 %v1169
    %v1189 = vpop.f32.mrf.mxu0
    %v1190 = vadd.f32 0.0, %v1189
    %v1191 = vpop.f32.mrf.mxu0
    %1192 = vdwg.mxu0
    %1193 = vmatpush.bf16.msra.mxu0 %v567
    %1194 = vmatpush.bf16.msra.mxu0 %v564
    %1195 = vmatpush.bf16.msra.mxu0 %v561
    %1196 = vmatpush.bf16.msra.mxu0 %v558
    %1197 = vmatpush.bf16.msra.mxu0 %v555
    %1198 = vmatpush.bf16.msra.mxu0 %v552
    %1199 = vmatpush.bf16.msra.mxu0 %v549
    %1200 = vmatpush.bf16.msra.mxu0 %v546
    %1201 = vmatmul.bf16.gmra.mxu0 %v1169
    %v1202 = vpop.f32.mrf.mxu0
    %v1203 = vadd.f32 0.0, %v1202
    %v1204 = vpop.f32.mrf.mxu0
    %1205 = vdwg.mxu0
    %1206 = vmatpush.bf16.msra.mxu0 %v568
    %1207 = vmatpush.bf16.msra.mxu0 %v565
    %1208 = vmatpush.bf16.msra.mxu0 %v562
    %1209 = vmatpush.bf16.msra.mxu0 %v559
    %1210 = vmatpush.bf16.msra.mxu0 %v556
    %1211 = vmatpush.bf16.msra.mxu0 %v553
    %1212 = vmatpush.bf16.msra.mxu0 %v550
    %1213 = vmatpush.bf16.msra.mxu0 %v547
    %1214 = vmatmul.bf16.gmra.mxu0 %v1169
    %v1215 = vpop.f32.mrf.mxu0
    %v1216 = vadd.f32 0.0, %v1215
    %v1217 = vpop.f32.mrf.mxu0
    %1218 = vdwg.mxu0
    %v1219 = vadd.f32 %v1177, %v1190
    %v1220 = vxor.u32 %v1219, 2147483648
    %v1221 = vmul.f32 %v1220, 1.442695
    %v1222 = vpow.pop %v1221
    %v1223 = vadd.f32 %v1222, 1.0
    %v1224 = vrcp.pop %v1223
    %v1225 = vmul.f32 %v1223, %v1224
    %v1226 = vsub.f32 1.0, %v1225
    %v1227 = vmul.f32 %v1224, %v1226
    %v1228 = vadd.f32 %v1224, %v1227
    %vm1229 = vweird.f32 %v1223
    %vm1230 = vweird.f32 %v1224
    %vm1231 = vmor %vm1229, %vm1230
    %v1232 = vsel %vm1231, %v1224, %v1228
    %v1233 = vand.u32 2147483647, %v1223
    %vm1234 = vcmp.eq.f32.partialorder %v1233, 8.507059e+37
    %v1235 = vand.u32 %v1223, 2147483648
    %v1236 = vor.u32 1.1754944e-38, %v1235
    %v1237 = vsel %vm1234, %v1236, %v1232
    %v1238 = vmul.f32 1.0, %v1237
    %v1239 = vadd.f32 %v1178, %v1203
    %v1240 = vxor.u32 %v1239, 2147483648
    %v1241 = vmul.f32 %v1240, 1.442695
    %v1242 = vpow.pop %v1241
    %v1243 = vadd.f32 %v1242, 1.0
    %v1244 = vrcp.pop %v1243
    %v1245 = vmul.f32 %v1243, %v1244
    %v1246 = vsub.f32 1.0, %v1245
    %v1247 = vmul.f32 %v1244, %v1246
    %v1248 = vadd.f32 %v1244, %v1247
    %vm1249 = vweird.f32 %v1243
    %vm1250 = vweird.f32 %v1244
    %vm1251 = vmor %vm1249, %vm1250
    %v1252 = vsel %vm1251, %v1244, %v1248
    %v1253 = vand.u32 2147483647, %v1243
    %vm1254 = vcmp.eq.f32.partialorder %v1253, 8.507059e+37
    %v1255 = vand.u32 %v1243, 2147483648
    %v1256 = vor.u32 1.1754944e-38, %v1255
    %v1257 = vsel %vm1254, %v1256, %v1252
    %v1258 = vmul.f32 1.0, %v1257
    %v1259 = vadd.f32 %v1216, %v455
    %v1260 = vmul.f32 %v1238, %v1259
    %v1261 = vadd.f32 %v1179, %v1260
    %v1262 = vtanh.pop %v1261
    %v1263 = vsub.f32 1.0, %v1258
    %v1264 = vmul.f32 %v1263, %v1262
    %v1265 = vmul.f32 %v1258, %v1168
    %v1266 = vadd.f32 %v1264, %v1265
    %v1267 = vpack.c.bf16 %v1266, %v1266
    %s1268 = scalar_lea.vmem [#allocation2], 24
    %1269 = vst [vmem:[%s1268] sm:$0xf] %v1267
    %s1270 = smul.u32 7, 3
    %s1271 = smul.addr %s1270, 4
    %s1272 = scalar_lea.vmem [#allocation3], %s1271
    %v1273 = vld [vmem:[%s1272] sm:$0xff]
    %v1274 = vld [vmem:[%s1272 + $0x8] sm:$0xf]
    %v1275 = vunpack.c.l.bf16 %v1273
    %v1276 = vunpack.c.h.bf16 %v1273
    %v1277 = vunpack.c.l.bf16 %v1274
    %1278 = vmatpush.bf16.msra.mxu0 %v566
    %1279 = vmatpush.bf16.msra.mxu0 %v563
    %1280 = vmatpush.bf16.msra.mxu0 %v560
    %1281 = vmatpush.bf16.msra.mxu0 %v557
    %1282 = vmatpush.bf16.msra.mxu0 %v554
    %1283 = vmatpush.bf16.msra.mxu0 %v551
    %1284 = vmatpush.bf16.msra.mxu0 %v548
    %1285 = vmatpush.bf16.msra.mxu0 %v545
    %1286 = vmatmul.bf16.gmra.mxu0 %v1267
    %v1287 = vpop.f32.mrf.mxu0
    %v1288 = vadd.f32 0.0, %v1287
    %v1289 = vpop.f32.mrf.mxu0
    %1290 = vdwg.mxu0
    %1291 = vmatpush.bf16.msra.mxu0 %v567
    %1292 = vmatpush.bf16.msra.mxu0 %v564
    %1293 = vmatpush.bf16.msra.mxu0 %v561
    %1294 = vmatpush.bf16.msra.mxu0 %v558
    %1295 = vmatpush.bf16.msra.mxu0 %v555
    %1296 = vmatpush.bf16.msra.mxu0 %v552
    %1297 = vmatpush.bf16.msra.mxu0 %v549
    %1298 = vmatpush.bf16.msra.mxu0 %v546
    %1299 = vmatmul.bf16.gmra.mxu0 %v1267
    %v1300 = vpop.f32.mrf.mxu0
    %v1301 = vadd.f32 0.0, %v1300
    %v1302 = vpop.f32.mrf.mxu0
    %1303 = vdwg.mxu0
    %1304 = vmatpush.bf16.msra.mxu0 %v568
    %1305 = vmatpush.bf16.msra.mxu0 %v565
    %1306 = vmatpush.bf16.msra.mxu0 %v562
    %1307 = vmatpush.bf16.msra.mxu0 %v559
    %1308 = vmatpush.bf16.msra.mxu0 %v556
    %1309 = vmatpush.bf16.msra.mxu0 %v553
    %1310 = vmatpush.bf16.msra.mxu0 %v550
    %1311 = vmatpush.bf16.msra.mxu0 %v547
    %1312 = vmatmul.bf16.gmra.mxu0 %v1267
    %v1313 = vpop.f32.mrf.mxu0
    %v1314 = vadd.f32 0.0, %v1313
    %v1315 = vpop.f32.mrf.mxu0
    %1316 = vdwg.mxu0
    %v1317 = vadd.f32 %v1275, %v1288
    %v1318 = vxor.u32 %v1317, 2147483648
    %v1319 = vmul.f32 %v1318, 1.442695
    %v1320 = vpow.pop %v1319
    %v1321 = vadd.f32 %v1320, 1.0
    %v1322 = vrcp.pop %v1321
    %v1323 = vmul.f32 %v1321, %v1322
    %v1324 = vsub.f32 1.0, %v1323
    %v1325 = vmul.f32 %v1322, %v1324
    %v1326 = vadd.f32 %v1322, %v1325
    %vm1327 = vweird.f32 %v1321
    %vm1328 = vweird.f32 %v1322
    %vm1329 = vmor %vm1327, %vm1328
    %v1330 = vsel %vm1329, %v1322, %v1326
    %v1331 = vand.u32 2147483647, %v1321
    %vm1332 = vcmp.eq.f32.partialorder %v1331, 8.507059e+37
    %v1333 = vand.u32 %v1321, 2147483648
    %v1334 = vor.u32 1.1754944e-38, %v1333
    %v1335 = vsel %vm1332, %v1334, %v1330
    %v1336 = vmul.f32 1.0, %v1335
    %v1337 = vadd.f32 %v1276, %v1301
    %v1338 = vxor.u32 %v1337, 2147483648
    %v1339 = vmul.f32 %v1338, 1.442695
    %v1340 = vpow.pop %v1339
    %v1341 = vadd.f32 %v1340, 1.0
    %v1342 = vrcp.pop %v1341
    %v1343 = vmul.f32 %v1341, %v1342
    %v1344 = vsub.f32 1.0, %v1343
    %v1345 = vmul.f32 %v1342, %v1344
    %v1346 = vadd.f32 %v1342, %v1345
    %vm1347 = vweird.f32 %v1341
    %vm1348 = vweird.f32 %v1342
    %vm1349 = vmor %vm1347, %vm1348
    %v1350 = vsel %vm1349, %v1342, %v1346
    %v1351 = vand.u32 2147483647, %v1341
    %vm1352 = vcmp.eq.f32.partialorder %v1351, 8.507059e+37
    %v1353 = vand.u32 %v1341, 2147483648
    %v1354 = vor.u32 1.1754944e-38, %v1353
    %v1355 = vsel %vm1352, %v1354, %v1350
    %v1356 = vmul.f32 1.0, %v1355
    %v1357 = vadd.f32 %v1314, %v455
    %v1358 = vmul.f32 %v1336, %v1357
    %v1359 = vadd.f32 %v1277, %v1358
    %v1360 = vtanh.pop %v1359
    %v1361 = vsub.f32 1.0, %v1356
    %v1362 = vmul.f32 %v1361, %v1360
    %v1363 = vmul.f32 %v1356, %v1266
    %v1364 = vadd.f32 %v1362, %v1363
    %v1365 = vpack.c.bf16 %v1364, %v1364
    %s1366 = scalar_lea.vmem [#allocation2], 28
    %1367 = vst [vmem:[%s1366] sm:$0xf] %v1365
    %v1368 = vld [vmem:[#allocation2] sm:$0xf]
    %v1369 = vld [vmem:[#allocation2 + $0x4] sm:$0xf]
    %v1370 = vld [vmem:[#allocation2 + $0x8] sm:$0xf]
    %v1371 = vld [vmem:[#allocation2 + $0xc] sm:$0xf]
    %v1372 = vld [vmem:[#allocation2 + $0x10] sm:$0xf]
    %v1373 = vld [vmem:[#allocation2 + $0x14] sm:$0xf]
    %v1374 = vld [vmem:[#allocation2 + $0x18] sm:$0xf]
    %v1375 = vld [vmem:[#allocation2 + $0x1c] sm:$0xf]
    %v1376 = vld [vmem:[#allocation8] sm:$0xff]
    %v1377 = vld [vmem:[#allocation8 + $0x8] sm:$0xf]
    %v1378 = vld [vmem:[#allocation8 + $0xc] sm:$0xff]
    %v1379 = vld [vmem:[#allocation8 + $0x14] sm:$0xf]
    %v1380 = vld [vmem:[#allocation8 + $0x18] sm:$0xff]
    %v1381 = vld [vmem:[#allocation8 + $0x20] sm:$0xf]
    %v1382 = vld [vmem:[#allocation8 + $0x24] sm:$0xff]
    %v1383 = vld [vmem:[#allocation8 + $0x2c] sm:$0xf]
    %v1384 = vld [vmem:[#allocation8 + $0x30] sm:$0xff]
    %v1385 = vld [vmem:[#allocation8 + $0x38] sm:$0xf]
    %v1386 = vld [vmem:[#allocation8 + $0x3c] sm:$0xff]
    %v1387 = vld [vmem:[#allocation8 + $0x44] sm:$0xf]
    %v1388 = vld [vmem:[#allocation8 + $0x48] sm:$0xff]
    %v1389 = vld [vmem:[#allocation8 + $0x50] sm:$0xf]
    %v1390 = vld [vmem:[#allocation8 + $0x54] sm:$0xff]
    %v1391 = vld [vmem:[#allocation8 + $0x5c] sm:$0xf]
    %v1392 = vld [vmem:[#allocation8 + $0x60] sm:$0xff]
    %v1393 = vld [vmem:[#allocation8 + $0x68] sm:$0xf]
    %v1394 = vld [vmem:[#allocation8 + $0x6c] sm:$0xff]
    %v1395 = vld [vmem:[#allocation8 + $0x74] sm:$0xf]
    %v1396 = vld [vmem:[#allocation8 + $0x78] sm:$0xff]
    %v1397 = vld [vmem:[#allocation8 + $0x80] sm:$0xf]
    %v1398 = vld [vmem:[#allocation8 + $0x84] sm:$0xff]
    %v1399 = vld [vmem:[#allocation8 + $0x8c] sm:$0xf]
    %v1400 = vld [vmem:[#allocation8 + $0x90] sm:$0xff]
    %v1401 = vld [vmem:[#allocation8 + $0x98] sm:$0xf]
    %v1402 = vld [vmem:[#allocation8 + $0x9c] sm:$0xff]
    %v1403 = vld [vmem:[#allocation8 + $0xa4] sm:$0xf]
    %v1404 = vld [vmem:[#allocation8 + $0xa8] sm:$0xff]
    %v1405 = vld [vmem:[#allocation8 + $0xb0] sm:$0xf]
    %v1406 = vld [vmem:[#allocation8 + $0xb4] sm:$0xff]
    %v1407 = vld [vmem:[#allocation8 + $0xbc] sm:$0xf]
    %v1408 = vld [vmem:[%s6] sm:$0x7]
    %v1410 = vperm.slane %v1408, 0
    %v1411 = vperm.slane %v1408, 1
    %v1412 = vperm.slane %v1408, 2
    %v1424 = vunpack.c.l.b16 %v1368
    %v1425 = vunpack.c.l.b16 %v1369
    %v1426 = vunpack.c.l.b16 %v1370
    %v1427 = vunpack.c.l.b16 %v1371
    %v1428 = vunpack.c.l.b16 %v1372
    %v1429 = vunpack.c.l.b16 %v1373
    %v1430 = vunpack.c.l.b16 %v1374
    %v1431 = vunpack.c.l.b16 %v1375
    %v1432 = vpack.c.b16 %v1425, %v1424
    %v1433 = vpack.c.b16 %v1427, %v1426
    %v1434 = vpack.c.b16 %v1429, %v1428
    %v1435 = vpack.c.b16 %v1431, %v1430
    %v1472 = vunpack.c.l.b16 %v1376
    %v1473 = vunpack.c.h.b16 %v1376
    %v1474 = vunpack.c.l.b16 %v1377
    %v1475 = vunpack.c.l.b16 %v1378
    %v1476 = vunpack.c.h.b16 %v1378
    %v1477 = vunpack.c.l.b16 %v1379
    %v1478 = vunpack.c.l.b16 %v1380
    %v1479 = vunpack.c.h.b16 %v1380
    %v1480 = vunpack.c.l.b16 %v1381
    %v1481 = vunpack.c.l.b16 %v1382
    %v1482 = vunpack.c.h.b16 %v1382
    %v1483 = vunpack.c.l.b16 %v1383
    %v1484 = vunpack.c.l.b16 %v1384
    %v1485 = vunpack.c.h.b16 %v1384
    %v1486 = vunpack.c.l.b16 %v1385
    %v1487 = vunpack.c.l.b16 %v1386
    %v1488 = vunpack.c.h.b16 %v1386
    %v1489 = vunpack.c.l.b16 %v1387
    %v1490 = vunpack.c.l.b16 %v1388
    %v1491 = vunpack.c.h.b16 %v1388
    %v1492 = vunpack.c.l.b16 %v1389
    %v1493 = vunpack.c.l.b16 %v1390
    %v1494 = vunpack.c.h.b16 %v1390
    %v1495 = vunpack.c.l.b16 %v1391
    %v1496 = vunpack.c.l.b16 %v1392
    %v1497 = vunpack.c.h.b16 %v1392
    %v1498 = vunpack.c.l.b16 %v1393
    %v1499 = vunpack.c.l.b16 %v1394
    %v1500 = vunpack.c.h.b16 %v1394
    %v1501 = vunpack.c.l.b16 %v1395
    %v1502 = vunpack.c.l.b16 %v1396
    %v1503 = vunpack.c.h.b16 %v1396
    %v1504 = vunpack.c.l.b16 %v1397
    %v1505 = vunpack.c.l.b16 %v1398
    %v1506 = vunpack.c.h.b16 %v1398
    %v1507 = vunpack.c.l.b16 %v1399
    %v1508 = vunpack.c.l.b16 %v1400
    %v1509 = vunpack.c.h.b16 %v1400
    %v1510 = vunpack.c.l.b16 %v1401
    %v1511 = vunpack.c.l.b16 %v1402
    %v1512 = vunpack.c.h.b16 %v1402
    %v1513 = vunpack.c.l.b16 %v1403
    %v1514 = vunpack.c.l.b16 %v1404
    %v1515 = vunpack.c.h.b16 %v1404
    %v1516 = vunpack.c.l.b16 %v1405
    %v1517 = vunpack.c.l.b16 %v1406
    %v1518 = vunpack.c.h.b16 %v1406
    %v1519 = vunpack.c.l.b16 %v1407
    %v1520 = vpack.c.b16 %v1475, %v1472
    %v1521 = vpack.c.b16 %v1476, %v1473
    %v1522 = vpack.c.b16 %v1477, %v1474
    %v1523 = vpack.c.b16 %v1481, %v1478
    %v1524 = vpack.c.b16 %v1482, %v1479
    %v1525 = vpack.c.b16 %v1483, %v1480
    %v1526 = vpack.c.b16 %v1487, %v1484
    %v1527 = vpack.c.b16 %v1488, %v1485
    %v1528 = vpack.c.b16 %v1489, %v1486
    %v1529 = vpack.c.b16 %v1493, %v1490
    %v1530 = vpack.c.b16 %v1494, %v1491
    %v1531 = vpack.c.b16 %v1495, %v1492
    %v1532 = vpack.c.b16 %v1499, %v1496
    %v1533 = vpack.c.b16 %v1500, %v1497
    %v1534 = vpack.c.b16 %v1501, %v1498
    %v1535 = vpack.c.b16 %v1505, %v1502
    %v1536 = vpack.c.b16 %v1506, %v1503
    %v1537 = vpack.c.b16 %v1507, %v1504
    %v1538 = vpack.c.b16 %v1511, %v1508
    %v1539 = vpack.c.b16 %v1512, %v1509
    %v1540 = vpack.c.b16 %v1513, %v1510
    %v1541 = vpack.c.b16 %v1517, %v1514
    %v1542 = vpack.c.b16 %v1518, %v1515
    %v1543 = vpack.c.b16 %v1519, %v1516
    %1568 = vmatpush.bf16.msra.mxu0 %v1541
    %1569 = vmatpush.bf16.msra.mxu0 %v1538
    %1570 = vmatpush.bf16.msra.mxu0 %v1535
    %1571 = vmatpush.bf16.msra.mxu0 %v1532
    %1572 = vmatpush.bf16.msra.mxu0 %v1529
    %1573 = vmatpush.bf16.msra.mxu0 %v1526
    %1574 = vmatpush.bf16.msra.mxu0 %v1523
    %1575 = vmatpush.bf16.msra.mxu0 %v1520
    %1576 = vmatmul.bf16.gmra.mxu0 %v1432
    %v1577 = vpop.f32.mrf.mxu0
    %v1578 = vadd.f32 %v1410, %v1577
    %v1579 = vpop.f32.mrf.mxu0
    %v1580 = vadd.f32 %v1410, %v1579
    %1581 = vmatmul.bf16.gmra.mxu0 %v1433
    %v1582 = vpop.f32.mrf.mxu0
    %v1583 = vadd.f32 %v1410, %v1582
    %v1584 = vpop.f32.mrf.mxu0
    %v1585 = vadd.f32 %v1410, %v1584
    %1586 = vmatmul.bf16.gmra.mxu0 %v1434
    %v1587 = vpop.f32.mrf.mxu0
    %v1588 = vadd.f32 %v1410, %v1587
    %v1589 = vpop.f32.mrf.mxu0
    %v1590 = vadd.f32 %v1410, %v1589
    %1591 = vmatmul.bf16.gmra.mxu0 %v1435
    %v1592 = vpop.f32.mrf.mxu0
    %v1593 = vadd.f32 %v1410, %v1592
    %v1594 = vpop.f32.mrf.mxu0
    %v1595 = vadd.f32 %v1410, %v1594
    %1596 = vdwg.mxu0
    %1597 = vmatpush.bf16.msra.mxu0 %v1542
    %1598 = vmatpush.bf16.msra.mxu0 %v1539
    %1599 = vmatpush.bf16.msra.mxu0 %v1536
    %1600 = vmatpush.bf16.msra.mxu0 %v1533
    %1601 = vmatpush.bf16.msra.mxu0 %v1530
    %1602 = vmatpush.bf16.msra.mxu0 %v1527
    %1603 = vmatpush.bf16.msra.mxu0 %v1524
    %1604 = vmatpush.bf16.msra.mxu0 %v1521
    %1605 = vmatmul.bf16.gmra.mxu0 %v1432
    %v1606 = vpop.f32.mrf.mxu0
    %v1607 = vadd.f32 %v1411, %v1606
    %v1608 = vpop.f32.mrf.mxu0
    %v1609 = vadd.f32 %v1411, %v1608
    %1610 = vmatmul.bf16.gmra.mxu0 %v1433
    %v1611 = vpop.f32.mrf.mxu0
    %v1612 = vadd.f32 %v1411, %v1611
    %v1613 = vpop.f32.mrf.mxu0
    %v1614 = vadd.f32 %v1411, %v1613
    %1615 = vmatmul.bf16.gmra.mxu0 %v1434
    %v1616 = vpop.f32.mrf.mxu0
    %v1617 = vadd.f32 %v1411, %v1616
    %v1618 = vpop.f32.mrf.mxu0
    %v1619 = vadd.f32 %v1411, %v1618
    %1620 = vmatmul.bf16.gmra.mxu0 %v1435
    %v1621 = vpop.f32.mrf.mxu0
    %v1622 = vadd.f32 %v1411, %v1621
    %v1623 = vpop.f32.mrf.mxu0
    %v1624 = vadd.f32 %v1411, %v1623
    %1625 = vdwg.mxu0
    %1626 = vmatpush.bf16.msra.mxu0 %v1543
    %1627 = vmatpush.bf16.msra.mxu0 %v1540
    %1628 = vmatpush.bf16.msra.mxu0 %v1537
    %1629 = vmatpush.bf16.msra.mxu0 %v1534
    %1630 = vmatpush.bf16.msra.mxu0 %v1531
    %1631 = vmatpush.bf16.msra.mxu0 %v1528
    %1632 = vmatpush.bf16.msra.mxu0 %v1525
    %1633 = vmatpush.bf16.msra.mxu0 %v1522
    %1634 = vmatmul.bf16.gmra.mxu0 %v1432
    %v1635 = vpop.f32.mrf.mxu0
    %v1636 = vadd.f32 %v1412, %v1635
    %v1637 = vpop.f32.mrf.mxu0
    %v1638 = vadd.f32 %v1412, %v1637
    %1639 = vmatmul.bf16.gmra.mxu0 %v1433
    %v1640 = vpop.f32.mrf.mxu0
    %v1641 = vadd.f32 %v1412, %v1640
    %v1642 = vpop.f32.mrf.mxu0
    %v1643 = vadd.f32 %v1412, %v1642
    %1644 = vmatmul.bf16.gmra.mxu0 %v1434
    %v1645 = vpop.f32.mrf.mxu0
    %v1646 = vadd.f32 %v1412, %v1645
    %v1647 = vpop.f32.mrf.mxu0
    %v1648 = vadd.f32 %v1412, %v1647
    %1649 = vmatmul.bf16.gmra.mxu0 %v1435
    %v1650 = vpop.f32.mrf.mxu0
    %v1651 = vadd.f32 %v1412, %v1650
    %v1652 = vpop.f32.mrf.mxu0
    %v1653 = vadd.f32 %v1412, %v1652
    %1654 = vdwg.mxu0
    %v1655 = vpack.c.bf16 %v1607, %v1578
    %v1656 = vpack.c.bf16 %v1636, %v1636
    %v1657 = vpack.c.bf16 %v1609, %v1580
    %v1658 = vpack.c.bf16 %v1638, %v1638
    %v1659 = vpack.c.bf16 %v1612, %v1583
    %v1660 = vpack.c.bf16 %v1641, %v1641
    %v1661 = vpack.c.bf16 %v1614, %v1585
    %v1662 = vpack.c.bf16 %v1643, %v1643
    %v1663 = vpack.c.bf16 %v1617, %v1588
    %v1664 = vpack.c.bf16 %v1646, %v1646
    %v1665 = vpack.c.bf16 %v1619, %v1590
    %v1666 = vpack.c.bf16 %v1648, %v1648
    %v1667 = vpack.c.bf16 %v1622, %v1593
    %v1668 = vpack.c.bf16 %v1651, %v1651
    %v1669 = vpack.c.bf16 %v1624, %v1595
    %v1670 = vpack.c.bf16 %v1653, %v1653
    %1671 = vst [vmem:[#allocation3] sm:$0xff] %v1655
    %1672 = vst [vmem:[#allocation3 + $0x8] sm:$0xf] %v1656
    %1673 = vst [vmem:[#allocation3 + $0xc] sm:$0xff] %v1657
    %1674 = vst [vmem:[#allocation3 + $0x14] sm:$0xf] %v1658
    %1675 = vst [vmem:[#allocation3 + $0x18] sm:$0xff] %v1659
    %1676 = vst [vmem:[#allocation3 + $0x20] sm:$0xf] %v1660
    %1677 = vst [vmem:[#allocation3 + $0x24] sm:$0xff] %v1661
    %1678 = vst [vmem:[#allocation3 + $0x2c] sm:$0xf] %v1662
    %1679 = vst [vmem:[#allocation3 + $0x30] sm:$0xff] %v1663
    %1680 = vst [vmem:[#allocation3 + $0x38] sm:$0xf] %v1664
    %1681 = vst [vmem:[#allocation3 + $0x3c] sm:$0xff] %v1665
    %1682 = vst [vmem:[#allocation3 + $0x44] sm:$0xf] %v1666
    %1683 = vst [vmem:[#allocation3 + $0x48] sm:$0xff] %v1667
    %1684 = vst [vmem:[#allocation3 + $0x50] sm:$0xf] %v1668
    %1685 = vst [vmem:[#allocation3 + $0x54] sm:$0xff] %v1669
    %1686 = vst [vmem:[#allocation3 + $0x5c] sm:$0xf] %v1670
    %v1687 = vld [vmem:[#allocation9] sm:$0xff]
    %v1688 = vld [vmem:[#allocation9 + $0x8] sm:$0xf]
    %v1689 = vld [vmem:[#allocation9 + $0xc] sm:$0xff]
    %v1690 = vld [vmem:[#allocation9 + $0x14] sm:$0xf]
    %v1691 = vld [vmem:[#allocation9 + $0x18] sm:$0xff]
    %v1692 = vld [vmem:[#allocation9 + $0x20] sm:$0xf]
    %v1693 = vld [vmem:[#allocation9 + $0x24] sm:$0xff]
    %v1694 = vld [vmem:[#allocation9 + $0x2c] sm:$0xf]
    %v1695 = vld [vmem:[#allocation9 + $0x30] sm:$0xff]
    %v1696 = vld [vmem:[#allocation9 + $0x38] sm:$0xf]
    %v1697 = vld [vmem:[#allocation9 + $0x3c] sm:$0xff]
    %v1698 = vld [vmem:[#allocation9 + $0x44] sm:$0xf]
    %v1699 = vld [vmem:[#allocation9 + $0x48] sm:$0xff]
    %v1700 = vld [vmem:[#allocation9 + $0x50] sm:$0xf]
    %v1701 = vld [vmem:[#allocation9 + $0x54] sm:$0xff]
    %v1702 = vld [vmem:[#allocation9 + $0x5c] sm:$0xf]
    %v1703 = vld [vmem:[#allocation9 + $0x60] sm:$0xff]
    %v1704 = vld [vmem:[#allocation9 + $0x68] sm:$0xf]
    %v1705 = vld [vmem:[#allocation9 + $0x6c] sm:$0xff]
    %v1706 = vld [vmem:[#allocation9 + $0x74] sm:$0xf]
    %v1707 = vld [vmem:[#allocation9 + $0x78] sm:$0xff]
    %v1708 = vld [vmem:[#allocation9 + $0x80] sm:$0xf]
    %v1709 = vld [vmem:[#allocation9 + $0x84] sm:$0xff]
    %v1710 = vld [vmem:[#allocation9 + $0x8c] sm:$0xf]
    %v1711 = vld [vmem:[#allocation9 + $0x90] sm:$0xff]
    %v1712 = vld [vmem:[#allocation9 + $0x98] sm:$0xf]
    %v1713 = vld [vmem:[#allocation9 + $0x9c] sm:$0xff]
    %v1714 = vld [vmem:[#allocation9 + $0xa4] sm:$0xf]
    %v1715 = vld [vmem:[#allocation9 + $0xa8] sm:$0xff]
    %v1716 = vld [vmem:[#allocation9 + $0xb0] sm:$0xf]
    %v1717 = vld [vmem:[#allocation9 + $0xb4] sm:$0xff]
    %v1718 = vld [vmem:[#allocation9 + $0xbc] sm:$0xf]
    %v1719 = vld [vmem:[%s8] sm:$0x1]
    %v1721 = vperm.slane %v1719, 0
    %v1723 = vld [vmem:[%s459] sm:$0xff]
    %v1724 = vld [vmem:[%s459 + $0x8] sm:$0xf]
    %v1725 = vunpack.c.l.bf16 %v1723
    %v1726 = vunpack.c.h.bf16 %v1723
    %v1727 = vunpack.c.l.bf16 %v1724
    %v1760 = vunpack.c.l.b16 %v1687
    %v1761 = vunpack.c.h.b16 %v1687
    %v1762 = vunpack.c.l.b16 %v1688
    %v1763 = vunpack.c.l.b16 %v1689
    %v1764 = vunpack.c.h.b16 %v1689
    %v1765 = vunpack.c.l.b16 %v1690
    %v1766 = vunpack.c.l.b16 %v1691
    %v1767 = vunpack.c.h.b16 %v1691
    %v1768 = vunpack.c.l.b16 %v1692
    %v1769 = vunpack.c.l.b16 %v1693
    %v1770 = vunpack.c.h.b16 %v1693
    %v1771 = vunpack.c.l.b16 %v1694
    %v1772 = vunpack.c.l.b16 %v1695
    %v1773 = vunpack.c.h.b16 %v1695
    %v1774 = vunpack.c.l.b16 %v1696
    %v1775 = vunpack.c.l.b16 %v1697
    %v1776 = vunpack.c.h.b16 %v1697
    %v1777 = vunpack.c.l.b16 %v1698
    %v1778 = vunpack.c.l.b16 %v1699
    %v1779 = vunpack.c.h.b16 %v1699
    %v1780 = vunpack.c.l.b16 %v1700
    %v1781 = vunpack.c.l.b16 %v1701
    %v1782 = vunpack.c.h.b16 %v1701
    %v1783 = vunpack.c.l.b16 %v1702
    %v1784 = vunpack.c.l.b16 %v1703
    %v1785 = vunpack.c.h.b16 %v1703
    %v1786 = vunpack.c.l.b16 %v1704
    %v1787 = vunpack.c.l.b16 %v1705
    %v1788 = vunpack.c.h.b16 %v1705
    %v1789 = vunpack.c.l.b16 %v1706
    %v1790 = vunpack.c.l.b16 %v1707
    %v1791 = vunpack.c.h.b16 %v1707
    %v1792 = vunpack.c.l.b16 %v1708
    %v1793 = vunpack.c.l.b16 %v1709
    %v1794 = vunpack.c.h.b16 %v1709
    %v1795 = vunpack.c.l.b16 %v1710
    %v1796 = vunpack.c.l.b16 %v1711
    %v1797 = vunpack.c.h.b16 %v1711
    %v1798 = vunpack.c.l.b16 %v1712
    %v1799 = vunpack.c.l.b16 %v1713
    %v1800 = vunpack.c.h.b16 %v1713
    %v1801 = vunpack.c.l.b16 %v1714
    %v1802 = vunpack.c.l.b16 %v1715
    %v1803 = vunpack.c.h.b16 %v1715
    %v1804 = vunpack.c.l.b16 %v1716
    %v1805 = vunpack.c.l.b16 %v1717
    %v1806 = vunpack.c.h.b16 %v1717
    %v1807 = vunpack.c.l.b16 %v1718
    %v1808 = vpack.c.b16 %v1763, %v1760
    %v1809 = vpack.c.b16 %v1764, %v1761
    %v1810 = vpack.c.b16 %v1765, %v1762
    %v1811 = vpack.c.b16 %v1769, %v1766
    %v1812 = vpack.c.b16 %v1770, %v1767
    %v1813 = vpack.c.b16 %v1771, %v1768
    %v1814 = vpack.c.b16 %v1775, %v1772
    %v1815 = vpack.c.b16 %v1776, %v1773
    %v1816 = vpack.c.b16 %v1777, %v1774
    %v1817 = vpack.c.b16 %v1781, %v1778
    %v1818 = vpack.c.b16 %v1782, %v1779
    %v1819 = vpack.c.b16 %v1783, %v1780
    %v1820 = vpack.c.b16 %v1787, %v1784
    %v1821 = vpack.c.b16 %v1788, %v1785
    %v1822 = vpack.c.b16 %v1789, %v1786
    %v1823 = vpack.c.b16 %v1793, %v1790
    %v1824 = vpack.c.b16 %v1794, %v1791
    %v1825 = vpack.c.b16 %v1795, %v1792
    %v1826 = vpack.c.b16 %v1799, %v1796
    %v1827 = vpack.c.b16 %v1800, %v1797
    %v1828 = vpack.c.b16 %v1801, %v1798
    %v1829 = vpack.c.b16 %v1805, %v1802
    %v1830 = vpack.c.b16 %v1806, %v1803
    %v1831 = vpack.c.b16 %v1807, %v1804
    %1856 = vmatpush.bf16.msra.mxu0 %v1829
    %1857 = vmatpush.bf16.msra.mxu0 %v1826
    %1858 = vmatpush.bf16.msra.mxu0 %v1823
    %1859 = vmatpush.bf16.msra.mxu0 %v1820
    %1860 = vmatpush.bf16.msra.mxu0 %v1817
    %1861 = vmatpush.bf16.msra.mxu0 %v1814
    %1862 = vmatpush.bf16.msra.mxu0 %v1811
    %1863 = vmatpush.bf16.msra.mxu0 %v1808
    %1864 = vmatmul.bf16.gmra.mxu0 0
    %v1865 = vpop.f32.mrf.mxu0
    %v1866 = vadd.f32 0.0, %v1865
    %v1867 = vpop.f32.mrf.mxu0
    %1868 = vdwg.mxu0
    %1869 = vmatpush.bf16.msra.mxu0 %v1830
    %1870 = vmatpush.bf16.msra.mxu0 %v1827
    %1871 = vmatpush.bf16.msra.mxu0 %v1824
    %1872 = vmatpush.bf16.msra.mxu0 %v1821
    %1873 = vmatpush.bf16.msra.mxu0 %v1818
    %1874 = vmatpush.bf16.msra.mxu0 %v1815
    %1875 = vmatpush.bf16.msra.mxu0 %v1812
    %1876 = vmatpush.bf16.msra.mxu0 %v1809
    %1877 = vmatmul.bf16.gmra.mxu0 0
    %v1878 = vpop.f32.mrf.mxu0
    %v1879 = vadd.f32 0.0, %v1878
    %v1880 = vpop.f32.mrf.mxu0
    %1881 = vdwg.mxu0
    %1882 = vmatpush.bf16.msra.mxu0 %v1831
    %1883 = vmatpush.bf16.msra.mxu0 %v1828
    %1884 = vmatpush.bf16.msra.mxu0 %v1825
    %1885 = vmatpush.bf16.msra.mxu0 %v1822
    %1886 = vmatpush.bf16.msra.mxu0 %v1819
    %1887 = vmatpush.bf16.msra.mxu0 %v1816
    %1888 = vmatpush.bf16.msra.mxu0 %v1813
    %1889 = vmatpush.bf16.msra.mxu0 %v1810
    %1890 = vmatmul.bf16.gmra.mxu0 0
    %v1891 = vpop.f32.mrf.mxu0
    %v1892 = vadd.f32 0.0, %v1891
    %v1893 = vpop.f32.mrf.mxu0
    %1894 = vdwg.mxu0
    %v1895 = vadd.f32 %v1725, %v1866
    %v1896 = vxor.u32 %v1895, 2147483648
    %v1897 = vmul.f32 %v1896, 1.442695
    %v1898 = vpow.pop %v1897
    %v1899 = vadd.f32 %v1898, 1.0
    %v1900 = vrcp.pop %v1899
    %v1901 = vmul.f32 %v1899, %v1900
    %v1902 = vsub.f32 1.0, %v1901
    %v1903 = vmul.f32 %v1900, %v1902
    %v1904 = vadd.f32 %v1900, %v1903
    %vm1905 = vweird.f32 %v1899
    %vm1906 = vweird.f32 %v1900
    %vm1907 = vmor %vm1905, %vm1906
    %v1908 = vsel %vm1907, %v1900, %v1904
    %v1909 = vand.u32 2147483647, %v1899
    %vm1910 = vcmp.eq.f32.partialorder %v1909, 8.507059e+37
    %v1911 = vand.u32 %v1899, 2147483648
    %v1912 = vor.u32 1.1754944e-38, %v1911
    %v1913 = vsel %vm1910, %v1912, %v1908
    %v1914 = vmul.f32 1.0, %v1913
    %v1915 = vadd.f32 %v1726, %v1879
    %v1916 = vxor.u32 %v1915, 2147483648
    %v1917 = vmul.f32 %v1916, 1.442695
    %v1918 = vpow.pop %v1917
    %v1919 = vadd.f32 %v1918, 1.0
    %v1920 = vrcp.pop %v1919
    %v1921 = vmul.f32 %v1919, %v1920
    %v1922 = vsub.f32 1.0, %v1921
    %v1923 = vmul.f32 %v1920, %v1922
    %v1924 = vadd.f32 %v1920, %v1923
    %vm1925 = vweird.f32 %v1919
    %vm1926 = vweird.f32 %v1920
    %vm1927 = vmor %vm1925, %vm1926
    %v1928 = vsel %vm1927, %v1920, %v1924
    %v1929 = vand.u32 2147483647, %v1919
    %vm1930 = vcmp.eq.f32.partialorder %v1929, 8.507059e+37
    %v1931 = vand.u32 %v1919, 2147483648
    %v1932 = vor.u32 1.1754944e-38, %v1931
    %v1933 = vsel %vm1930, %v1932, %v1928
    %v1934 = vmul.f32 1.0, %v1933
    %v1935 = vadd.f32 %v1892, %v1721
    %v1936 = vmul.f32 %v1914, %v1935
    %v1937 = vadd.f32 %v1727, %v1936
    %v1938 = vtanh.pop %v1937
    %v1939 = vsub.f32 1.0, %v1934
    %v1940 = vmul.f32 %v1939, %v1938
    %v1941 = vmul.f32 %v1934, 0.0
    %v1942 = vadd.f32 %v1940, %v1941
    %v1943 = vld [vmem:[%s684] sm:$0xff]
    %v1944 = vld [vmem:[%s684 + $0x8] sm:$0xf]
    %v1945 = vunpack.c.l.bf16 %v1943
    %v1946 = vunpack.c.h.bf16 %v1943
    %v1947 = vunpack.c.l.bf16 %v1944
    %v1948 = vpack.c.bf16 %v1942, %v1942
    %1949 = vmatpush.bf16.msra.mxu0 %v1829
    %1950 = vmatpush.bf16.msra.mxu0 %v1826
    %1951 = vmatpush.bf16.msra.mxu0 %v1823
    %1952 = vmatpush.bf16.msra.mxu0 %v1820
    %1953 = vmatpush.bf16.msra.mxu0 %v1817
    %1954 = vmatpush.bf16.msra.mxu0 %v1814
    %1955 = vmatpush.bf16.msra.mxu0 %v1811
    %1956 = vmatpush.bf16.msra.mxu0 %v1808
    %1957 = vmatmul.bf16.gmra.mxu0 %v1948
    %v1958 = vpop.f32.mrf.mxu0
    %v1959 = vadd.f32 0.0, %v1958
    %v1960 = vpop.f32.mrf.mxu0
    %1961 = vdwg.mxu0
    %1962 = vmatpush.bf16.msra.mxu0 %v1830
    %1963 = vmatpush.bf16.msra.mxu0 %v1827
    %1964 = vmatpush.bf16.msra.mxu0 %v1824
    %1965 = vmatpush.bf16.msra.mxu0 %v1821
    %1966 = vmatpush.bf16.msra.mxu0 %v1818
    %1967 = vmatpush.bf16.msra.mxu0 %v1815
    %1968 = vmatpush.bf16.msra.mxu0 %v1812
    %1969 = vmatpush.bf16.msra.mxu0 %v1809
    %1970 = vmatmul.bf16.gmra.mxu0 %v1948
    %v1971 = vpop.f32.mrf.mxu0
    %v1972 = vadd.f32 0.0, %v1971
    %v1973 = vpop.f32.mrf.mxu0
    %1974 = vdwg.mxu0
    %1975 = vmatpush.bf16.msra.mxu0 %v1831
    %1976 = vmatpush.bf16.msra.mxu0 %v1828
    %1977 = vmatpush.bf16.msra.mxu0 %v1825
    %1978 = vmatpush.bf16.msra.mxu0 %v1822
    %1979 = vmatpush.bf16.msra.mxu0 %v1819
    %1980 = vmatpush.bf16.msra.mxu0 %v1816
    %1981 = vmatpush.bf16.msra.mxu0 %v1813
    %1982 = vmatpush.bf16.msra.mxu0 %v1810
    %1983 = vmatmul.bf16.gmra.mxu0 %v1948
    %v1984 = vpop.f32.mrf.mxu0
    %v1985 = vadd.f32 0.0, %v1984
    %v1986 = vpop.f32.mrf.mxu0
    %1987 = vdwg.mxu0
    %v1988 = vadd.f32 %v1945, %v1959
    %v1989 = vxor.u32 %v1988, 2147483648
    %v1990 = vmul.f32 %v1989, 1.442695
    %v1991 = vpow.pop %v1990
    %v1992 = vadd.f32 %v1991, 1.0
    %v1993 = vrcp.pop %v1992
    %v1994 = vmul.f32 %v1992, %v1993
    %v1995 = vsub.f32 1.0, %v1994
    %v1996 = vmul.f32 %v1993, %v1995
    %v1997 = vadd.f32 %v1993, %v1996
    %vm1998 = vweird.f32 %v1992
    %vm1999 = vweird.f32 %v1993
    %vm2000 = vmor %vm1998, %vm1999
    %v2001 = vsel %vm2000, %v1993, %v1997
    %v2002 = vand.u32 2147483647, %v1992
    %vm2003 = vcmp.eq.f32.partialorder %v2002, 8.507059e+37
    %v2004 = vand.u32 %v1992, 2147483648
    %v2005 = vor.u32 1.1754944e-38, %v2004
    %v2006 = vsel %vm2003, %v2005, %v2001
    %v2007 = vmul.f32 1.0, %v2006
    %v2008 = vadd.f32 %v1946, %v1972
    %v2009 = vxor.u32 %v2008, 2147483648
    %v2010 = vmul.f32 %v2009, 1.442695
    %v2011 = vpow.pop %v2010
    %v2012 = vadd.f32 %v2011, 1.0
    %v2013 = vrcp.pop %v2012
    %v2014 = vmul.f32 %v2012, %v2013
    %v2015 = vsub.f32 1.0, %v2014
    %v2016 = vmul.f32 %v2013, %v2015
    %v2017 = vadd.f32 %v2013, %v2016
    %vm2018 = vweird.f32 %v2012
    %vm2019 = vweird.f32 %v2013
    %vm2020 = vmor %vm2018, %vm2019
    %v2021 = vsel %vm2020, %v2013, %v2017
    %v2022 = vand.u32 2147483647, %v2012
    %vm2023 = vcmp.eq.f32.partialorder %v2022, 8.507059e+37
    %v2024 = vand.u32 %v2012, 2147483648
    %v2025 = vor.u32 1.1754944e-38, %v2024
    %v2026 = vsel %vm2023, %v2025, %v2021
    %v2027 = vmul.f32 1.0, %v2026
    %v2028 = vadd.f32 %v1985, %v1721
    %v2029 = vmul.f32 %v2007, %v2028
    %v2030 = vadd.f32 %v1947, %v2029
    %v2031 = vtanh.pop %v2030
    %v2032 = vsub.f32 1.0, %v2027
    %v2033 = vmul.f32 %v2032, %v2031
    %v2034 = vmul.f32 %v2027, %v1942
    %v2035 = vadd.f32 %v2033, %v2034
    %v2036 = vld [vmem:[%s782] sm:$0xff]
    %v2037 = vld [vmem:[%s782 + $0x8] sm:$0xf]
    %v2038 = vunpack.c.l.bf16 %v2036
    %v2039 = vunpack.c.h.bf16 %v2036
    %v2040 = vunpack.c.l.bf16 %v2037
    %v2041 = vpack.c.bf16 %v2035, %v2035
    %2042 = vmatpush.bf16.msra.mxu0 %v1829
    %2043 = vmatpush.bf16.msra.mxu0 %v1826
    %2044 = vmatpush.bf16.msra.mxu0 %v1823
    %2045 = vmatpush.bf16.msra.mxu0 %v1820
    %2046 = vmatpush.bf16.msra.mxu0 %v1817
    %2047 = vmatpush.bf16.msra.mxu0 %v1814
    %2048 = vmatpush.bf16.msra.mxu0 %v1811
    %2049 = vmatpush.bf16.msra.mxu0 %v1808
    %2050 = vmatmul.bf16.gmra.mxu0 %v2041
    %v2051 = vpop.f32.mrf.mxu0
    %v2052 = vadd.f32 0.0, %v2051
    %v2053 = vpop.f32.mrf.mxu0
    %2054 = vdwg.mxu0
    %2055 = vmatpush.bf16.msra.mxu0 %v1830
    %2056 = vmatpush.bf16.msra.mxu0 %v1827
    %2057 = vmatpush.bf16.msra.mxu0 %v1824
    %2058 = vmatpush.bf16.msra.mxu0 %v1821
    %2059 = vmatpush.bf16.msra.mxu0 %v1818
    %2060 = vmatpush.bf16.msra.mxu0 %v1815
    %2061 = vmatpush.bf16.msra.mxu0 %v1812
    %2062 = vmatpush.bf16.msra.mxu0 %v1809
    %2063 = vmatmul.bf16.gmra.mxu0 %v2041
    %v2064 = vpop.f32.mrf.mxu0
    %v2065 = vadd.f32 0.0, %v2064
    %v2066 = vpop.f32.mrf.mxu0
    %2067 = vdwg.mxu0
    %2068 = vmatpush.bf16.msra.mxu0 %v1831
    %2069 = vmatpush.bf16.msra.mxu0 %v1828
    %2070 = vmatpush.bf16.msra.mxu0 %v1825
    %2071 = vmatpush.bf16.msra.mxu0 %v1822
    %2072 = vmatpush.bf16.msra.mxu0 %v1819
    %2073 = vmatpush.bf16.msra.mxu0 %v1816
    %2074 = vmatpush.bf16.msra.mxu0 %v1813
    %2075 = vmatpush.bf16.msra.mxu0 %v1810
    %2076 = vmatmul.bf16.gmra.mxu0 %v2041
    %v2077 = vpop.f32.mrf.mxu0
    %v2078 = vadd.f32 0.0, %v2077
    %v2079 = vpop.f32.mrf.mxu0
    %2080 = vdwg.mxu0
    %v2081 = vadd.f32 %v2038, %v2052
    %v2082 = vxor.u32 %v2081, 2147483648
    %v2083 = vmul.f32 %v2082, 1.442695
    %v2084 = vpow.pop %v2083
    %v2085 = vadd.f32 %v2084, 1.0
    %v2086 = vrcp.pop %v2085
    %v2087 = vmul.f32 %v2085, %v2086
    %v2088 = vsub.f32 1.0, %v2087
    %v2089 = vmul.f32 %v2086, %v2088
    %v2090 = vadd.f32 %v2086, %v2089
    %vm2091 = vweird.f32 %v2085
    %vm2092 = vweird.f32 %v2086
    %vm2093 = vmor %vm2091, %vm2092
    %v2094 = vsel %vm2093, %v2086, %v2090
    %v2095 = vand.u32 2147483647, %v2085
    %vm2096 = vcmp.eq.f32.partialorder %v2095, 8.507059e+37
    %v2097 = vand.u32 %v2085, 2147483648
    %v2098 = vor.u32 1.1754944e-38, %v2097
    %v2099 = vsel %vm2096, %v2098, %v2094
    %v2100 = vmul.f32 1.0, %v2099
    %v2101 = vadd.f32 %v2039, %v2065
    %v2102 = vxor.u32 %v2101, 2147483648
    %v2103 = vmul.f32 %v2102, 1.442695
    %v2104 = vpow.pop %v2103
    %v2105 = vadd.f32 %v2104, 1.0
    %v2106 = vrcp.pop %v2105
    %v2107 = vmul.f32 %v2105, %v2106
    %v2108 = vsub.f32 1.0, %v2107
    %v2109 = vmul.f32 %v2106, %v2108
    %v2110 = vadd.f32 %v2106, %v2109
    %vm2111 = vweird.f32 %v2105
    %vm2112 = vweird.f32 %v2106
    %vm2113 = vmor %vm2111, %vm2112
    %v2114 = vsel %vm2113, %v2106, %v2110
    %v2115 = vand.u32 2147483647, %v2105
    %vm2116 = vcmp.eq.f32.partialorder %v2115, 8.507059e+37
    %v2117 = vand.u32 %v2105, 2147483648
    %v2118 = vor.u32 1.1754944e-38, %v2117
    %v2119 = vsel %vm2116, %v2118, %v2114
    %v2120 = vmul.f32 1.0, %v2119
    %v2121 = vadd.f32 %v2078, %v1721
    %v2122 = vmul.f32 %v2100, %v2121
    %v2123 = vadd.f32 %v2040, %v2122
    %v2124 = vtanh.pop %v2123
    %v2125 = vsub.f32 1.0, %v2120
    %v2126 = vmul.f32 %v2125, %v2124
    %v2127 = vmul.f32 %v2120, %v2035
    %v2128 = vadd.f32 %v2126, %v2127
    %v2129 = vld [vmem:[%s880] sm:$0xff]
    %v2130 = vld [vmem:[%s880 + $0x8] sm:$0xf]
    %v2131 = vunpack.c.l.bf16 %v2129
    %v2132 = vunpack.c.h.bf16 %v2129
    %v2133 = vunpack.c.l.bf16 %v2130
    %v2134 = vpack.c.bf16 %v2128, %v2128
    %2135 = vmatpush.bf16.msra.mxu0 %v1829
    %2136 = vmatpush.bf16.msra.mxu0 %v1826
    %2137 = vmatpush.bf16.msra.mxu0 %v1823
    %2138 = vmatpush.bf16.msra.mxu0 %v1820
    %2139 = vmatpush.bf16.msra.mxu0 %v1817
    %2140 = vmatpush.bf16.msra.mxu0 %v1814
    %2141 = vmatpush.bf16.msra.mxu0 %v1811
    %2142 = vmatpush.bf16.msra.mxu0 %v1808
    %2143 = vmatmul.bf16.gmra.mxu0 %v2134
    %v2144 = vpop.f32.mrf.mxu0
    %v2145 = vadd.f32 0.0, %v2144
    %v2146 = vpop.f32.mrf.mxu0
    %2147 = vdwg.mxu0
    %2148 = vmatpush.bf16.msra.mxu0 %v1830
    %2149 = vmatpush.bf16.msra.mxu0 %v1827
    %2150 = vmatpush.bf16.msra.mxu0 %v1824
    %2151 = vmatpush.bf16.msra.mxu0 %v1821
    %2152 = vmatpush.bf16.msra.mxu0 %v1818
    %2153 = vmatpush.bf16.msra.mxu0 %v1815
    %2154 = vmatpush.bf16.msra.mxu0 %v1812
    %2155 = vmatpush.bf16.msra.mxu0 %v1809
    %2156 = vmatmul.bf16.gmra.mxu0 %v2134
    %v2157 = vpop.f32.mrf.mxu0
    %v2158 = vadd.f32 0.0, %v2157
    %v2159 = vpop.f32.mrf.mxu0
    %2160 = vdwg.mxu0
    %2161 = vmatpush.bf16.msra.mxu0 %v1831
    %2162 = vmatpush.bf16.msra.mxu0 %v1828
    %2163 = vmatpush.bf16.msra.mxu0 %v1825
    %2164 = vmatpush.bf16.msra.mxu0 %v1822
    %2165 = vmatpush.bf16.msra.mxu0 %v1819
    %2166 = vmatpush.bf16.msra.mxu0 %v1816
    %2167 = vmatpush.bf16.msra.mxu0 %v1813
    %2168 = vmatpush.bf16.msra.mxu0 %v1810
    %2169 = vmatmul.bf16.gmra.mxu0 %v2134
    %v2170 = vpop.f32.mrf.mxu0
    %v2171 = vadd.f32 0.0, %v2170
    %v2172 = vpop.f32.mrf.mxu0
    %2173 = vdwg.mxu0
    %v2174 = vadd.f32 %v2131, %v2145
    %v2175 = vxor.u32 %v2174, 2147483648
    %v2176 = vmul.f32 %v2175, 1.442695
    %v2177 = vpow.pop %v2176
    %v2178 = vadd.f32 %v2177, 1.0
    %v2179 = vrcp.pop %v2178
    %v2180 = vmul.f32 %v2178, %v2179
    %v2181 = vsub.f32 1.0, %v2180
    %v2182 = vmul.f32 %v2179, %v2181
    %v2183 = vadd.f32 %v2179, %v2182
    %vm2184 = vweird.f32 %v2178
    %vm2185 = vweird.f32 %v2179
    %vm2186 = vmor %vm2184, %vm2185
    %v2187 = vsel %vm2186, %v2179, %v2183
    %v2188 = vand.u32 2147483647, %v2178
    %vm2189 = vcmp.eq.f32.partialorder %v2188, 8.507059e+37
    %v2190 = vand.u32 %v2178, 2147483648
    %v2191 = vor.u32 1.1754944e-38, %v2190
    %v2192 = vsel %vm2189, %v2191, %v2187
    %v2193 = vmul.f32 1.0, %v2192
    %v2194 = vadd.f32 %v2132, %v2158
    %v2195 = vxor.u32 %v2194, 2147483648
    %v2196 = vmul.f32 %v2195, 1.442695
    %v2197 = vpow.pop %v2196
    %v2198 = vadd.f32 %v2197, 1.0
    %v2199 = vrcp.pop %v2198
    %v2200 = vmul.f32 %v2198, %v2199
    %v2201 = vsub.f32 1.0, %v2200
    %v2202 = vmul.f32 %v2199, %v2201
    %v2203 = vadd.f32 %v2199, %v2202
    %vm2204 = vweird.f32 %v2198
    %vm2205 = vweird.f32 %v2199
    %vm2206 = vmor %vm2204, %vm2205
    %v2207 = vsel %vm2206, %v2199, %v2203
    %v2208 = vand.u32 2147483647, %v2198
    %vm2209 = vcmp.eq.f32.partialorder %v2208, 8.507059e+37
    %v2210 = vand.u32 %v2198, 2147483648
    %v2211 = vor.u32 1.1754944e-38, %v2210
    %v2212 = vsel %vm2209, %v2211, %v2207
    %v2213 = vmul.f32 1.0, %v2212
    %v2214 = vadd.f32 %v2171, %v1721
    %v2215 = vmul.f32 %v2193, %v2214
    %v2216 = vadd.f32 %v2133, %v2215
    %v2217 = vtanh.pop %v2216
    %v2218 = vsub.f32 1.0, %v2213
    %v2219 = vmul.f32 %v2218, %v2217
    %v2220 = vmul.f32 %v2213, %v2128
    %v2221 = vadd.f32 %v2219, %v2220
    %v2222 = vld [vmem:[%s978] sm:$0xff]
    %v2223 = vld [vmem:[%s978 + $0x8] sm:$0xf]
    %v2224 = vunpack.c.l.bf16 %v2222
    %v2225 = vunpack.c.h.bf16 %v2222
    %v2226 = vunpack.c.l.bf16 %v2223
    %v2227 = vpack.c.bf16 %v2221, %v2221
    %2228 = vmatpush.bf16.msra.mxu0 %v1829
    %2229 = vmatpush.bf16.msra.mxu0 %v1826
    %2230 = vmatpush.bf16.msra.mxu0 %v1823
    %2231 = vmatpush.bf16.msra.mxu0 %v1820
    %2232 = vmatpush.bf16.msra.mxu0 %v1817
    %2233 = vmatpush.bf16.msra.mxu0 %v1814
    %2234 = vmatpush.bf16.msra.mxu0 %v1811
    %2235 = vmatpush.bf16.msra.mxu0 %v1808
    %2236 = vmatmul.bf16.gmra.mxu0 %v2227
    %v2237 = vpop.f32.mrf.mxu0
    %v2238 = vadd.f32 0.0, %v2237
    %v2239 = vpop.f32.mrf.mxu0
    %2240 = vdwg.mxu0
    %2241 = vmatpush.bf16.msra.mxu0 %v1830
    %2242 = vmatpush.bf16.msra.mxu0 %v1827
    %2243 = vmatpush.bf16.msra.mxu0 %v1824
    %2244 = vmatpush.bf16.msra.mxu0 %v1821
    %2245 = vmatpush.bf16.msra.mxu0 %v1818
    %2246 = vmatpush.bf16.msra.mxu0 %v1815
    %2247 = vmatpush.bf16.msra.mxu0 %v1812
    %2248 = vmatpush.bf16.msra.mxu0 %v1809
    %2249 = vmatmul.bf16.gmra.mxu0 %v2227
    %v2250 = vpop.f32.mrf.mxu0
    %v2251 = vadd.f32 0.0, %v2250
    %v2252 = vpop.f32.mrf.mxu0
    %2253 = vdwg.mxu0
    %2254 = vmatpush.bf16.msra.mxu0 %v1831
    %2255 = vmatpush.bf16.msra.mxu0 %v1828
    %2256 = vmatpush.bf16.msra.mxu0 %v1825
    %2257 = vmatpush.bf16.msra.mxu0 %v1822
    %2258 = vmatpush.bf16.msra.mxu0 %v1819
    %2259 = vmatpush.bf16.msra.mxu0 %v1816
    %2260 = vmatpush.bf16.msra.mxu0 %v1813
    %2261 = vmatpush.bf16.msra.mxu0 %v1810
    %2262 = vmatmul.bf16.gmra.mxu0 %v2227
    %v2263 = vpop.f32.mrf.mxu0
    %v2264 = vadd.f32 0.0, %v2263
    %v2265 = vpop.f32.mrf.mxu0
    %2266 = vdwg.mxu0
    %v2267 = vadd.f32 %v2224, %v2238
    %v2268 = vxor.u32 %v2267, 2147483648
    %v2269 = vmul.f32 %v2268, 1.442695
    %v2270 = vpow.pop %v2269
    %v2271 = vadd.f32 %v2270, 1.0
    %v2272 = vrcp.pop %v2271
    %v2273 = vmul.f32 %v2271, %v2272
    %v2274 = vsub.f32 1.0, %v2273
    %v2275 = vmul.f32 %v2272, %v2274
    %v2276 = vadd.f32 %v2272, %v2275
    %vm2277 = vweird.f32 %v2271
    %vm2278 = vweird.f32 %v2272
    %vm2279 = vmor %vm2277, %vm2278
    %v2280 = vsel %vm2279, %v2272, %v2276
    %v2281 = vand.u32 2147483647, %v2271
    %vm2282 = vcmp.eq.f32.partialorder %v2281, 8.507059e+37
    %v2283 = vand.u32 %v2271, 2147483648
    %v2284 = vor.u32 1.1754944e-38, %v2283
    %v2285 = vsel %vm2282, %v2284, %v2280
    %v2286 = vmul.f32 1.0, %v2285
    %v2287 = vadd.f32 %v2225, %v2251
    %v2288 = vxor.u32 %v2287, 2147483648
    %v2289 = vmul.f32 %v2288, 1.442695
    %v2290 = vpow.pop %v2289
    %v2291 = vadd.f32 %v2290, 1.0
    %v2292 = vrcp.pop %v2291
    %v2293 = vmul.f32 %v2291, %v2292
    %v2294 = vsub.f32 1.0, %v2293
    %v2295 = vmul.f32 %v2292, %v2294
    %v2296 = vadd.f32 %v2292, %v2295
    %vm2297 = vweird.f32 %v2291
    %vm2298 = vweird.f32 %v2292
    %vm2299 = vmor %vm2297, %vm2298
    %v2300 = vsel %vm2299, %v2292, %v2296
    %v2301 = vand.u32 2147483647, %v2291
    %vm2302 = vcmp.eq.f32.partialorder %v2301, 8.507059e+37
    %v2303 = vand.u32 %v2291, 2147483648
    %v2304 = vor.u32 1.1754944e-38, %v2303
    %v2305 = vsel %vm2302, %v2304, %v2300
    %v2306 = vmul.f32 1.0, %v2305
    %v2307 = vadd.f32 %v2264, %v1721
    %v2308 = vmul.f32 %v2286, %v2307
    %v2309 = vadd.f32 %v2226, %v2308
    %v2310 = vtanh.pop %v2309
    %v2311 = vsub.f32 1.0, %v2306
    %v2312 = vmul.f32 %v2311, %v2310
    %v2313 = vmul.f32 %v2306, %v2221
    %v2314 = vadd.f32 %v2312, %v2313
    %v2315 = vld [vmem:[%s1076] sm:$0xff]
    %v2316 = vld [vmem:[%s1076 + $0x8] sm:$0xf]
    %v2317 = vunpack.c.l.bf16 %v2315
    %v2318 = vunpack.c.h.bf16 %v2315
    %v2319 = vunpack.c.l.bf16 %v2316
    %v2320 = vpack.c.bf16 %v2314, %v2314
    %2321 = vmatpush.bf16.msra.mxu0 %v1829
    %2322 = vmatpush.bf16.msra.mxu0 %v1826
    %2323 = vmatpush.bf16.msra.mxu0 %v1823
    %2324 = vmatpush.bf16.msra.mxu0 %v1820
    %2325 = vmatpush.bf16.msra.mxu0 %v1817
    %2326 = vmatpush.bf16.msra.mxu0 %v1814
    %2327 = vmatpush.bf16.msra.mxu0 %v1811
    %2328 = vmatpush.bf16.msra.mxu0 %v1808
    %2329 = vmatmul.bf16.gmra.mxu0 %v2320
    %v2330 = vpop.f32.mrf.mxu0
    %v2331 = vadd.f32 0.0, %v2330
    %v2332 = vpop.f32.mrf.mxu0
    %2333 = vdwg.mxu0
    %2334 = vmatpush.bf16.msra.mxu0 %v1830
    %2335 = vmatpush.bf16.msra.mxu0 %v1827
    %2336 = vmatpush.bf16.msra.mxu0 %v1824
    %2337 = vmatpush.bf16.msra.mxu0 %v1821
    %2338 = vmatpush.bf16.msra.mxu0 %v1818
    %2339 = vmatpush.bf16.msra.mxu0 %v1815
    %2340 = vmatpush.bf16.msra.mxu0 %v1812
    %2341 = vmatpush.bf16.msra.mxu0 %v1809
    %2342 = vmatmul.bf16.gmra.mxu0 %v2320
    %v2343 = vpop.f32.mrf.mxu0
    %v2344 = vadd.f32 0.0, %v2343
    %v2345 = vpop.f32.mrf.mxu0
    %2346 = vdwg.mxu0
    %2347 = vmatpush.bf16.msra.mxu0 %v1831
    %2348 = vmatpush.bf16.msra.mxu0 %v1828
    %2349 = vmatpush.bf16.msra.mxu0 %v1825
    %2350 = vmatpush.bf16.msra.mxu0 %v1822
    %2351 = vmatpush.bf16.msra.mxu0 %v1819
    %2352 = vmatpush.bf16.msra.mxu0 %v1816
    %2353 = vmatpush.bf16.msra.mxu0 %v1813
    %2354 = vmatpush.bf16.msra.mxu0 %v1810
    %2355 = vmatmul.bf16.gmra.mxu0 %v2320
    %v2356 = vpop.f32.mrf.mxu0
    %v2357 = vadd.f32 0.0, %v2356
    %v2358 = vpop.f32.mrf.mxu0
    %2359 = vdwg.mxu0
    %v2360 = vadd.f32 %v2317, %v2331
    %v2361 = vxor.u32 %v2360, 2147483648
    %v2362 = vmul.f32 %v2361, 1.442695
    %v2363 = vpow.pop %v2362
    %v2364 = vadd.f32 %v2363, 1.0
    %v2365 = vrcp.pop %v2364
    %v2366 = vmul.f32 %v2364, %v2365
    %v2367 = vsub.f32 1.0, %v2366
    %v2368 = vmul.f32 %v2365, %v2367
    %v2369 = vadd.f32 %v2365, %v2368
    %vm2370 = vweird.f32 %v2364
    %vm2371 = vweird.f32 %v2365
    %vm2372 = vmor %vm2370, %vm2371
    %v2373 = vsel %vm2372, %v2365, %v2369
    %v2374 = vand.u32 2147483647, %v2364
    %vm2375 = vcmp.eq.f32.partialorder %v2374, 8.507059e+37
    %v2376 = vand.u32 %v2364, 2147483648
    %v2377 = vor.u32 1.1754944e-38, %v2376
    %v2378 = vsel %vm2375, %v2377, %v2373
    %v2379 = vmul.f32 1.0, %v2378
    %v2380 = vadd.f32 %v2318, %v2344
    %v2381 = vxor.u32 %v2380, 2147483648
    %v2382 = vmul.f32 %v2381, 1.442695
    %v2383 = vpow.pop %v2382
    %v2384 = vadd.f32 %v2383, 1.0
    %v2385 = vrcp.pop %v2384
    %v2386 = vmul.f32 %v2384, %v2385
    %v2387 = vsub.f32 1.0, %v2386
    %v2388 = vmul.f32 %v2385, %v2387
    %v2389 = vadd.f32 %v2385, %v2388
    %vm2390 = vweird.f32 %v2384
    %vm2391 = vweird.f32 %v2385
    %vm2392 = vmor %vm2390, %vm2391
    %v2393 = vsel %vm2392, %v2385, %v2389
    %v2394 = vand.u32 2147483647, %v2384
    %vm2395 = vcmp.eq.f32.partialorder %v2394, 8.507059e+37
    %v2396 = vand.u32 %v2384, 2147483648
    %v2397 = vor.u32 1.1754944e-38, %v2396
    %v2398 = vsel %vm2395, %v2397, %v2393
    %v2399 = vmul.f32 1.0, %v2398
    %v2400 = vadd.f32 %v2357, %v1721
    %v2401 = vmul.f32 %v2379, %v2400
    %v2402 = vadd.f32 %v2319, %v2401
    %v2403 = vtanh.pop %v2402
    %v2404 = vsub.f32 1.0, %v2399
    %v2405 = vmul.f32 %v2404, %v2403
    %v2406 = vmul.f32 %v2399, %v2314
    %v2407 = vadd.f32 %v2405, %v2406
    %v2408 = vld [vmem:[%s1174] sm:$0xff]
    %v2409 = vld [vmem:[%s1174 + $0x8] sm:$0xf]
    %v2410 = vunpack.c.l.bf16 %v2408
    %v2411 = vunpack.c.h.bf16 %v2408
    %v2412 = vunpack.c.l.bf16 %v2409
    %v2413 = vpack.c.bf16 %v2407, %v2407
    %2414 = vmatpush.bf16.msra.mxu0 %v1829
    %2415 = vmatpush.bf16.msra.mxu0 %v1826
    %2416 = vmatpush.bf16.msra.mxu0 %v1823
    %2417 = vmatpush.bf16.msra.mxu0 %v1820
    %2418 = vmatpush.bf16.msra.mxu0 %v1817
    %2419 = vmatpush.bf16.msra.mxu0 %v1814
    %2420 = vmatpush.bf16.msra.mxu0 %v1811
    %2421 = vmatpush.bf16.msra.mxu0 %v1808
    %2422 = vmatmul.bf16.gmra.mxu0 %v2413
    %v2423 = vpop.f32.mrf.mxu0
    %v2424 = vadd.f32 0.0, %v2423
    %v2425 = vpop.f32.mrf.mxu0
    %2426 = vdwg.mxu0
    %2427 = vmatpush.bf16.msra.mxu0 %v1830
    %2428 = vmatpush.bf16.msra.mxu0 %v1827
    %2429 = vmatpush.bf16.msra.mxu0 %v1824
    %2430 = vmatpush.bf16.msra.mxu0 %v1821
    %2431 = vmatpush.bf16.msra.mxu0 %v1818
    %2432 = vmatpush.bf16.msra.mxu0 %v1815
    %2433 = vmatpush.bf16.msra.mxu0 %v1812
    %2434 = vmatpush.bf16.msra.mxu0 %v1809
    %2435 = vmatmul.bf16.gmra.mxu0 %v2413
    %v2436 = vpop.f32.mrf.mxu0
    %v2437 = vadd.f32 0.0, %v2436
    %v2438 = vpop.f32.mrf.mxu0
    %2439 = vdwg.mxu0
    %2440 = vmatpush.bf16.msra.mxu0 %v1831
    %2441 = vmatpush.bf16.msra.mxu0 %v1828
    %2442 = vmatpush.bf16.msra.mxu0 %v1825
    %2443 = vmatpush.bf16.msra.mxu0 %v1822
    %2444 = vmatpush.bf16.msra.mxu0 %v1819
    %2445 = vmatpush.bf16.msra.mxu0 %v1816
    %2446 = vmatpush.bf16.msra.mxu0 %v1813
    %2447 = vmatpush.bf16.msra.mxu0 %v1810
    %2448 = vmatmul.bf16.gmra.mxu0 %v2413
    %v2449 = vpop.f32.mrf.mxu0
    %v2450 = vadd.f32 0.0, %v2449
    %v2451 = vpop.f32.mrf.mxu0
    %2452 = vdwg.mxu0
    %v2453 = vadd.f32 %v2410, %v2424
    %v2454 = vxor.u32 %v2453, 2147483648
    %v2455 = vmul.f32 %v2454, 1.442695
    %v2456 = vpow.pop %v2455
    %v2457 = vadd.f32 %v2456, 1.0
    %v2458 = vrcp.pop %v2457
    %v2459 = vmul.f32 %v2457, %v2458
    %v2460 = vsub.f32 1.0, %v2459
    %v2461 = vmul.f32 %v2458, %v2460
    %v2462 = vadd.f32 %v2458, %v2461
    %vm2463 = vweird.f32 %v2457
    %vm2464 = vweird.f32 %v2458
    %vm2465 = vmor %vm2463, %vm2464
    %v2466 = vsel %vm2465, %v2458, %v2462
    %v2467 = vand.u32 2147483647, %v2457
    %vm2468 = vcmp.eq.f32.partialorder %v2467, 8.507059e+37
    %v2469 = vand.u32 %v2457, 2147483648
    %v2470 = vor.u32 1.1754944e-38, %v2469
    %v2471 = vsel %vm2468, %v2470, %v2466
    %v2472 = vmul.f32 1.0, %v2471
    %v2473 = vadd.f32 %v2411, %v2437
    %v2474 = vxor.u32 %v2473, 2147483648
    %v2475 = vmul.f32 %v2474, 1.442695
    %v2476 = vpow.pop %v2475
    %v2477 = vadd.f32 %v2476, 1.0
    %v2478 = vrcp.pop %v2477
    %v2479 = vmul.f32 %v2477, %v2478
    %v2480 = vsub.f32 1.0, %v2479
    %v2481 = vmul.f32 %v2478, %v2480
    %v2482 = vadd.f32 %v2478, %v2481
    %vm2483 = vweird.f32 %v2477
    %vm2484 = vweird.f32 %v2478
    %vm2485 = vmor %vm2483, %vm2484
    %v2486 = vsel %vm2485, %v2478, %v2482
    %v2487 = vand.u32 2147483647, %v2477
    %vm2488 = vcmp.eq.f32.partialorder %v2487, 8.507059e+37
    %v2489 = vand.u32 %v2477, 2147483648
    %v2490 = vor.u32 1.1754944e-38, %v2489
    %v2491 = vsel %vm2488, %v2490, %v2486
    %v2492 = vmul.f32 1.0, %v2491
    %v2493 = vadd.f32 %v2450, %v1721
    %v2494 = vmul.f32 %v2472, %v2493
    %v2495 = vadd.f32 %v2412, %v2494
    %v2496 = vtanh.pop %v2495
    %v2497 = vsub.f32 1.0, %v2492
    %v2498 = vmul.f32 %v2497, %v2496
    %v2499 = vmul.f32 %v2492, %v2407
    %v2500 = vadd.f32 %v2498, %v2499
    %v2501 = vld [vmem:[%s1272] sm:$0xff]
    %v2502 = vld [vmem:[%s1272 + $0x8] sm:$0xf]
    %v2503 = vunpack.c.l.bf16 %v2501
    %v2504 = vunpack.c.h.bf16 %v2501
    %v2505 = vunpack.c.l.bf16 %v2502
    %v2506 = vpack.c.bf16 %v2500, %v2500
    %2507 = vmatpush.bf16.msra.mxu0 %v1829
    %2508 = vmatpush.bf16.msra.mxu0 %v1826
    %2509 = vmatpush.bf16.msra.mxu0 %v1823
    %2510 = vmatpush.bf16.msra.mxu0 %v1820
    %2511 = vmatpush.bf16.msra.mxu0 %v1817
    %2512 = vmatpush.bf16.msra.mxu0 %v1814
    %2513 = vmatpush.bf16.msra.mxu0 %v1811
    %2514 = vmatpush.bf16.msra.mxu0 %v1808
    %2515 = vmatmul.bf16.gmra.mxu0 %v2506
    %v2516 = vpop.f32.mrf.mxu0
    %v2517 = vadd.f32 0.0, %v2516
    %v2518 = vpop.f32.mrf.mxu0
    %2519 = vdwg.mxu0
    %2520 = vmatpush.bf16.msra.mxu0 %v1830
    %2521 = vmatpush.bf16.msra.mxu0 %v1827
    %2522 = vmatpush.bf16.msra.mxu0 %v1824
    %2523 = vmatpush.bf16.msra.mxu0 %v1821
    %2524 = vmatpush.bf16.msra.mxu0 %v1818
    %2525 = vmatpush.bf16.msra.mxu0 %v1815
    %2526 = vmatpush.bf16.msra.mxu0 %v1812
    %2527 = vmatpush.bf16.msra.mxu0 %v1809
    %2528 = vmatmul.bf16.gmra.mxu0 %v2506
    %v2529 = vpop.f32.mrf.mxu0
    %v2530 = vadd.f32 0.0, %v2529
    %v2531 = vpop.f32.mrf.mxu0
    %2532 = vdwg.mxu0
    %2533 = vmatpush.bf16.msra.mxu0 %v1831
    %2534 = vmatpush.bf16.msra.mxu0 %v1828
    %2535 = vmatpush.bf16.msra.mxu0 %v1825
    %2536 = vmatpush.bf16.msra.mxu0 %v1822
    %2537 = vmatpush.bf16.msra.mxu0 %v1819
    %2538 = vmatpush.bf16.msra.mxu0 %v1816
    %2539 = vmatpush.bf16.msra.mxu0 %v1813
    %2540 = vmatpush.bf16.msra.mxu0 %v1810
    %2541 = vmatmul.bf16.gmra.mxu0 %v2506
    %v2542 = vpop.f32.mrf.mxu0
    %v2543 = vadd.f32 0.0, %v2542
    %v2544 = vpop.f32.mrf.mxu0
    %2545 = vdwg.mxu0
    %v2546 = vadd.f32 %v2503, %v2517
    %v2547 = vxor.u32 %v2546, 2147483648
    %v2548 = vmul.f32 %v2547, 1.442695
    %v2549 = vpow.pop %v2548
    %v2550 = vadd.f32 %v2549, 1.0
    %v2551 = vrcp.pop %v2550
    %v2552 = vmul.f32 %v2550, %v2551
    %v2553 = vsub.f32 1.0, %v2552
    %v2554 = vmul.f32 %v2551, %v2553
    %v2555 = vadd.f32 %v2551, %v2554
    %vm2556 = vweird.f32 %v2550
    %vm2557 = vweird.f32 %v2551
    %vm2558 = vmor %vm2556, %vm2557
    %v2559 = vsel %vm2558, %v2551, %v2555
    %v2560 = vand.u32 2147483647, %v2550
    %vm2561 = vcmp.eq.f32.partialorder %v2560, 8.507059e+37
    %v2562 = vand.u32 %v2550, 2147483648
    %v2563 = vor.u32 1.1754944e-38, %v2562
    %v2564 = vsel %vm2561, %v2563, %v2559
    %v2565 = vmul.f32 1.0, %v2564
    %v2566 = vadd.f32 %v2504, %v2530
    %v2567 = vxor.u32 %v2566, 2147483648
    %v2568 = vmul.f32 %v2567, 1.442695
    %v2569 = vpow.pop %v2568
    %v2570 = vadd.f32 %v2569, 1.0
    %v2571 = vrcp.pop %v2570
    %v2572 = vmul.f32 %v2570, %v2571
    %v2573 = vsub.f32 1.0, %v2572
    %v2574 = vmul.f32 %v2571, %v2573
    %v2575 = vadd.f32 %v2571, %v2574
    %vm2576 = vweird.f32 %v2570
    %vm2577 = vweird.f32 %v2571
    %vm2578 = vmor %vm2576, %vm2577
    %v2579 = vsel %vm2578, %v2571, %v2575
    %v2580 = vand.u32 2147483647, %v2570
    %vm2581 = vcmp.eq.f32.partialorder %v2580, 8.507059e+37
    %v2582 = vand.u32 %v2570, 2147483648
    %v2583 = vor.u32 1.1754944e-38, %v2582
    %v2584 = vsel %vm2581, %v2583, %v2579
    %v2585 = vmul.f32 1.0, %v2584
    %v2586 = vadd.f32 %v2543, %v1721
    %v2587 = vmul.f32 %v2565, %v2586
    %v2588 = vadd.f32 %v2505, %v2587
    %v2589 = vtanh.pop %v2588
    %v2590 = vsub.f32 1.0, %v2585
    %v2591 = vmul.f32 %v2590, %v2589
    %v2592 = vmul.f32 %v2585, %v2500
    %v2593 = vadd.f32 %v2591, %v2592
    %v2594 = vpack.c.bf16 %v2593, %v2593
    %v2595 = vld [vmem:[%s9] sm:$0xf]
    %v2596 = vld [vmem:[%s9 + $0x4] sm:$0xf]
    %v2597 = vld [vmem:[%s9 + $0x8] sm:$0xf]
    %v2598 = vld [vmem:[%s9 + $0xc] sm:$0xf]
    %v2599 = vld [vmem:[%s9 + $0x10] sm:$0xf]
    %v2600 = vld [vmem:[%s9 + $0x14] sm:$0xf]
    %v2601 = vld [vmem:[%s9 + $0x18] sm:$0xf]
    %v2602 = vld [vmem:[%s9 + $0x1c] sm:$0xf]
    %v2603 = vld [vmem:[%s9 + $0x20] sm:$0xf]
    %v2604 = vld [vmem:[%s9 + $0x24] sm:$0xf]
    %v2605 = vld [vmem:[%s9 + $0x28] sm:$0xf]
    %v2606 = vld [vmem:[%s9 + $0x2c] sm:$0xf]
    %v2607 = vld [vmem:[%s9 + $0x30] sm:$0xf]
    %v2608 = vld [vmem:[%s9 + $0x34] sm:$0xf]
    %v2609 = vld [vmem:[%s9 + $0x38] sm:$0xf]
    %v2610 = vld [vmem:[%s9 + $0x3c] sm:$0xf]
    %v2611 = vld [vmem:[%s10] sm:$0x1]
    %v2613 = vperm.slane %v2611, 0
    %v2631 = vunpack.c.l.b16 %v2595
    %v2632 = vunpack.c.l.b16 %v2596
    %v2633 = vunpack.c.l.b16 %v2597
    %v2634 = vunpack.c.l.b16 %v2598
    %v2635 = vunpack.c.l.b16 %v2599
    %v2636 = vunpack.c.l.b16 %v2600
    %v2637 = vunpack.c.l.b16 %v2601
    %v2638 = vunpack.c.l.b16 %v2602
    %v2639 = vunpack.c.l.b16 %v2603
    %v2640 = vunpack.c.l.b16 %v2604
    %v2641 = vunpack.c.l.b16 %v2605
    %v2642 = vunpack.c.l.b16 %v2606
    %v2643 = vunpack.c.l.b16 %v2607
    %v2644 = vunpack.c.l.b16 %v2608
    %v2645 = vunpack.c.l.b16 %v2609
    %v2646 = vunpack.c.l.b16 %v2610
    %v2647 = vpack.c.b16 %v2632, %v2631
    %v2648 = vpack.c.b16 %v2634, %v2633
    %v2649 = vpack.c.b16 %v2636, %v2635
    %v2650 = vpack.c.b16 %v2638, %v2637
    %v2651 = vpack.c.b16 %v2640, %v2639
    %v2652 = vpack.c.b16 %v2642, %v2641
    %v2653 = vpack.c.b16 %v2644, %v2643
    %v2654 = vpack.c.b16 %v2646, %v2645
    %2663 = vmatpush.bf16.msra.mxu0 %v2654
    %2664 = vmatpush.bf16.msra.mxu0 %v2653
    %2665 = vmatpush.bf16.msra.mxu0 %v2652
    %2666 = vmatpush.bf16.msra.mxu0 %v2651
    %2667 = vmatpush.bf16.msra.mxu0 %v2650
    %2668 = vmatpush.bf16.msra.mxu0 %v2649
    %2669 = vmatpush.bf16.msra.mxu0 %v2648
    %2670 = vmatpush.bf16.msra.mxu0 %v2647
    %2671 = vmatmul.bf16.gmra.mxu0 %v2594
    %v2672 = vpop.f32.mrf.mxu0
    %v2673 = vadd.f32 %v2613, %v2672
    %v2674 = vpop.f32.mrf.mxu0
    %2675 = vdwg.mxu0
    %2676 = vst [vmem:[%s11] sm:$0xff] %v2673
    // Predicated region
    $region62: #{gated_recurrent_unit_forward.1} parent=1 // pred_check
      _
    $region63: #{gated_recurrent_unit_forward.1} parent=1 // pred_check_branch
      %2678 = sbr.rel (0) target = $region65
    $region64: #{gated_recurrent_unit_forward.1} parent=1 // pred_region
      _
    $region65: #{gated_recurrent_unit_forward.1} parent=1 // pred_fallthru
      _
    // Predicated region
    $region66: #{gated_recurrent_unit_forward.1} parent=1 // pred_check
      _
    $region67: #{gated_recurrent_unit_forward.1} parent=1 // pred_check_branch
      %2680 = sbr.rel (0) target = $region69
    $region68: #{gated_recurrent_unit_forward.1} parent=1 // pred_region
      _
    $region69: #{gated_recurrent_unit_forward.1} parent=1 // pred_fallthru
      _
    %2681 = vsyncpa [#allocation5], 1
    %2682 = vsyncpa [#allocation7], 1
    %2683 = vsyncpa [#allocation10], 1

</llo_original>
